<compile_context>
chip_gen: v6e
topology: v6e:2x2x1
jax: 0.10.0
libtpu: 0.0.40
codegen_flags: <defaults>
</compile_context>

<pallas_src>
import functools

import jax
import jax.numpy as jnp
from jax import lax
from jax.experimental import pallas as pl
from jax.experimental.pallas import tpu as pltpu

LANE = 128      # vreg lane width
SUBLANE = 8     # f32 vreg sublane count


def _round_up(x, m):
    return (x + m - 1) // m * m


def _swish(x):
    return x * jax.nn.sigmoid(x)


def _pad_last(a, target):
    pad = target - a.shape[-1]
    if pad == 0:
        return a
    return jnp.pad(a, [(0, 0)] * (a.ndim - 1) + [(0, pad)])


# ---------------------------------------------------------------------------
# kernel
# ---------------------------------------------------------------------------
def _mbconv_kernel(cfg, *refs):
    H, W = cfg["H"], cfg["W"]
    Cin, Chid, Cout = cfg["Cin_p"], cfg["Chid_p"], cfg["Cout_p"]
    k, s = cfg["k"], cfg["s"]
    pt, pleft, lpad = cfg["pt"], cfg["pleft"], cfg["lpad"]
    H_out, W_out = cfg["H_out"], cfg["W_out"]
    B, RS = cfg["B_tile"], cfg["row_strip"]
    mm_dtype = cfg["mm_dtype"]
    row = cfg["rows"]

    refs = list(refs)
    x_ref = refs.pop(0)
    w_exp_ref = refs.pop(0) if cfg["expand"] else None
    w_dw_ref = refs.pop(0)
    if cfg["use_se"]:
        w_se1_ref = refs.pop(0)
        w_se2_ref = refs.pop(0)
    w_pr_ref = refs.pop(0)
    vec_ref = refs.pop(0)
    out_ref = refs.pop(0)
    pad_ref = refs.pop(0)      # VMEM f32 (B, Hp, Wp, Chid): zero-padded DW input
    acc_ref = refs.pop(0)      # VMEM     (B, H_out, W_out, Chid): post-DW acts

    Hp, Wp = pad_ref.shape[1], pad_ref.shape[2]
    vecs = vec_ref[...]        # (R, Cmax) f32 packed shift / bias vectors

    # ---- zero ONLY the halo ring; the interior is fully overwritten below ----
    pb = Hp - pt - H
    pr = Wp - lpad - W
    if pt > 0:
        pad_ref[:, :pt, :, :] = jnp.zeros((B, pt, Wp, Chid), jnp.float32)
    if pb > 0:
        pad_ref[:, pt + H:, :, :] = jnp.zeros((B, pb, Wp, Chid), jnp.float32)
    if lpad > 0:
        pad_ref[:, :, :lpad, :] = jnp.zeros((B, Hp, lpad, Chid), jnp.float32)
    if pr > 0:
        pad_ref[:, :, lpad + W:, :] = jnp.zeros((B, Hp, pr, Chid), jnp.float32)

    # ---- 1) expand 1x1 conv (BN scale folded) + Swish, per row strip ----
    for y0 in range(0, H, RS):
        rs = min(RS, H - y0)
        xs = x_ref[:, y0:y0 + rs, :, :]                      # (B, rs, W, Cin) f32
        if cfg["expand"]:
            hs = jnp.dot(xs.reshape(B * rs * W, Cin).astype(mm_dtype),
                         w_exp_ref[...],
                         preferred_element_type=jnp.float32)
            hs = _swish(hs + vecs[row["shift1"], :Chid])
            hs = hs.reshape(B, rs, W, Chid)
        else:
            hs = xs
        pad_ref[:, pt + y0:pt + y0 + rs, lpad:lpad + W, :] = hs

    # ---- 2) depthwise kxk conv (BN scale folded) + Swish, per row strip ----
    w_dw = w_dw_ref[...]                                     # (k, k, Chid) f32
    sh2 = vecs[row["shift2"], :Chid]
    if cfg["use_se"]:
        se_sum = jnp.zeros((B, Chid), jnp.float32)
    for y0 in range(0, H_out, RS):
        rs = min(RS, H_out - y0)
        acc = jnp.zeros((B, rs, W_out, Chid), jnp.float32)
        for dy in range(k):
            for dx in range(k):
                c0 = lpad - pleft + dx
                if s == 1:
                    win = pad_ref[:, y0 + dy:y0 + dy + rs, c0:c0 + W_out, :]
                else:
                    # TODO(synk): stride=2 path (strided pl.ds window reads) is
                    # implemented but not exercised at the demo shapes.
                    win = pad_ref[:, pl.ds(y0 * s + dy, rs, stride=s),
                                  pl.ds(c0, W_out, stride=s), :]
                acc = acc + win * w_dw[dy, dx]
        acc = _swish(acc + sh2)
        if cfg["use_se"]:
            se_sum = se_sum + jnp.sum(acc, axis=(1, 2))      # running spatial sum
        acc_ref[:, y0:y0 + rs, :, :] = acc.astype(acc_ref.dtype)

    # ---- 3) squeeze-excitation gate (per image, per channel) ----
    if cfg["use_se"]:
        Cred = w_se1_ref.shape[1]
        se = se_sum * (1.0 / float(H_out * W_out))           # (B, Chid) f32
        se = jnp.dot(se.astype(mm_dtype), w_se1_ref[...],
                     preferred_element_type=jnp.float32) + vecs[row["b_se1"], :Cred]
        se = _swish(se)
        se = jnp.dot(se.astype(mm_dtype), w_se2_ref[...],
                     preferred_element_type=jnp.float32) + vecs[row["b_se2"], :Chid]
        se = jax.nn.sigmoid(se)                              # (B, Chid) f32

    # ---- 4) project 1x1 conv (BN scale folded) [+SE gate] [+residual] ----
    sh3 = vecs[row["shift3"], :Cout]
    for y0 in range(0, H_out, RS):
        rs = min(RS, H_out - y0)
        a = acc_ref[:, y0:y0 + rs, :, :]
        if cfg["use_se"]:
            a = (a.astype(jnp.float32) * se[:, None, None, :]).astype(mm_dtype)
        else:
            a = a.astype(mm_dtype)
        y = jnp.dot(a.reshape(B * rs * W_out, Chid), w_pr_ref[...],
                    preferred_element_type=jnp.float32)
        y = (y + sh3).reshape(B, rs, W_out, Cout)
        if cfg["use_res"]:
            y = y + x_ref[:, y0:y0 + rs, :, :]               # residual in f32
        out_ref[:, y0:y0 + rs, :, :] = y.astype(out_ref.dtype)


# ---------------------------------------------------------------------------
# parameter construction (torch-equivalent shapes, inference BN folded)
# ---------------------------------------------------------------------------
def make_mbconv(key, in_planes, out_planes, expand_ratio, kernel_size, stride,
                reduction_ratio=4, use_se=False):
    hidden = in_planes * expand_ratio
    reduced = max(1, in_planes // reduction_ratio)
    p = max(kernel_size - stride, 0)
    pads = (p // 2, p - p // 2, p // 2, p - p // 2)  # (top, bottom, left, right)
    cfg = dict(k=kernel_size, s=stride, pads=pads, Cin=in_planes,
               Chid=hidden, Cout=out_planes, reduced=reduced,
               expand=(in_planes != hidden), use_se=use_se,
               use_res=(in_planes == out_planes and stride == 1))

    keys = iter(jax.random.split(key, 32))

    def nrm(shape, scale=0.2):
        return (scale * jax.random.normal(next(keys), shape)).astype(jnp.float32)

    def bn_fold(C):
        gamma = 1.0 + 0.1 * jax.random.normal(next(keys), (C,))
        beta = 0.1 * jax.random.normal(next(keys), (C,))
        mean = 0.1 * jax.random.normal(next(keys), (C,))
        var = 0.5 + jnp.abs(jax.random.normal(next(keys), (C,)))
        scale = gamma * lax.rsqrt(var + 1e-5)
        shift = beta - mean * scale
        return (scale.reshape(1, C).astype(jnp.float32),
                shift.reshape(1, C).astype(jnp.float32))

    params = {}
    if cfg["expand"]:
        params["w_exp"] = nrm((in_planes, hidden))             # torch: (hid, in, 1, 1)
        params["scale1"], params["shift1"] = bn_fold(hidden)
    params["w_dw"] = nrm((kernel_size, kernel_size, hidden))   # torch: (hid, 1, k, k)
    params["scale2"], params["shift2"] = bn_fold(hidden)
    if use_se:
        params["w_se1"] = nrm((hidden, reduced))
        params["b_se1"] = nrm((1, reduced))
        params["w_se2"] = nrm((reduced, hidden))
        params["b_se2"] = nrm((1, hidden))
    params["w_proj"] = nrm((hidden, out_planes))               # torch: (out, hid, 1, 1)
    params["scale3"], params["shift3"] = bn_fold(out_planes)
    return cfg, params


# ---------------------------------------------------------------------------
# wrapper
# ---------------------------------------------------------------------------
def mbconv_pallas(x_nhwc, params, cfg, matmul_dtype=jnp.bfloat16,
                  vmem_budget_bytes=12 * 1024 * 1024):
    N, H, W, Cin = x_nhwc.shape
    k, s = cfg["k"], cfg["s"]
    pt, pb, pleft, pright = cfg["pads"]
    Chid, Cout, reduced = cfg["Chid"], cfg["Cout"], cfg["reduced"]
    H_out = (H + pt + pb - k) // s + 1
    W_out = (W + pleft + pright - k) // s + 1

    # lane-dense channel padding (multiples of 128)
    Cin_p = _round_up(Cin, LANE)
    Chid_p = _round_up(Chid, LANE)
    Cout_p = _round_up(Cout, LANE)
    Cred_p = _round_up(reduced, LANE)
    Cmax = max(Chid_p, Cout_p, Cred_p)
    f32 = jnp.float32

    # host-side prep: fold BN scales into weights, zero-pad channels, cast the
    # 1x1-conv weights to the matmul dtype, pack all shift/bias vectors together
    rows, vec_rows, weight_arrays = {}, [], []

    def add_vec(name, v):
        rows[name] = len(vec_rows)
        vec_rows.append(_pad_last(v.reshape(-1).astype(f32), Cmax))

    if cfg["expand"]:
        w_exp = params["w_exp"] * params["scale1"][0][None, :]
        w_exp = jnp.zeros((Cin_p, Chid_p), f32).at[:Cin, :Chid].set(w_exp)
        weight_arrays.append(w_exp.astype(matmul_dtype))
        add_vec("shift1", params["shift1"])

    w_dw = params["w_dw"] * params["scale2"][0][None, None, :]
    weight_arrays.append(_pad_last(w_dw, Chid_p).astype(f32))  # depthwise stays f32 (VPU)
    add_vec("shift2", params["shift2"])

    if cfg["use_se"]:
        w_se1 = jnp.zeros((Chid_p, Cred_p), f32).at[:Chid, :reduced].set(params["w_se1"])
        w_se2 = jnp.zeros((Cred_p, Chid_p), f32).at[:reduced, :Chid].set(params["w_se2"])
        weight_arrays.append(w_se1.astype(matmul_dtype))
        weight_arrays.append(w_se2.astype(matmul_dtype))
        add_vec("b_se1", params["b_se1"])
        add_vec("b_se2", params["b_se2"])

    w_pr = params["w_proj"] * params["scale3"][0][None, :]
    w_pr = jnp.zeros((Chid_p, Cout_p), f32).at[:Chid, :Cout].set(w_pr)
    weight_arrays.append(w_pr.astype(matmul_dtype))
    add_vec("shift3", params["shift3"])
    vec_packed = jnp.stack(vec_rows, axis=0)                   # (R, Cmax) f32

    # input: NHWC with channels zero-padded to the lane width
    x_p = _pad_last(x_nhwc.astype(f32), Cin_p)

    Hp = pt + H + pb
    lpad = _round_up(pleft, SUBLANE) if pleft > 0 else 0       # sublane-aligned interior
    Wp = lpad + W + pright
    acc_dtype = jnp.bfloat16 if matmul_dtype == jnp.bfloat16 else jnp.float32
    acc_isz = jnp.dtype(acc_dtype).itemsize

    # batch tile: several images per grid step, bounded by a VMEM budget
    per_img = (Chid_p * (Hp * Wp * 4 + H_out * W_out * acc_isz)
               + 2 * Cin_p * H * W * 4
               + 2 * Cout_p * H_out * W_out * 4)
    B_tile = int(max(1, min(N, vmem_budget_bytes // per_img)))
    N_pad = _round_up(N, B_tile)
    if N_pad != N:
        x_p = jnp.pad(x_p, ((0, N_pad - N), (0, 0), (0, 0), (0, 0)))
    grid = (N_pad // B_tile,)

    # row-strip size: bound depthwise vreg live ranges (~64 KiB accumulator)
    RS = int(max(1, min(SUBLANE, (64 * 1024) // max(1, B_tile * W_out * Chid_p * 4))))

    kcfg = dict(H=H, W=W, Cin_p=Cin_p, Chid_p=Chid_p, Cout_p=Cout_p,
                k=k, s=s, pt=pt, pleft=pleft, lpad=lpad,
                H_out=H_out, W_out=W_out, B_tile=B_tile, row_strip=RS,
                expand=cfg["expand"], use_se=cfg["use_se"], use_res=cfg["use_res"],
                mm_dtype=matmul_dtype, rows=rows)
    kernel = functools.partial(_mbconv_kernel, kcfg)

    in_specs = [pl.BlockSpec((B_tile, H, W, Cin_p), lambda n: (n, 0, 0, 0))]
    for a in weight_arrays + [vec_packed]:
        in_specs.append(pl.BlockSpec(a.shape, lambda n, _r=a.ndim: (0,) * _r))

    out = pl.pallas_call(
        kernel,
        out_shape=jax.ShapeDtypeStruct((N_pad, H_out, W_out, Cout_p), x_nhwc.dtype),
        grid=grid,
        in_specs=in_specs,
        out_specs=pl.BlockSpec((B_tile, H_out, W_out, Cout_p),
                               lambda n: (n, 0, 0, 0)),
        scratch_shapes=[
            pltpu.VMEM((B_tile, Hp, Wp, Chid_p), jnp.float32),
            pltpu.VMEM((B_tile, H_out, W_out, Chid_p), acc_dtype),
        ],
        compiler_params=pltpu.CompilerParams(
            dimension_semantics=("parallel",),   # batch tiles are independent (v7x 2 TCs)
            vmem_limit_bytes=32 * 1024 * 1024),
    )(x_p, *weight_arrays, vec_packed)

    # TODO(synk): for production EfficientNet shapes (112x112, Chid>=192) additionally
    # tile H into halo'd row strips at the BlockSpec level so the working set fits
    # v7x's 64 MiB VMEM.
    return out[:N, :, :, :Cout]


# ---------------------------------------------------------------------------
# pure-JAX (XLA) f32 reference, NHWC
# ---------------------------------------------------------------------------
def mbconv_reference(x, p, cfg):
    k, s = cfg["k"], cfg["s"]
    pt, pb, pleft, pright = cfg["pads"]
    h = x
    if cfg["expand"]:
        h = jnp.einsum("nhwc,cd->nhwd", h, p["w_exp"])
        h = h * p["scale1"] + p["shift1"]
        h = h * jax.nn.sigmoid(h)
    Chid = h.shape[-1]
    dw_w = p["w_dw"].reshape(k, k, 1, Chid)
    h = lax.conv_general_dilated(
        h, dw_w, window_strides=(s, s),
        padding=((pt, pb), (pleft, pright)),
        dimension_numbers=("NHWC", "HWIO", "NHWC"),
        feature_group_count=Chid)
    h = h * p["scale2"] + p["shift2"]
    h = h * jax.nn.sigmoid(h)
    if cfg["use_se"]:
        se = jnp.mean(h, axis=(1, 2), keepdims=True)
        se = jnp.einsum("nhwc,cd->nhwd", se, p["w_se1"]) + p["b_se1"]
        se = se * jax.nn.sigmoid(se)
        se = jnp.einsum("nhwc,cd->nhwd", se, p["w_se2"]) + p["b_se2"]
        se = jax.nn.sigmoid(se)
        h = h * se
    y = jnp.einsum("nhwc,cd->nhwd", h, p["w_proj"])
    y = y * p["scale3"] + p["shift3"]
    if cfg["use_res"]:
        y = y + x
    return y


if __name__ == "__main__":
    key = jax.random.PRNGKey(0)
    N, C, H, W = 2, 4, 16, 16                         # torch NCHW input shape
    x_nchw = jax.random.normal(jax.random.fold_in(key, 123), (N, C, H, W), jnp.float32)
    x_nhwc = jnp.transpose(x_nchw, (0, 2, 3, 1))      # glue: NCHW -> NHWC

    configs = [
        # (expand_ratio, kernel, stride, use_se, matmul_dtype, tolerance)
        (2, 3, 1, False, jnp.bfloat16, 3e-2),
        (2, 3, 1, True,  jnp.bfloat16, 3e-2),
        (1, 3, 1, True,  jnp.bfloat16, 3e-2),         # no-expand branch
        (2, 3, 1, True,  jnp.float32,  1e-3),         # full-f32 tight check
    ]
    for i, (er, ks, st, use_se, mm_dt, tol) in enumerate(configs):
        cfg, params = make_mbconv(jax.random.fold_in(key, i), C, C, er, ks, st,
                                  use_se=use_se)
        y = jax.block_until_ready(mbconv_pallas(x_nhwc, params, cfg,
                                                matmul_dtype=mm_dt))
        y_ref = mbconv_reference(x_nhwc, params, cfg)
        err = float(jnp.max(jnp.abs(y - y_ref)))
        assert err < tol, f"config {i} (use_se={use_se}, dtype={mm_dt}): err {err}"

    print("KERNEL_OK")
</pallas_src>

<mosaic_0001>
module attributes {stable_mosaic.version = 11 : i64} {
  func.func @_mbconv_kernel(%arg0: i32, %arg1: memref<2x16x16x128xf32, #tpu.memory_space<vmem>>, %arg2: memref<128x128xbf16, #tpu.memory_space<vmem>>, %arg3: memref<3x3x128xf32, #tpu.memory_space<vmem>>, %arg4: memref<128x128xbf16, #tpu.memory_space<vmem>>, %arg5: memref<3x128xf32, #tpu.memory_space<vmem>>, %arg6: memref<2x16x16x128xf32, #tpu.memory_space<vmem>>, %arg7: memref<2x18x25x128xf32, #tpu.memory_space<vmem>>, %arg8: memref<2x16x16x128xbf16, #tpu.memory_space<vmem>>) attributes {dimension_semantics = [#tpu.dimension_semantics<parallel>], iteration_bounds = array<i64: 1>, scalar_prefetch = 0 : i64, scratch_operands = 2 : i64, tpu.core_type = #tpu.core_type<tc>, window_params = [{transform_indices = @transform_0, window_bounds = array<i64: 2, 16, 16, 128>}, {pipeline_mode = #tpu.pipeline_mode<synchronous>, transform_indices = @transform_1, window_bounds = array<i64: 128, 128>}, {pipeline_mode = #tpu.pipeline_mode<synchronous>, transform_indices = @transform_2, window_bounds = array<i64: 3, 3, 128>}, {pipeline_mode = #tpu.pipeline_mode<synchronous>, transform_indices = @transform_3, window_bounds = array<i64: 128, 128>}, {pipeline_mode = #tpu.pipeline_mode<synchronous>, transform_indices = @transform_4, window_bounds = array<i64: 3, 128>}, {transform_indices = @transform_5, window_bounds = array<i64: 2, 16, 16, 128>}]} {
    %c0 = arith.constant 0 : index
    %c0_0 = arith.constant 0 : index
    %0 = vector.load %arg5[%c0, %c0_0] : memref<3x128xf32, #tpu.memory_space<vmem>>, vector<3x128xf32>
    %cst = arith.constant 0.000000e+00 : f32
    %1 = vector.broadcast %cst : f32 to vector<2x1x25x128xf32>
    %c0_1 = arith.constant 0 : index
    %c0_2 = arith.constant 0 : index
    %c0_3 = arith.constant 0 : index
    %c0_4 = arith.constant 0 : index
    %2 = vector.load %arg7[%c0_1, %c0_2, %c0_3, %c0_4] : memref<2x18x25x128xf32, #tpu.memory_space<vmem>>, vector<2x1x25x128xf32>
    tpu.vector_store %arg7[%c0_1, %c0_2, %c0_3, %c0_4], %1 {strides = array<i32>} : memref<2x18x25x128xf32, #tpu.memory_space<vmem>>, vector<2x1x25x128xf32>,
    %cst_5 = arith.constant 0.000000e+00 : f32
    %3 = vector.broadcast %cst_5 : f32 to vector<2x1x25x128xf32>
    %c0_6 = arith.constant 0 : index
    %c17 = arith.constant 17 : index
    %c0_7 = arith.constant 0 : index
    %c0_8 = arith.constant 0 : index
    %4 = vector.load %arg7[%c0_6, %c17, %c0_7, %c0_8] : memref<2x18x25x128xf32, #tpu.memory_space<vmem>>, vector<2x1x25x128xf32>
    tpu.vector_store %arg7[%c0_6, %c17, %c0_7, %c0_8], %3 {strides = array<i32>} : memref<2x18x25x128xf32, #tpu.memory_space<vmem>>, vector<2x1x25x128xf32>,
    %cst_9 = arith.constant 0.000000e+00 : f32
    %5 = vector.broadcast %cst_9 : f32 to vector<2x18x8x128xf32>
    %c0_10 = arith.constant 0 : index
    %c0_11 = arith.constant 0 : index
    %c0_12 = arith.constant 0 : index
    %c0_13 = arith.constant 0 : index
    %6 = vector.load %arg7[%c0_10, %c0_11, %c0_12, %c0_13] : memref<2x18x25x128xf32, #tpu.memory_space<vmem>>, vector<2x18x8x128xf32>
    tpu.vector_store %arg7[%c0_10, %c0_11, %c0_12, %c0_13], %5 {strides = array<i32>} : memref<2x18x25x128xf32, #tpu.memory_space<vmem>>, vector<2x18x8x128xf32>,
    %cst_14 = arith.constant 0.000000e+00 : f32
    %7 = vector.broadcast %cst_14 : f32 to vector<2x18x1x128xf32>
    %c0_15 = arith.constant 0 : index
    %c0_16 = arith.constant 0 : index
    %c24 = arith.constant 24 : index
    %c0_17 = arith.constant 0 : index
    %8 = vector.load %arg7[%c0_15, %c0_16, %c24, %c0_17] : memref<2x18x25x128xf32, #tpu.memory_space<vmem>>, vector<2x18x1x128xf32>
    tpu.vector_store %arg7[%c0_15, %c0_16, %c24, %c0_17], %7 {strides = array<i32>} : memref<2x18x25x128xf32, #tpu.memory_space<vmem>>, vector<2x18x1x128xf32>,
    %c0_18 = arith.constant 0 : index
    %c0_19 = arith.constant 0 : index
    %c0_20 = arith.constant 0 : index
    %c0_21 = arith.constant 0 : index
    %9 = vector.load %arg1[%c0_18, %c0_19, %c0_20, %c0_21] : memref<2x16x16x128xf32, #tpu.memory_space<vmem>>, vector<2x4x16x128xf32>
    %10 = vector.shape_cast %9 : vector<2x4x16x128xf32> to vector<128x128xf32>
    %11 = arith.truncf %10 : vector<128x128xf32> to vector<128x128xbf16>
    %c0_22 = arith.constant 0 : index
    %c0_23 = arith.constant 0 : index
    %12 = vector.load %arg2[%c0_22, %c0_23] : memref<128x128xbf16, #tpu.memory_space<vmem>>, vector<128x128xbf16>
    %cst_24 = arith.constant dense<0.000000e+00> : vector<128x128xf32>
    %13 = tpu.matmul %11, %12, %cst_24 {dimension_numbers = #tpu.dot_dimension_numbers<[1], [0], [0], [1], [0, 0, 1, 1], [], []>} : vector<128x128xbf16>, vector<128x128xbf16>, vector<128x128xf32> -> vector<128x128xf32>
    %14 = vector.extract_strided_slice %0 {offsets = [0, 0], sizes = [1, 128], strides = [1, 1]} : vector<3x128xf32> to vector<1x128xf32>
    %15 = vector.shape_cast %14 : vector<1x128xf32> to vector<128xf32>
    %16 = vector.shape_cast %15 : vector<128xf32> to vector<1x128xf32>
    %17 = vector.broadcast %16 : vector<1x128xf32> to vector<128x128xf32>
    %18 = arith.addf %13, %17 : vector<128x128xf32>
    %19 = arith.negf %18 : vector<128x128xf32>
    %20 = math.exp %19 : vector<128x128xf32>
    %cst_25 = arith.constant 1.000000e+00 : f32
    %21 = vector.broadcast %cst_25 : f32 to vector<128x128xf32>
    %22 = arith.addf %21, %20 : vector<128x128xf32>
    %23 = arith.divf %21, %22 : vector<128x128xf32>
    %24 = arith.mulf %18, %23 : vector<128x128xf32>
    %25 = vector.shape_cast %24 : vector<128x128xf32> to vector<2x4x16x128xf32>
    %c0_26 = arith.constant 0 : index
    %c1 = arith.constant 1 : index
    %c8 = arith.constant 8 : index
    %c0_27 = arith.constant 0 : index
    %26 = vector.load %arg7[%c0_26, %c1, %c8, %c0_27] : memref<2x18x25x128xf32, #tpu.memory_space<vmem>>, vector<2x4x16x128xf32>
    tpu.vector_store %arg7[%c0_26, %c1, %c8, %c0_27], %25 {strides = array<i32>} : memref<2x18x25x128xf32, #tpu.memory_space<vmem>>, vector<2x4x16x128xf32>,
    %c0_28 = arith.constant 0 : index
    %c4 = arith.constant 4 : index
    %c0_29 = arith.constant 0 : index
    %c0_30 = arith.constant 0 : index
    %27 = vector.load %arg1[%c0_28, %c4, %c0_29, %c0_30] : memref<2x16x16x128xf32, #tpu.memory_space<vmem>>, vector<2x4x16x128xf32>
    %28 = vector.shape_cast %27 : vector<2x4x16x128xf32> to vector<128x128xf32>
    %29 = arith.truncf %28 : vector<128x128xf32> to vector<128x128xbf16>
    %c0_31 = arith.constant 0 : index
    %c0_32 = arith.constant 0 : index
    %30 = vector.load %arg2[%c0_31, %c0_32] : memref<128x128xbf16, #tpu.memory_space<vmem>>, vector<128x128xbf16>
    %cst_33 = arith.constant dense<0.000000e+00> : vector<128x128xf32>
    %31 = tpu.matmul %29, %30, %cst_33 {dimension_numbers = #tpu.dot_dimension_numbers<[1], [0], [0], [1], [0, 0, 1, 1], [], []>} : vector<128x128xbf16>, vector<128x128xbf16>, vector<128x128xf32> -> vector<128x128xf32>
    %32 = vector.extract_strided_slice %0 {offsets = [0, 0], sizes = [1, 128], strides = [1, 1]} : vector<3x128xf32> to vector<1x128xf32>
    %33 = vector.shape_cast %32 : vector<1x128xf32> to vector<128xf32>
    %34 = vector.shape_cast %33 : vector<128xf32> to vector<1x128xf32>
    %35 = vector.broadcast %34 : vector<1x128xf32> to vector<128x128xf32>
    %36 = arith.addf %31, %35 : vector<128x128xf32>
    %37 = arith.negf %36 : vector<128x128xf32>
    %38 = math.exp %37 : vector<128x128xf32>
    %cst_34 = arith.constant 1.000000e+00 : f32
    %39 = vector.broadcast %cst_34 : f32 to vector<128x128xf32>
    %40 = arith.addf %39, %38 : vector<128x128xf32>
    %41 = arith.divf %39, %40 : vector<128x128xf32>
    %42 = arith.mulf %36, %41 : vector<128x128xf32>
    %43 = vector.shape_cast %42 : vector<128x128xf32> to vector<2x4x16x128xf32>
    %c0_35 = arith.constant 0 : index
    %c5 = arith.constant 5 : index
    %c8_36 = arith.constant 8 : index
    %c0_37 = arith.constant 0 : index
    %44 = vector.load %arg7[%c0_35, %c5, %c8_36, %c0_37] : memref<2x18x25x128xf32, #tpu.memory_space<vmem>>, vector<2x4x16x128xf32>
    tpu.vector_store %arg7[%c0_35, %c5, %c8_36, %c0_37], %43 {strides = array<i32>} : memref<2x18x25x128xf32, #tpu.memory_space<vmem>>, vector<2x4x16x128xf32>,
    %c0_38 = arith.constant 0 : index
    %c8_39 = arith.constant 8 : index
    %c0_40 = arith.constant 0 : index
    %c0_41 = arith.constant 0 : index
    %45 = vector.load %arg1[%c0_38, %c8_39, %c0_40, %c0_41] : memref<2x16x16x128xf32, #tpu.memory_space<vmem>>, vector<2x4x16x128xf32>
    %46 = vector.shape_cast %45 : vector<2x4x16x128xf32> to vector<128x128xf32>
    %47 = arith.truncf %46 : vector<128x128xf32> to vector<128x128xbf16>
    %c0_42 = arith.constant 0 : index
    %c0_43 = arith.constant 0 : index
    %48 = vector.load %arg2[%c0_42, %c0_43] : memref<128x128xbf16, #tpu.memory_space<vmem>>, vector<128x128xbf16>
    %cst_44 = arith.constant dense<0.000000e+00> : vector<128x128xf32>
    %49 = tpu.matmul %47, %48, %cst_44 {dimension_numbers = #tpu.dot_dimension_numbers<[1], [0], [0], [1], [0, 0, 1, 1], [], []>} : vector<128x128xbf16>, vector<128x128xbf16>, vector<128x128xf32> -> vector<128x128xf32>
    %50 = vector.extract_strided_slice %0 {offsets = [0, 0], sizes = [1, 128], strides = [1, 1]} : vector<3x128xf32> to vector<1x128xf32>
    %51 = vector.shape_cast %50 : vector<1x128xf32> to vector<128xf32>
    %52 = vector.shape_cast %51 : vector<128xf32> to vector<1x128xf32>
    %53 = vector.broadcast %52 : vector<1x128xf32> to vector<128x128xf32>
    %54 = arith.addf %49, %53 : vector<128x128xf32>
    %55 = arith.negf %54 : vector<128x128xf32>
    %56 = math.exp %55 : vector<128x128xf32>
    %cst_45 = arith.constant 1.000000e+00 : f32
    %57 = vector.broadcast %cst_45 : f32 to vector<128x128xf32>
    %58 = arith.addf %57, %56 : vector<128x128xf32>
    %59 = arith.divf %57, %58 : vector<128x128xf32>
    %60 = arith.mulf %54, %59 : vector<128x128xf32>
    %61 = vector.shape_cast %60 : vector<128x128xf32> to vector<2x4x16x128xf32>
    %c0_46 = arith.constant 0 : index
    %c9 = arith.constant 9 : index
    %c8_47 = arith.constant 8 : index
    %c0_48 = arith.constant 0 : index
    %62 = vector.load %arg7[%c0_46, %c9, %c8_47, %c0_48] : memref<2x18x25x128xf32, #tpu.memory_space<vmem>>, vector<2x4x16x128xf32>
    tpu.vector_store %arg7[%c0_46, %c9, %c8_47, %c0_48], %61 {strides = array<i32>} : memref<2x18x25x128xf32, #tpu.memory_space<vmem>>, vector<2x4x16x128xf32>,
    %c0_49 = arith.constant 0 : index
    %c12 = arith.constant 12 : index
    %c0_50 = arith.constant 0 : index
    %c0_51 = arith.constant 0 : index
    %63 = vector.load %arg1[%c0_49, %c12, %c0_50, %c0_51] : memref<2x16x16x128xf32, #tpu.memory_space<vmem>>, vector<2x4x16x128xf32>
    %64 = vector.shape_cast %63 : vector<2x4x16x128xf32> to vector<128x128xf32>
    %65 = arith.truncf %64 : vector<128x128xf32> to vector<128x128xbf16>
    %c0_52 = arith.constant 0 : index
    %c0_53 = arith.constant 0 : index
    %66 = vector.load %arg2[%c0_52, %c0_53] : memref<128x128xbf16, #tpu.memory_space<vmem>>, vector<128x128xbf16>
    %cst_54 = arith.constant dense<0.000000e+00> : vector<128x128xf32>
    %67 = tpu.matmul %65, %66, %cst_54 {dimension_numbers = #tpu.dot_dimension_numbers<[1], [0], [0], [1], [0, 0, 1, 1], [], []>} : vector<128x128xbf16>, vector<128x128xbf16>, vector<128x128xf32> -> vector<128x128xf32>
    %68 = vector.extract_strided_slice %0 {offsets = [0, 0], sizes = [1, 128], strides = [1, 1]} : vector<3x128xf32> to vector<1x128xf32>
    %69 = vector.shape_cast %68 : vector<1x128xf32> to vector<128xf32>
    %70 = vector.shape_cast %69 : vector<128xf32> to vector<1x128xf32>
    %71 = vector.broadcast %70 : vector<1x128xf32> to vector<128x128xf32>
    %72 = arith.addf %67, %71 : vector<128x128xf32>
    %73 = arith.negf %72 : vector<128x128xf32>
    %74 = math.exp %73 : vector<128x128xf32>
    %cst_55 = arith.constant 1.000000e+00 : f32
    %75 = vector.broadcast %cst_55 : f32 to vector<128x128xf32>
    %76 = arith.addf %75, %74 : vector<128x128xf32>
    %77 = arith.divf %75, %76 : vector<128x128xf32>
    %78 = arith.mulf %72, %77 : vector<128x128xf32>
    %79 = vector.shape_cast %78 : vector<128x128xf32> to vector<2x4x16x128xf32>
    %c0_56 = arith.constant 0 : index
    %c13 = arith.constant 13 : index
    %c8_57 = arith.constant 8 : index
    %c0_58 = arith.constant 0 : index
    %80 = vector.load %arg7[%c0_56, %c13, %c8_57, %c0_58] : memref<2x18x25x128xf32, #tpu.memory_space<vmem>>, vector<2x4x16x128xf32>
    tpu.vector_store %arg7[%c0_56, %c13, %c8_57, %c0_58], %79 {strides = array<i32>} : memref<2x18x25x128xf32, #tpu.memory_space<vmem>>, vector<2x4x16x128xf32>,
    %c0_59 = arith.constant 0 : index
    %c0_60 = arith.constant 0 : index
    %c0_61 = arith.constant 0 : index
    %81 = vector.load %arg3[%c0_59, %c0_60, %c0_61] : memref<3x3x128xf32, #tpu.memory_space<vmem>>, vector<3x3x128xf32>
    %82 = vector.extract_strided_slice %0 {offsets = [1, 0], sizes = [1, 128], strides = [1, 1]} : vector<3x128xf32> to vector<1x128xf32>
    %83 = vector.shape_cast %82 : vector<1x128xf32> to vector<128xf32>
    %cst_62 = arith.constant 0.000000e+00 : f32
    %84 = vector.broadcast %cst_62 : f32 to vector<2x4x16x128xf32>
    %c0_63 = arith.constant 0 : index
    %c0_64 = arith.constant 0 : index
    %c7 = arith.constant 7 : index
    %c0_65 = arith.constant 0 : index
    %85 = vector.load %arg7[%c0_63, %c0_64, %c7, %c0_65] : memref<2x18x25x128xf32, #tpu.memory_space<vmem>>, vector<2x4x16x128xf32>
    %86 = vector.extract_strided_slice %81 {offsets = [0, 0, 0], sizes = [1, 1, 128], strides = [1, 1, 1]} : vector<3x3x128xf32> to vector<1x1x128xf32>
    %87 = vector.shape_cast %86 : vector<1x1x128xf32> to vector<128xf32>
    %88 = vector.shape_cast %87 : vector<128xf32> to vector<1x1x1x128xf32>
    %89 = vector.broadcast %88 : vector<1x1x1x128xf32> to vector<2x4x16x128xf32>
    %90 = arith.mulf %85, %89 : vector<2x4x16x128xf32>
    %91 = arith.addf %84, %90 : vector<2x4x16x128xf32>
    %c0_66 = arith.constant 0 : index
    %c0_67 = arith.constant 0 : index
    %c8_68 = arith.constant 8 : index
    %c0_69 = arith.constant 0 : index
    %92 = vector.load %arg7[%c0_66, %c0_67, %c8_68, %c0_69] : memref<2x18x25x128xf32, #tpu.memory_space<vmem>>, vector<2x4x16x128xf32>
    %93 = vector.extract_strided_slice %81 {offsets = [0, 1, 0], sizes = [1, 1, 128], strides = [1, 1, 1]} : vector<3x3x128xf32> to vector<1x1x128xf32>
    %94 = vector.shape_cast %93 : vector<1x1x128xf32> to vector<128xf32>
    %95 = vector.shape_cast %94 : vector<128xf32> to vector<1x1x1x128xf32>
    %96 = vector.broadcast %95 : vector<1x1x1x128xf32> to vector<2x4x16x128xf32>
    %97 = arith.mulf %92, %96 : vector<2x4x16x128xf32>
    %98 = arith.addf %91, %97 : vector<2x4x16x128xf32>
    %c0_70 = arith.constant 0 : index
    %c0_71 = arith.constant 0 : index
    %c9_72 = arith.constant 9 : index
    %c0_73 = arith.constant 0 : index
    %99 = vector.load %arg7[%c0_70, %c0_71, %c9_72, %c0_73] : memref<2x18x25x128xf32, #tpu.memory_space<vmem>>, vector<2x4x16x128xf32>
    %100 = vector.extract_strided_slice %81 {offsets = [0, 2, 0], sizes = [1, 1, 128], strides = [1, 1, 1]} : vector<3x3x128xf32> to vector<1x1x128xf32>
    %101 = vector.shape_cast %100 : vector<1x1x128xf32> to vector<128xf32>
    %102 = vector.shape_cast %101 : vector<128xf32> to vector<1x1x1x128xf32>
    %103 = vector.broadcast %102 : vector<1x1x1x128xf32> to vector<2x4x16x128xf32>
    %104 = arith.mulf %99, %103 : vector<2x4x16x128xf32>
    %105 = arith.addf %98, %104 : vector<2x4x16x128xf32>
    %c0_74 = arith.constant 0 : index
    %c1_75 = arith.constant 1 : index
    %c7_76 = arith.constant 7 : index
    %c0_77 = arith.constant 0 : index
    %106 = vector.load %arg7[%c0_74, %c1_75, %c7_76, %c0_77] : memref<2x18x25x128xf32, #tpu.memory_space<vmem>>, vector<2x4x16x128xf32>
    %107 = vector.extract_strided_slice %81 {offsets = [1, 0, 0], sizes = [1, 1, 128], strides = [1, 1, 1]} : vector<3x3x128xf32> to vector<1x1x128xf32>
    %108 = vector.shape_cast %107 : vector<1x1x128xf32> to vector<128xf32>
    %109 = vector.shape_cast %108 : vector<128xf32> to vector<1x1x1x128xf32>
    %110 = vector.broadcast %109 : vector<1x1x1x128xf32> to vector<2x4x16x128xf32>
    %111 = arith.mulf %106, %110 : vector<2x4x16x128xf32>
    %112 = arith.addf %105, %111 : vector<2x4x16x128xf32>
    %c0_78 = arith.constant 0 : index
    %c1_79 = arith.constant 1 : index
    %c8_80 = arith.constant 8 : index
    %c0_81 = arith.constant 0 : index
    %113 = vector.load %arg7[%c0_78, %c1_79, %c8_80, %c0_81] : memref<2x18x25x128xf32, #tpu.memory_space<vmem>>, vector<2x4x16x128xf32>
    %114 = vector.extract_strided_slice %81 {offsets = [1, 1, 0], sizes = [1, 1, 128], strides = [1, 1, 1]} : vector<3x3x128xf32> to vector<1x1x128xf32>
    %115 = vector.shape_cast %114 : vector<1x1x128xf32> to vector<128xf32>
    %116 = vector.shape_cast %115 : vector<128xf32> to vector<1x1x1x128xf32>
    %117 = vector.broadcast %116 : vector<1x1x1x128xf32> to vector<2x4x16x128xf32>
    %118 = arith.mulf %113, %117 : vector<2x4x16x128xf32>
    %119 = arith.addf %112, %118 : vector<2x4x16x128xf32>
    %c0_82 = arith.constant 0 : index
    %c1_83 = arith.constant 1 : index
    %c9_84 = arith.constant 9 : index
    %c0_85 = arith.constant 0 : index
    %120 = vector.load %arg7[%c0_82, %c1_83, %c9_84, %c0_85] : memref<2x18x25x128xf32, #tpu.memory_space<vmem>>, vector<2x4x16x128xf32>
    %121 = vector.extract_strided_slice %81 {offsets = [1, 2, 0], sizes = [1, 1, 128], strides = [1, 1, 1]} : vector<3x3x128xf32> to vector<1x1x128xf32>
    %122 = vector.shape_cast %121 : vector<1x1x128xf32> to vector<128xf32>
    %123 = vector.shape_cast %122 : vector<128xf32> to vector<1x1x1x128xf32>
    %124 = vector.broadcast %123 : vector<1x1x1x128xf32> to vector<2x4x16x128xf32>
    %125 = arith.mulf %120, %124 : vector<2x4x16x128xf32>
    %126 = arith.addf %119, %125 : vector<2x4x16x128xf32>
    %c0_86 = arith.constant 0 : index
    %c2 = arith.constant 2 : index
    %c7_87 = arith.constant 7 : index
    %c0_88 = arith.constant 0 : index
    %127 = vector.load %arg7[%c0_86, %c2, %c7_87, %c0_88] : memref<2x18x25x128xf32, #tpu.memory_space<vmem>>, vector<2x4x16x128xf32>
    %128 = vector.extract_strided_slice %81 {offsets = [2, 0, 0], sizes = [1, 1, 128], strides = [1, 1, 1]} : vector<3x3x128xf32> to vector<1x1x128xf32>
    %129 = vector.shape_cast %128 : vector<1x1x128xf32> to vector<128xf32>
    %130 = vector.shape_cast %129 : vector<128xf32> to vector<1x1x1x128xf32>
    %131 = vector.broadcast %130 : vector<1x1x1x128xf32> to vector<2x4x16x128xf32>
    %132 = arith.mulf %127, %131 : vector<2x4x16x128xf32>
    %133 = arith.addf %126, %132 : vector<2x4x16x128xf32>
    %c0_89 = arith.constant 0 : index
    %c2_90 = arith.constant 2 : index
    %c8_91 = arith.constant 8 : index
    %c0_92 = arith.constant 0 : index
    %134 = vector.load %arg7[%c0_89, %c2_90, %c8_91, %c0_92] : memref<2x18x25x128xf32, #tpu.memory_space<vmem>>, vector<2x4x16x128xf32>
    %135 = vector.extract_strided_slice %81 {offsets = [2, 1, 0], sizes = [1, 1, 128], strides = [1, 1, 1]} : vector<3x3x128xf32> to vector<1x1x128xf32>
    %136 = vector.shape_cast %135 : vector<1x1x128xf32> to vector<128xf32>
    %137 = vector.shape_cast %136 : vector<128xf32> to vector<1x1x1x128xf32>
    %138 = vector.broadcast %137 : vector<1x1x1x128xf32> to vector<2x4x16x128xf32>
    %139 = arith.mulf %134, %138 : vector<2x4x16x128xf32>
    %140 = arith.addf %133, %139 : vector<2x4x16x128xf32>
    %c0_93 = arith.constant 0 : index
    %c2_94 = arith.constant 2 : index
    %c9_95 = arith.constant 9 : index
    %c0_96 = arith.constant 0 : index
    %141 = vector.load %arg7[%c0_93, %c2_94, %c9_95, %c0_96] : memref<2x18x25x128xf32, #tpu.memory_space<vmem>>, vector<2x4x16x128xf32>
    %142 = vector.extract_strided_slice %81 {offsets = [2, 2, 0], sizes = [1, 1, 128], strides = [1, 1, 1]} : vector<3x3x128xf32> to vector<1x1x128xf32>
    %143 = vector.shape_cast %142 : vector<1x1x128xf32> to vector<128xf32>
    %144 = vector.shape_cast %143 : vector<128xf32> to vector<1x1x1x128xf32>
    %145 = vector.broadcast %144 : vector<1x1x1x128xf32> to vector<2x4x16x128xf32>
    %146 = arith.mulf %141, %145 : vector<2x4x16x128xf32>
    %147 = arith.addf %140, %146 : vector<2x4x16x128xf32>
    %148 = vector.shape_cast %83 : vector<128xf32> to vector<1x1x1x128xf32>
    %149 = vector.broadcast %148 : vector<1x1x1x128xf32> to vector<2x4x16x128xf32>
    %150 = arith.addf %147, %149 : vector<2x4x16x128xf32>
    %151 = arith.negf %150 : vector<2x4x16x128xf32>
    %152 = math.exp %151 : vector<2x4x16x128xf32>
    %cst_97 = arith.constant 1.000000e+00 : f32
    %153 = vector.broadcast %cst_97 : f32 to vector<2x4x16x128xf32>
    %154 = arith.addf %153, %152 : vector<2x4x16x128xf32>
    %155 = arith.divf %153, %154 : vector<2x4x16x128xf32>
    %156 = arith.mulf %150, %155 : vector<2x4x16x128xf32>
    %157 = arith.truncf %156 : vector<2x4x16x128xf32> to vector<2x4x16x128xbf16>
    %c0_98 = arith.constant 0 : index
    %c0_99 = arith.constant 0 : index
    %c0_100 = arith.constant 0 : index
    %c0_101 = arith.constant 0 : index
    %158 = vector.load %arg8[%c0_98, %c0_99, %c0_100, %c0_101] : memref<2x16x16x128xbf16, #tpu.memory_space<vmem>>, vector<2x4x16x128xbf16>
    tpu.vector_store %arg8[%c0_98, %c0_99, %c0_100, %c0_101], %157 {strides = array<i32>} : memref<2x16x16x128xbf16, #tpu.memory_space<vmem>>, vector<2x4x16x128xbf16>,
    %cst_102 = arith.constant 0.000000e+00 : f32
    %159 = vector.broadcast %cst_102 : f32 to vector<2x4x16x128xf32>
    %c0_103 = arith.constant 0 : index
    %c4_104 = arith.constant 4 : index
    %c7_105 = arith.constant 7 : index
    %c0_106 = arith.constant 0 : index
    %160 = vector.load %arg7[%c0_103, %c4_104, %c7_105, %c0_106] : memref<2x18x25x128xf32, #tpu.memory_space<vmem>>, vector<2x4x16x128xf32>
    %161 = vector.extract_strided_slice %81 {offsets = [0, 0, 0], sizes = [1, 1, 128], strides = [1, 1, 1]} : vector<3x3x128xf32> to vector<1x1x128xf32>
    %162 = vector.shape_cast %161 : vector<1x1x128xf32> to vector<128xf32>
    %163 = vector.shape_cast %162 : vector<128xf32> to vector<1x1x1x128xf32>
    %164 = vector.broadcast %163 : vector<1x1x1x128xf32> to vector<2x4x16x128xf32>
    %165 = arith.mulf %160, %164 : vector<2x4x16x128xf32>
    %166 = arith.addf %159, %165 : vector<2x4x16x128xf32>
    %c0_107 = arith.constant 0 : index
    %c4_108 = arith.constant 4 : index
    %c8_109 = arith.constant 8 : index
    %c0_110 = arith.constant 0 : index
    %167 = vector.load %arg7[%c0_107, %c4_108, %c8_109, %c0_110] : memref<2x18x25x128xf32, #tpu.memory_space<vmem>>, vector<2x4x16x128xf32>
    %168 = vector.extract_strided_slice %81 {offsets = [0, 1, 0], sizes = [1, 1, 128], strides = [1, 1, 1]} : vector<3x3x128xf32> to vector<1x1x128xf32>
    %169 = vector.shape_cast %168 : vector<1x1x128xf32> to vector<128xf32>
    %170 = vector.shape_cast %169 : vector<128xf32> to vector<1x1x1x128xf32>
    %171 = vector.broadcast %170 : vector<1x1x1x128xf32> to vector<2x4x16x128xf32>
    %172 = arith.mulf %167, %171 : vector<2x4x16x128xf32>
    %173 = arith.addf %166, %172 : vector<2x4x16x128xf32>
    %c0_111 = arith.constant 0 : index
    %c4_112 = arith.constant 4 : index
    %c9_113 = arith.constant 9 : index
    %c0_114 = arith.constant 0 : index
    %174 = vector.load %arg7[%c0_111, %c4_112, %c9_113, %c0_114] : memref<2x18x25x128xf32, #tpu.memory_space<vmem>>, vector<2x4x16x128xf32>
    %175 = vector.extract_strided_slice %81 {offsets = [0, 2, 0], sizes = [1, 1, 128], strides = [1, 1, 1]} : vector<3x3x128xf32> to vector<1x1x128xf32>
    %176 = vector.shape_cast %175 : vector<1x1x128xf32> to vector<128xf32>
    %177 = vector.shape_cast %176 : vector<128xf32> to vector<1x1x1x128xf32>
    %178 = vector.broadcast %177 : vector<1x1x1x128xf32> to vector<2x4x16x128xf32>
    %179 = arith.mulf %174, %178 : vector<2x4x16x128xf32>
    %180 = arith.addf %173, %179 : vector<2x4x16x128xf32>
    %c0_115 = arith.constant 0 : index
    %c5_116 = arith.constant 5 : index
    %c7_117 = arith.constant 7 : index
    %c0_118 = arith.constant 0 : index
    %181 = vector.load %arg7[%c0_115, %c5_116, %c7_117, %c0_118] : memref<2x18x25x128xf32, #tpu.memory_space<vmem>>, vector<2x4x16x128xf32>
    %182 = vector.extract_strided_slice %81 {offsets = [1, 0, 0], sizes = [1, 1, 128], strides = [1, 1, 1]} : vector<3x3x128xf32> to vector<1x1x128xf32>
    %183 = vector.shape_cast %182 : vector<1x1x128xf32> to vector<128xf32>
    %184 = vector.shape_cast %183 : vector<128xf32> to vector<1x1x1x128xf32>
    %185 = vector.broadcast %184 : vector<1x1x1x128xf32> to vector<2x4x16x128xf32>
    %186 = arith.mulf %181, %185 : vector<2x4x16x128xf32>
    %187 = arith.addf %180, %186 : vector<2x4x16x128xf32>
    %c0_119 = arith.constant 0 : index
    %c5_120 = arith.constant 5 : index
    %c8_121 = arith.constant 8 : index
    %c0_122 = arith.constant 0 : index
    %188 = vector.load %arg7[%c0_119, %c5_120, %c8_121, %c0_122] : memref<2x18x25x128xf32, #tpu.memory_space<vmem>>, vector<2x4x16x128xf32>
    %189 = vector.extract_strided_slice %81 {offsets = [1, 1, 0], sizes = [1, 1, 128], strides = [1, 1, 1]} : vector<3x3x128xf32> to vector<1x1x128xf32>
    %190 = vector.shape_cast %189 : vector<1x1x128xf32> to vector<128xf32>
    %191 = vector.shape_cast %190 : vector<128xf32> to vector<1x1x1x128xf32>
    %192 = vector.broadcast %191 : vector<1x1x1x128xf32> to vector<2x4x16x128xf32>
    %193 = arith.mulf %188, %192 : vector<2x4x16x128xf32>
    %194 = arith.addf %187, %193 : vector<2x4x16x128xf32>
    %c0_123 = arith.constant 0 : index
    %c5_124 = arith.constant 5 : index
    %c9_125 = arith.constant 9 : index
    %c0_126 = arith.constant 0 : index
    %195 = vector.load %arg7[%c0_123, %c5_124, %c9_125, %c0_126] : memref<2x18x25x128xf32, #tpu.memory_space<vmem>>, vector<2x4x16x128xf32>
    %196 = vector.extract_strided_slice %81 {offsets = [1, 2, 0], sizes = [1, 1, 128], strides = [1, 1, 1]} : vector<3x3x128xf32> to vector<1x1x128xf32>
    %197 = vector.shape_cast %196 : vector<1x1x128xf32> to vector<128xf32>
    %198 = vector.shape_cast %197 : vector<128xf32> to vector<1x1x1x128xf32>
    %199 = vector.broadcast %198 : vector<1x1x1x128xf32> to vector<2x4x16x128xf32>
    %200 = arith.mulf %195, %199 : vector<2x4x16x128xf32>
    %201 = arith.addf %194, %200 : vector<2x4x16x128xf32>
    %c0_127 = arith.constant 0 : index
    %c6 = arith.constant 6 : index
    %c7_128 = arith.constant 7 : index
    %c0_129 = arith.constant 0 : index
    %202 = vector.load %arg7[%c0_127, %c6, %c7_128, %c0_129] : memref<2x18x25x128xf32, #tpu.memory_space<vmem>>, vector<2x4x16x128xf32>
    %203 = vector.extract_strided_slice %81 {offsets = [2, 0, 0], sizes = [1, 1, 128], strides = [1, 1, 1]} : vector<3x3x128xf32> to vector<1x1x128xf32>
    %204 = vector.shape_cast %203 : vector<1x1x128xf32> to vector<128xf32>
    %205 = vector.shape_cast %204 : vector<128xf32> to vector<1x1x1x128xf32>
    %206 = vector.broadcast %205 : vector<1x1x1x128xf32> to vector<2x4x16x128xf32>
    %207 = arith.mulf %202, %206 : vector<2x4x16x128xf32>
    %208 = arith.addf %201, %207 : vector<2x4x16x128xf32>
    %c0_130 = arith.constant 0 : index
    %c6_131 = arith.constant 6 : index
    %c8_132 = arith.constant 8 : index
    %c0_133 = arith.constant 0 : index
    %209 = vector.load %arg7[%c0_130, %c6_131, %c8_132, %c0_133] : memref<2x18x25x128xf32, #tpu.memory_space<vmem>>, vector<2x4x16x128xf32>
    %210 = vector.extract_strided_slice %81 {offsets = [2, 1, 0], sizes = [1, 1, 128], strides = [1, 1, 1]} : vector<3x3x128xf32> to vector<1x1x128xf32>
    %211 = vector.shape_cast %210 : vector<1x1x128xf32> to vector<128xf32>
    %212 = vector.shape_cast %211 : vector<128xf32> to vector<1x1x1x128xf32>
    %213 = vector.broadcast %212 : vector<1x1x1x128xf32> to vector<2x4x16x128xf32>
    %214 = arith.mulf %209, %213 : vector<2x4x16x128xf32>
    %215 = arith.addf %208, %214 : vector<2x4x16x128xf32>
    %c0_134 = arith.constant 0 : index
    %c6_135 = arith.constant 6 : index
    %c9_136 = arith.constant 9 : index
    %c0_137 = arith.constant 0 : index
    %216 = vector.load %arg7[%c0_134, %c6_135, %c9_136, %c0_137] : memref<2x18x25x128xf32, #tpu.memory_space<vmem>>, vector<2x4x16x128xf32>
    %217 = vector.extract_strided_slice %81 {offsets = [2, 2, 0], sizes = [1, 1, 128], strides = [1, 1, 1]} : vector<3x3x128xf32> to vector<1x1x128xf32>
    %218 = vector.shape_cast %217 : vector<1x1x128xf32> to vector<128xf32>
    %219 = vector.shape_cast %218 : vector<128xf32> to vector<1x1x1x128xf32>
    %220 = vector.broadcast %219 : vector<1x1x1x128xf32> to vector<2x4x16x128xf32>
    %221 = arith.mulf %216, %220 : vector<2x4x16x128xf32>
    %222 = arith.addf %215, %221 : vector<2x4x16x128xf32>
    %223 = vector.shape_cast %83 : vector<128xf32> to vector<1x1x1x128xf32>
    %224 = vector.broadcast %223 : vector<1x1x1x128xf32> to vector<2x4x16x128xf32>
    %225 = arith.addf %222, %224 : vector<2x4x16x128xf32>
    %226 = arith.negf %225 : vector<2x4x16x128xf32>
    %227 = math.exp %226 : vector<2x4x16x128xf32>
    %cst_138 = arith.constant 1.000000e+00 : f32
    %228 = vector.broadcast %cst_138 : f32 to vector<2x4x16x128xf32>
    %229 = arith.addf %228, %227 : vector<2x4x16x128xf32>
    %230 = arith.divf %228, %229 : vector<2x4x16x128xf32>
    %231 = arith.mulf %225, %230 : vector<2x4x16x128xf32>
    %232 = arith.truncf %231 : vector<2x4x16x128xf32> to vector<2x4x16x128xbf16>
    %c0_139 = arith.constant 0 : index
    %c4_140 = arith.constant 4 : index
    %c0_141 = arith.constant 0 : index
    %c0_142 = arith.constant 0 : index
    %233 = vector.load %arg8[%c0_139, %c4_140, %c0_141, %c0_142] : memref<2x16x16x128xbf16, #tpu.memory_space<vmem>>, vector<2x4x16x128xbf16>
    tpu.vector_store %arg8[%c0_139, %c4_140, %c0_141, %c0_142], %232 {strides = array<i32>} : memref<2x16x16x128xbf16, #tpu.memory_space<vmem>>, vector<2x4x16x128xbf16>,
    %cst_143 = arith.constant 0.000000e+00 : f32
    %234 = vector.broadcast %cst_143 : f32 to vector<2x4x16x128xf32>
    %c0_144 = arith.constant 0 : index
    %c8_145 = arith.constant 8 : index
    %c7_146 = arith.constant 7 : index
    %c0_147 = arith.constant 0 : index
    %235 = vector.load %arg7[%c0_144, %c8_145, %c7_146, %c0_147] : memref<2x18x25x128xf32, #tpu.memory_space<vmem>>, vector<2x4x16x128xf32>
    %236 = vector.extract_strided_slice %81 {offsets = [0, 0, 0], sizes = [1, 1, 128], strides = [1, 1, 1]} : vector<3x3x128xf32> to vector<1x1x128xf32>
    %237 = vector.shape_cast %236 : vector<1x1x128xf32> to vector<128xf32>
    %238 = vector.shape_cast %237 : vector<128xf32> to vector<1x1x1x128xf32>
    %239 = vector.broadcast %238 : vector<1x1x1x128xf32> to vector<2x4x16x128xf32>
    %240 = arith.mulf %235, %239 : vector<2x4x16x128xf32>
    %241 = arith.addf %234, %240 : vector<2x4x16x128xf32>
    %c0_148 = arith.constant 0 : index
    %c8_149 = arith.constant 8 : index
    %c8_150 = arith.constant 8 : index
    %c0_151 = arith.constant 0 : index
    %242 = vector.load %arg7[%c0_148, %c8_149, %c8_150, %c0_151] : memref<2x18x25x128xf32, #tpu.memory_space<vmem>>, vector<2x4x16x128xf32>
    %243 = vector.extract_strided_slice %81 {offsets = [0, 1, 0], sizes = [1, 1, 128], strides = [1, 1, 1]} : vector<3x3x128xf32> to vector<1x1x128xf32>
    %244 = vector.shape_cast %243 : vector<1x1x128xf32> to vector<128xf32>
    %245 = vector.shape_cast %244 : vector<128xf32> to vector<1x1x1x128xf32>
    %246 = vector.broadcast %245 : vector<1x1x1x128xf32> to vector<2x4x16x128xf32>
    %247 = arith.mulf %242, %246 : vector<2x4x16x128xf32>
    %248 = arith.addf %241, %247 : vector<2x4x16x128xf32>
    %c0_152 = arith.constant 0 : index
    %c8_153 = arith.constant 8 : index
    %c9_154 = arith.constant 9 : index
    %c0_155 = arith.constant 0 : index
    %249 = vector.load %arg7[%c0_152, %c8_153, %c9_154, %c0_155] : memref<2x18x25x128xf32, #tpu.memory_space<vmem>>, vector<2x4x16x128xf32>
    %250 = vector.extract_strided_slice %81 {offsets = [0, 2, 0], sizes = [1, 1, 128], strides = [1, 1, 1]} : vector<3x3x128xf32> to vector<1x1x128xf32>
    %251 = vector.shape_cast %250 : vector<1x1x128xf32> to vector<128xf32>
    %252 = vector.shape_cast %251 : vector<128xf32> to vector<1x1x1x128xf32>
    %253 = vector.broadcast %252 : vector<1x1x1x128xf32> to vector<2x4x16x128xf32>
    %254 = arith.mulf %249, %253 : vector<2x4x16x128xf32>
    %255 = arith.addf %248, %254 : vector<2x4x16x128xf32>
    %c0_156 = arith.constant 0 : index
    %c9_157 = arith.constant 9 : index
    %c7_158 = arith.constant 7 : index
    %c0_159 = arith.constant 0 : index
    %256 = vector.load %arg7[%c0_156, %c9_157, %c7_158, %c0_159] : memref<2x18x25x128xf32, #tpu.memory_space<vmem>>, vector<2x4x16x128xf32>
    %257 = vector.extract_strided_slice %81 {offsets = [1, 0, 0], sizes = [1, 1, 128], strides = [1, 1, 1]} : vector<3x3x128xf32> to vector<1x1x128xf32>
    %258 = vector.shape_cast %257 : vector<1x1x128xf32> to vector<128xf32>
    %259 = vector.shape_cast %258 : vector<128xf32> to vector<1x1x1x128xf32>
    %260 = vector.broadcast %259 : vector<1x1x1x128xf32> to vector<2x4x16x128xf32>
    %261 = arith.mulf %256, %260 : vector<2x4x16x128xf32>
    %262 = arith.addf %255, %261 : vector<2x4x16x128xf32>
    %c0_160 = arith.constant 0 : index
    %c9_161 = arith.constant 9 : index
    %c8_162 = arith.constant 8 : index
    %c0_163 = arith.constant 0 : index
    %263 = vector.load %arg7[%c0_160, %c9_161, %c8_162, %c0_163] : memref<2x18x25x128xf32, #tpu.memory_space<vmem>>, vector<2x4x16x128xf32>
    %264 = vector.extract_strided_slice %81 {offsets = [1, 1, 0], sizes = [1, 1, 128], strides = [1, 1, 1]} : vector<3x3x128xf32> to vector<1x1x128xf32>
    %265 = vector.shape_cast %264 : vector<1x1x128xf32> to vector<128xf32>
    %266 = vector.shape_cast %265 : vector<128xf32> to vector<1x1x1x128xf32>
    %267 = vector.broadcast %266 : vector<1x1x1x128xf32> to vector<2x4x16x128xf32>
    %268 = arith.mulf %263, %267 : vector<2x4x16x128xf32>
    %269 = arith.addf %262, %268 : vector<2x4x16x128xf32>
    %c0_164 = arith.constant 0 : index
    %c9_165 = arith.constant 9 : index
    %c9_166 = arith.constant 9 : index
    %c0_167 = arith.constant 0 : index
    %270 = vector.load %arg7[%c0_164, %c9_165, %c9_166, %c0_167] : memref<2x18x25x128xf32, #tpu.memory_space<vmem>>, vector<2x4x16x128xf32>
    %271 = vector.extract_strided_slice %81 {offsets = [1, 2, 0], sizes = [1, 1, 128], strides = [1, 1, 1]} : vector<3x3x128xf32> to vector<1x1x128xf32>
    %272 = vector.shape_cast %271 : vector<1x1x128xf32> to vector<128xf32>
    %273 = vector.shape_cast %272 : vector<128xf32> to vector<1x1x1x128xf32>
    %274 = vector.broadcast %273 : vector<1x1x1x128xf32> to vector<2x4x16x128xf32>
    %275 = arith.mulf %270, %274 : vector<2x4x16x128xf32>
    %276 = arith.addf %269, %275 : vector<2x4x16x128xf32>
    %c0_168 = arith.constant 0 : index
    %c10 = arith.constant 10 : index
    %c7_169 = arith.constant 7 : index
    %c0_170 = arith.constant 0 : index
    %277 = vector.load %arg7[%c0_168, %c10, %c7_169, %c0_170] : memref<2x18x25x128xf32, #tpu.memory_space<vmem>>, vector<2x4x16x128xf32>
    %278 = vector.extract_strided_slice %81 {offsets = [2, 0, 0], sizes = [1, 1, 128], strides = [1, 1, 1]} : vector<3x3x128xf32> to vector<1x1x128xf32>
    %279 = vector.shape_cast %278 : vector<1x1x128xf32> to vector<128xf32>
    %280 = vector.shape_cast %279 : vector<128xf32> to vector<1x1x1x128xf32>
    %281 = vector.broadcast %280 : vector<1x1x1x128xf32> to vector<2x4x16x128xf32>
    %282 = arith.mulf %277, %281 : vector<2x4x16x128xf32>
    %283 = arith.addf %276, %282 : vector<2x4x16x128xf32>
    %c0_171 = arith.constant 0 : index
    %c10_172 = arith.constant 10 : index
    %c8_173 = arith.constant 8 : index
    %c0_174 = arith.constant 0 : index
    %284 = vector.load %arg7[%c0_171, %c10_172, %c8_173, %c0_174] : memref<2x18x25x128xf32, #tpu.memory_space<vmem>>, vector<2x4x16x128xf32>
    %285 = vector.extract_strided_slice %81 {offsets = [2, 1, 0], sizes = [1, 1, 128], strides = [1, 1, 1]} : vector<3x3x128xf32> to vector<1x1x128xf32>
    %286 = vector.shape_cast %285 : vector<1x1x128xf32> to vector<128xf32>
    %287 = vector.shape_cast %286 : vector<128xf32> to vector<1x1x1x128xf32>
    %288 = vector.broadcast %287 : vector<1x1x1x128xf32> to vector<2x4x16x128xf32>
    %289 = arith.mulf %284, %288 : vector<2x4x16x128xf32>
    %290 = arith.addf %283, %289 : vector<2x4x16x128xf32>
    %c0_175 = arith.constant 0 : index
    %c10_176 = arith.constant 10 : index
    %c9_177 = arith.constant 9 : index
    %c0_178 = arith.constant 0 : index
    %291 = vector.load %arg7[%c0_175, %c10_176, %c9_177, %c0_178] : memref<2x18x25x128xf32, #tpu.memory_space<vmem>>, vector<2x4x16x128xf32>
    %292 = vector.extract_strided_slice %81 {offsets = [2, 2, 0], sizes = [1, 1, 128], strides = [1, 1, 1]} : vector<3x3x128xf32> to vector<1x1x128xf32>
    %293 = vector.shape_cast %292 : vector<1x1x128xf32> to vector<128xf32>
    %294 = vector.shape_cast %293 : vector<128xf32> to vector<1x1x1x128xf32>
    %295 = vector.broadcast %294 : vector<1x1x1x128xf32> to vector<2x4x16x128xf32>
    %296 = arith.mulf %291, %295 : vector<2x4x16x128xf32>
    %297 = arith.addf %290, %296 : vector<2x4x16x128xf32>
    %298 = vector.shape_cast %83 : vector<128xf32> to vector<1x1x1x128xf32>
    %299 = vector.broadcast %298 : vector<1x1x1x128xf32> to vector<2x4x16x128xf32>
    %300 = arith.addf %297, %299 : vector<2x4x16x128xf32>
    %301 = arith.negf %300 : vector<2x4x16x128xf32>
    %302 = math.exp %301 : vector<2x4x16x128xf32>
    %cst_179 = arith.constant 1.000000e+00 : f32
    %303 = vector.broadcast %cst_179 : f32 to vector<2x4x16x128xf32>
    %304 = arith.addf %303, %302 : vector<2x4x16x128xf32>
    %305 = arith.divf %303, %304 : vector<2x4x16x128xf32>
    %306 = arith.mulf %300, %305 : vector<2x4x16x128xf32>
    %307 = arith.truncf %306 : vector<2x4x16x128xf32> to vector<2x4x16x128xbf16>
    %c0_180 = arith.constant 0 : index
    %c8_181 = arith.constant 8 : index
    %c0_182 = arith.constant 0 : index
    %c0_183 = arith.constant 0 : index
    %308 = vector.load %arg8[%c0_180, %c8_181, %c0_182, %c0_183] : memref<2x16x16x128xbf16, #tpu.memory_space<vmem>>, vector<2x4x16x128xbf16>
    tpu.vector_store %arg8[%c0_180, %c8_181, %c0_182, %c0_183], %307 {strides = array<i32>} : memref<2x16x16x128xbf16, #tpu.memory_space<vmem>>, vector<2x4x16x128xbf16>,
    %cst_184 = arith.constant 0.000000e+00 : f32
    %309 = vector.broadcast %cst_184 : f32 to vector<2x4x16x128xf32>
    %c0_185 = arith.constant 0 : index
    %c12_186 = arith.constant 12 : index
    %c7_187 = arith.constant 7 : index
    %c0_188 = arith.constant 0 : index
    %310 = vector.load %arg7[%c0_185, %c12_186, %c7_187, %c0_188] : memref<2x18x25x128xf32, #tpu.memory_space<vmem>>, vector<2x4x16x128xf32>
    %311 = vector.extract_strided_slice %81 {offsets = [0, 0, 0], sizes = [1, 1, 128], strides = [1, 1, 1]} : vector<3x3x128xf32> to vector<1x1x128xf32>
    %312 = vector.shape_cast %311 : vector<1x1x128xf32> to vector<128xf32>
    %313 = vector.shape_cast %312 : vector<128xf32> to vector<1x1x1x128xf32>
    %314 = vector.broadcast %313 : vector<1x1x1x128xf32> to vector<2x4x16x128xf32>
    %315 = arith.mulf %310, %314 : vector<2x4x16x128xf32>
    %316 = arith.addf %309, %315 : vector<2x4x16x128xf32>
    %c0_189 = arith.constant 0 : index
    %c12_190 = arith.constant 12 : index
    %c8_191 = arith.constant 8 : index
    %c0_192 = arith.constant 0 : index
    %317 = vector.load %arg7[%c0_189, %c12_190, %c8_191, %c0_192] : memref<2x18x25x128xf32, #tpu.memory_space<vmem>>, vector<2x4x16x128xf32>
    %318 = vector.extract_strided_slice %81 {offsets = [0, 1, 0], sizes = [1, 1, 128], strides = [1, 1, 1]} : vector<3x3x128xf32> to vector<1x1x128xf32>
    %319 = vector.shape_cast %318 : vector<1x1x128xf32> to vector<128xf32>
    %320 = vector.shape_cast %319 : vector<128xf32> to vector<1x1x1x128xf32>
    %321 = vector.broadcast %320 : vector<1x1x1x128xf32> to vector<2x4x16x128xf32>
    %322 = arith.mulf %317, %321 : vector<2x4x16x128xf32>
    %323 = arith.addf %316, %322 : vector<2x4x16x128xf32>
    %c0_193 = arith.constant 0 : index
    %c12_194 = arith.constant 12 : index
    %c9_195 = arith.constant 9 : index
    %c0_196 = arith.constant 0 : index
    %324 = vector.load %arg7[%c0_193, %c12_194, %c9_195, %c0_196] : memref<2x18x25x128xf32, #tpu.memory_space<vmem>>, vector<2x4x16x128xf32>
    %325 = vector.extract_strided_slice %81 {offsets = [0, 2, 0], sizes = [1, 1, 128], strides = [1, 1, 1]} : vector<3x3x128xf32> to vector<1x1x128xf32>
    %326 = vector.shape_cast %325 : vector<1x1x128xf32> to vector<128xf32>
    %327 = vector.shape_cast %326 : vector<128xf32> to vector<1x1x1x128xf32>
    %328 = vector.broadcast %327 : vector<1x1x1x128xf32> to vector<2x4x16x128xf32>
    %329 = arith.mulf %324, %328 : vector<2x4x16x128xf32>
    %330 = arith.addf %323, %329 : vector<2x4x16x128xf32>
    %c0_197 = arith.constant 0 : index
    %c13_198 = arith.constant 13 : index
    %c7_199 = arith.constant 7 : index
    %c0_200 = arith.constant 0 : index
    %331 = vector.load %arg7[%c0_197, %c13_198, %c7_199, %c0_200] : memref<2x18x25x128xf32, #tpu.memory_space<vmem>>, vector<2x4x16x128xf32>
    %332 = vector.extract_strided_slice %81 {offsets = [1, 0, 0], sizes = [1, 1, 128], strides = [1, 1, 1]} : vector<3x3x128xf32> to vector<1x1x128xf32>
    %333 = vector.shape_cast %332 : vector<1x1x128xf32> to vector<128xf32>
    %334 = vector.shape_cast %333 : vector<128xf32> to vector<1x1x1x128xf32>
    %335 = vector.broadcast %334 : vector<1x1x1x128xf32> to vector<2x4x16x128xf32>
    %336 = arith.mulf %331, %335 : vector<2x4x16x128xf32>
    %337 = arith.addf %330, %336 : vector<2x4x16x128xf32>
    %c0_201 = arith.constant 0 : index
    %c13_202 = arith.constant 13 : index
    %c8_203 = arith.constant 8 : index
    %c0_204 = arith.constant 0 : index
    %338 = vector.load %arg7[%c0_201, %c13_202, %c8_203, %c0_204] : memref<2x18x25x128xf32, #tpu.memory_space<vmem>>, vector<2x4x16x128xf32>
    %339 = vector.extract_strided_slice %81 {offsets = [1, 1, 0], sizes = [1, 1, 128], strides = [1, 1, 1]} : vector<3x3x128xf32> to vector<1x1x128xf32>
    %340 = vector.shape_cast %339 : vector<1x1x128xf32> to vector<128xf32>
    %341 = vector.shape_cast %340 : vector<128xf32> to vector<1x1x1x128xf32>
    %342 = vector.broadcast %341 : vector<1x1x1x128xf32> to vector<2x4x16x128xf32>
    %343 = arith.mulf %338, %342 : vector<2x4x16x128xf32>
    %344 = arith.addf %337, %343 : vector<2x4x16x128xf32>
    %c0_205 = arith.constant 0 : index
    %c13_206 = arith.constant 13 : index
    %c9_207 = arith.constant 9 : index
    %c0_208 = arith.constant 0 : index
    %345 = vector.load %arg7[%c0_205, %c13_206, %c9_207, %c0_208] : memref<2x18x25x128xf32, #tpu.memory_space<vmem>>, vector<2x4x16x128xf32>
    %346 = vector.extract_strided_slice %81 {offsets = [1, 2, 0], sizes = [1, 1, 128], strides = [1, 1, 1]} : vector<3x3x128xf32> to vector<1x1x128xf32>
    %347 = vector.shape_cast %346 : vector<1x1x128xf32> to vector<128xf32>
    %348 = vector.shape_cast %347 : vector<128xf32> to vector<1x1x1x128xf32>
    %349 = vector.broadcast %348 : vector<1x1x1x128xf32> to vector<2x4x16x128xf32>
    %350 = arith.mulf %345, %349 : vector<2x4x16x128xf32>
    %351 = arith.addf %344, %350 : vector<2x4x16x128xf32>
    %c0_209 = arith.constant 0 : index
    %c14 = arith.constant 14 : index
    %c7_210 = arith.constant 7 : index
    %c0_211 = arith.constant 0 : index
    %352 = vector.load %arg7[%c0_209, %c14, %c7_210, %c0_211] : memref<2x18x25x128xf32, #tpu.memory_space<vmem>>, vector<2x4x16x128xf32>
    %353 = vector.extract_strided_slice %81 {offsets = [2, 0, 0], sizes = [1, 1, 128], strides = [1, 1, 1]} : vector<3x3x128xf32> to vector<1x1x128xf32>
    %354 = vector.shape_cast %353 : vector<1x1x128xf32> to vector<128xf32>
    %355 = vector.shape_cast %354 : vector<128xf32> to vector<1x1x1x128xf32>
    %356 = vector.broadcast %355 : vector<1x1x1x128xf32> to vector<2x4x16x128xf32>
    %357 = arith.mulf %352, %356 : vector<2x4x16x128xf32>
    %358 = arith.addf %351, %357 : vector<2x4x16x128xf32>
    %c0_212 = arith.constant 0 : index
    %c14_213 = arith.constant 14 : index
    %c8_214 = arith.constant 8 : index
    %c0_215 = arith.constant 0 : index
    %359 = vector.load %arg7[%c0_212, %c14_213, %c8_214, %c0_215] : memref<2x18x25x128xf32, #tpu.memory_space<vmem>>, vector<2x4x16x128xf32>
    %360 = vector.extract_strided_slice %81 {offsets = [2, 1, 0], sizes = [1, 1, 128], strides = [1, 1, 1]} : vector<3x3x128xf32> to vector<1x1x128xf32>
    %361 = vector.shape_cast %360 : vector<1x1x128xf32> to vector<128xf32>
    %362 = vector.shape_cast %361 : vector<128xf32> to vector<1x1x1x128xf32>
    %363 = vector.broadcast %362 : vector<1x1x1x128xf32> to vector<2x4x16x128xf32>
    %364 = arith.mulf %359, %363 : vector<2x4x16x128xf32>
    %365 = arith.addf %358, %364 : vector<2x4x16x128xf32>
    %c0_216 = arith.constant 0 : index
    %c14_217 = arith.constant 14 : index
    %c9_218 = arith.constant 9 : index
    %c0_219 = arith.constant 0 : index
    %366 = vector.load %arg7[%c0_216, %c14_217, %c9_218, %c0_219] : memref<2x18x25x128xf32, #tpu.memory_space<vmem>>, vector<2x4x16x128xf32>
    %367 = vector.extract_strided_slice %81 {offsets = [2, 2, 0], sizes = [1, 1, 128], strides = [1, 1, 1]} : vector<3x3x128xf32> to vector<1x1x128xf32>
    %368 = vector.shape_cast %367 : vector<1x1x128xf32> to vector<128xf32>
    %369 = vector.shape_cast %368 : vector<128xf32> to vector<1x1x1x128xf32>
    %370 = vector.broadcast %369 : vector<1x1x1x128xf32> to vector<2x4x16x128xf32>
    %371 = arith.mulf %366, %370 : vector<2x4x16x128xf32>
    %372 = arith.addf %365, %371 : vector<2x4x16x128xf32>
    %373 = vector.shape_cast %83 : vector<128xf32> to vector<1x1x1x128xf32>
    %374 = vector.broadcast %373 : vector<1x1x1x128xf32> to vector<2x4x16x128xf32>
    %375 = arith.addf %372, %374 : vector<2x4x16x128xf32>
    %376 = arith.negf %375 : vector<2x4x16x128xf32>
    %377 = math.exp %376 : vector<2x4x16x128xf32>
    %cst_220 = arith.constant 1.000000e+00 : f32
    %378 = vector.broadcast %cst_220 : f32 to vector<2x4x16x128xf32>
    %379 = arith.addf %378, %377 : vector<2x4x16x128xf32>
    %380 = arith.divf %378, %379 : vector<2x4x16x128xf32>
    %381 = arith.mulf %375, %380 : vector<2x4x16x128xf32>
    %382 = arith.truncf %381 : vector<2x4x16x128xf32> to vector<2x4x16x128xbf16>
    %c0_221 = arith.constant 0 : index
    %c12_222 = arith.constant 12 : index
    %c0_223 = arith.constant 0 : index
    %c0_224 = arith.constant 0 : index
    %383 = vector.load %arg8[%c0_221, %c12_222, %c0_223, %c0_224] : memref<2x16x16x128xbf16, #tpu.memory_space<vmem>>, vector<2x4x16x128xbf16>
    tpu.vector_store %arg8[%c0_221, %c12_222, %c0_223, %c0_224], %382 {strides = array<i32>} : memref<2x16x16x128xbf16, #tpu.memory_space<vmem>>, vector<2x4x16x128xbf16>,
    %384 = vector.extract_strided_slice %0 {offsets = [2, 0], sizes = [1, 128], strides = [1, 1]} : vector<3x128xf32> to vector<1x128xf32>
    %385 = vector.shape_cast %384 : vector<1x128xf32> to vector<128xf32>
    %c0_225 = arith.constant 0 : index
    %c0_226 = arith.constant 0 : index
    %c0_227 = arith.constant 0 : index
    %c0_228 = arith.constant 0 : index
    %386 = vector.load %arg8[%c0_225, %c0_226, %c0_227, %c0_228] : memref<2x16x16x128xbf16, #tpu.memory_space<vmem>>, vector<2x4x16x128xbf16>
    %387 = vector.shape_cast %386 : vector<2x4x16x128xbf16> to vector<128x128xbf16>
    %c0_229 = arith.constant 0 : index
    %c0_230 = arith.constant 0 : index
    %388 = vector.load %arg4[%c0_229, %c0_230] : memref<128x128xbf16, #tpu.memory_space<vmem>>, vector<128x128xbf16>
    %cst_231 = arith.constant dense<0.000000e+00> : vector<128x128xf32>
    %389 = tpu.matmul %387, %388, %cst_231 {dimension_numbers = #tpu.dot_dimension_numbers<[1], [0], [0], [1], [0, 0, 1, 1], [], []>} : vector<128x128xbf16>, vector<128x128xbf16>, vector<128x128xf32> -> vector<128x128xf32>
    %390 = vector.shape_cast %385 : vector<128xf32> to vector<1x128xf32>
    %391 = vector.broadcast %390 : vector<1x128xf32> to vector<128x128xf32>
    %392 = arith.addf %389, %391 : vector<128x128xf32>
    %393 = vector.shape_cast %392 : vector<128x128xf32> to vector<2x4x16x128xf32>
    %c0_232 = arith.constant 0 : index
    %c0_233 = arith.constant 0 : index
    %c0_234 = arith.constant 0 : index
    %c0_235 = arith.constant 0 : index
    %394 = vector.load %arg1[%c0_232, %c0_233, %c0_234, %c0_235] : memref<2x16x16x128xf32, #tpu.memory_space<vmem>>, vector<2x4x16x128xf32>
    %395 = arith.addf %393, %394 : vector<2x4x16x128xf32>
    %c0_236 = arith.constant 0 : index
    %c0_237 = arith.constant 0 : index
    %c0_238 = arith.constant 0 : index
    %c0_239 = arith.constant 0 : index
    %396 = vector.load %arg6[%c0_236, %c0_237, %c0_238, %c0_239] : memref<2x16x16x128xf32, #tpu.memory_space<vmem>>, vector<2x4x16x128xf32>
    tpu.vector_store %arg6[%c0_236, %c0_237, %c0_238, %c0_239], %395 {strides = array<i32>} : memref<2x16x16x128xf32, #tpu.memory_space<vmem>>, vector<2x4x16x128xf32>,
    %c0_240 = arith.constant 0 : index
    %c4_241 = arith.constant 4 : index
    %c0_242 = arith.constant 0 : index
    %c0_243 = arith.constant 0 : index
    %397 = vector.load %arg8[%c0_240, %c4_241, %c0_242, %c0_243] : memref<2x16x16x128xbf16, #tpu.memory_space<vmem>>, vector<2x4x16x128xbf16>
    %398 = vector.shape_cast %397 : vector<2x4x16x128xbf16> to vector<128x128xbf16>
    %c0_244 = arith.constant 0 : index
    %c0_245 = arith.constant 0 : index
    %399 = vector.load %arg4[%c0_244, %c0_245] : memref<128x128xbf16, #tpu.memory_space<vmem>>, vector<128x128xbf16>
    %cst_246 = arith.constant dense<0.000000e+00> : vector<128x128xf32>
    %400 = tpu.matmul %398, %399, %cst_246 {dimension_numbers = #tpu.dot_dimension_numbers<[1], [0], [0], [1], [0, 0, 1, 1], [], []>} : vector<128x128xbf16>, vector<128x128xbf16>, vector<128x128xf32> -> vector<128x128xf32>
    %401 = vector.shape_cast %385 : vector<128xf32> to vector<1x128xf32>
    %402 = vector.broadcast %401 : vector<1x128xf32> to vector<128x128xf32>
    %403 = arith.addf %400, %402 : vector<128x128xf32>
    %404 = vector.shape_cast %403 : vector<128x128xf32> to vector<2x4x16x128xf32>
    %c0_247 = arith.constant 0 : index
    %c4_248 = arith.constant 4 : index
    %c0_249 = arith.constant 0 : index
    %c0_250 = arith.constant 0 : index
    %405 = vector.load %arg1[%c0_247, %c4_248, %c0_249, %c0_250] : memref<2x16x16x128xf32, #tpu.memory_space<vmem>>, vector<2x4x16x128xf32>
    %406 = arith.addf %404, %405 : vector<2x4x16x128xf32>
    %c0_251 = arith.constant 0 : index
    %c4_252 = arith.constant 4 : index
    %c0_253 = arith.constant 0 : index
    %c0_254 = arith.constant 0 : index
    %407 = vector.load %arg6[%c0_251, %c4_252, %c0_253, %c0_254] : memref<2x16x16x128xf32, #tpu.memory_space<vmem>>, vector<2x4x16x128xf32>
    tpu.vector_store %arg6[%c0_251, %c4_252, %c0_253, %c0_254], %406 {strides = array<i32>} : memref<2x16x16x128xf32, #tpu.memory_space<vmem>>, vector<2x4x16x128xf32>,
    %c0_255 = arith.constant 0 : index
    %c8_256 = arith.constant 8 : index
    %c0_257 = arith.constant 0 : index
    %c0_258 = arith.constant 0 : index
    %408 = vector.load %arg8[%c0_255, %c8_256, %c0_257, %c0_258] : memref<2x16x16x128xbf16, #tpu.memory_space<vmem>>, vector<2x4x16x128xbf16>
    %409 = vector.shape_cast %408 : vector<2x4x16x128xbf16> to vector<128x128xbf16>
    %c0_259 = arith.constant 0 : index
    %c0_260 = arith.constant 0 : index
    %410 = vector.load %arg4[%c0_259, %c0_260] : memref<128x128xbf16, #tpu.memory_space<vmem>>, vector<128x128xbf16>
    %cst_261 = arith.constant dense<0.000000e+00> : vector<128x128xf32>
    %411 = tpu.matmul %409, %410, %cst_261 {dimension_numbers = #tpu.dot_dimension_numbers<[1], [0], [0], [1], [0, 0, 1, 1], [], []>} : vector<128x128xbf16>, vector<128x128xbf16>, vector<128x128xf32> -> vector<128x128xf32>
    %412 = vector.shape_cast %385 : vector<128xf32> to vector<1x128xf32>
    %413 = vector.broadcast %412 : vector<1x128xf32> to vector<128x128xf32>
    %414 = arith.addf %411, %413 : vector<128x128xf32>
    %415 = vector.shape_cast %414 : vector<128x128xf32> to vector<2x4x16x128xf32>
    %c0_262 = arith.constant 0 : index
    %c8_263 = arith.constant 8 : index
    %c0_264 = arith.constant 0 : index
    %c0_265 = arith.constant 0 : index
    %416 = vector.load %arg1[%c0_262, %c8_263, %c0_264, %c0_265] : memref<2x16x16x128xf32, #tpu.memory_space<vmem>>, vector<2x4x16x128xf32>
    %417 = arith.addf %415, %416 : vector<2x4x16x128xf32>
    %c0_266 = arith.constant 0 : index
    %c8_267 = arith.constant 8 : index
    %c0_268 = arith.constant 0 : index
    %c0_269 = arith.constant 0 : index
    %418 = vector.load %arg6[%c0_266, %c8_267, %c0_268, %c0_269] : memref<2x16x16x128xf32, #tpu.memory_space<vmem>>, vector<2x4x16x128xf32>
    tpu.vector_store %arg6[%c0_266, %c8_267, %c0_268, %c0_269], %417 {strides = array<i32>} : memref<2x16x16x128xf32, #tpu.memory_space<vmem>>, vector<2x4x16x128xf32>,
    %c0_270 = arith.constant 0 : index
    %c12_271 = arith.constant 12 : index
    %c0_272 = arith.constant 0 : index
    %c0_273 = arith.constant 0 : index
    %419 = vector.load %arg8[%c0_270, %c12_271, %c0_272, %c0_273] : memref<2x16x16x128xbf16, #tpu.memory_space<vmem>>, vector<2x4x16x128xbf16>
    %420 = vector.shape_cast %419 : vector<2x4x16x128xbf16> to vector<128x128xbf16>
    %c0_274 = arith.constant 0 : index
    %c0_275 = arith.constant 0 : index
    %421 = vector.load %arg4[%c0_274, %c0_275] : memref<128x128xbf16, #tpu.memory_space<vmem>>, vector<128x128xbf16>
    %cst_276 = arith.constant dense<0.000000e+00> : vector<128x128xf32>
    %422 = tpu.matmul %420, %421, %cst_276 {dimension_numbers = #tpu.dot_dimension_numbers<[1], [0], [0], [1], [0, 0, 1, 1], [], []>} : vector<128x128xbf16>, vector<128x128xbf16>, vector<128x128xf32> -> vector<128x128xf32>
    %423 = vector.shape_cast %385 : vector<128xf32> to vector<1x128xf32>
    %424 = vector.broadcast %423 : vector<1x128xf32> to vector<128x128xf32>
    %425 = arith.addf %422, %424 : vector<128x128xf32>
    %426 = vector.shape_cast %425 : vector<128x128xf32> to vector<2x4x16x128xf32>
    %c0_277 = arith.constant 0 : index
    %c12_278 = arith.constant 12 : index
    %c0_279 = arith.constant 0 : index
    %c0_280 = arith.constant 0 : index
    %427 = vector.load %arg1[%c0_277, %c12_278, %c0_279, %c0_280] : memref<2x16x16x128xf32, #tpu.memory_space<vmem>>, vector<2x4x16x128xf32>
    %428 = arith.addf %426, %427 : vector<2x4x16x128xf32>
    %c0_281 = arith.constant 0 : index
    %c12_282 = arith.constant 12 : index
    %c0_283 = arith.constant 0 : index
    %c0_284 = arith.constant 0 : index
    %429 = vector.load %arg6[%c0_281, %c12_282, %c0_283, %c0_284] : memref<2x16x16x128xf32, #tpu.memory_space<vmem>>, vector<2x4x16x128xf32>
    tpu.vector_store %arg6[%c0_281, %c12_282, %c0_283, %c0_284], %428 {strides = array<i32>} : memref<2x16x16x128xf32, #tpu.memory_space<vmem>>, vector<2x4x16x128xf32>,
    return
  }
  func.func @transform_0(%arg0: i32) -> (i32, i32, i32, i32) {
    %c0_i32 = arith.constant 0 : i32
    %c0_i32_0 = arith.constant 0 : i32
    %c0_i32_1 = arith.constant 0 : i32
    %c0_i32_2 = arith.constant 0 : i32
    return %arg0, %c0_i32, %c0_i32_0, %c0_i32_1 : i32, i32, i32, i32
  }
  func.func @transform_1(%arg0: i32) -> (i32, i32) {
    %c0_i32 = arith.constant 0 : i32
    %c0_i32_0 = arith.constant 0 : i32
    %c0_i32_1 = arith.constant 0 : i32
    return %c0_i32, %c0_i32_0 : i32, i32
  }
  func.func @transform_2(%arg0: i32) -> (i32, i32, i32) {
    %c0_i32 = arith.constant 0 : i32
    %c0_i32_0 = arith.constant 0 : i32
    %c0_i32_1 = arith.constant 0 : i32
    %c0_i32_2 = arith.constant 0 : i32
    return %c0_i32, %c0_i32_0, %c0_i32_1 : i32, i32, i32
  }
  func.func @transform_3(%arg0: i32) -> (i32, i32) {
    %c0_i32 = arith.constant 0 : i32
    %c0_i32_0 = arith.constant 0 : i32
    %c0_i32_1 = arith.constant 0 : i32
    return %c0_i32, %c0_i32_0 : i32, i32
  }
  func.func @transform_4(%arg0: i32) -> (i32, i32) {
    %c0_i32 = arith.constant 0 : i32
    %c0_i32_0 = arith.constant 0 : i32
    %c0_i32_1 = arith.constant 0 : i32
    return %c0_i32, %c0_i32_0 : i32, i32
  }
  func.func @transform_5(%arg0: i32) -> (i32, i32, i32, i32) {
    %c0_i32 = arith.constant 0 : i32
    %c0_i32_0 = arith.constant 0 : i32
    %c0_i32_1 = arith.constant 0 : i32
    %c0_i32_2 = arith.constant 0 : i32
    return %arg0, %c0_i32, %c0_i32_0, %c0_i32_1 : i32, i32, i32, i32
  }
}

</mosaic_0001>

<llo_original>
// kernel: tpu_custom_call.1
$region0: #{tpu_custom_call.1}
  #allocation0 [shape = 'u32[]', space=smem, size = 0x4, offset = 0x4, fixed_abs, tag = 'smem constant byte address 0x4 - core index']
  #allocation1 [shape = 'u32[144,128]{1,0:T(1,128)}', space=vmem, size = 0x12000, scoped, tag = 'internal scratch']
  #allocation2 [shape = 'f32[2,18,25,128]{3,2,1,0:T(8,128)}', space=vmem, size = 0x90000, scoped, tag = 'scratch operand']
  #allocation3 [shape = 'bf16[2,16,16,128]{3,2,1,0:T(8,128)(2,1)}', space=vmem, size = 0x20000, scoped, tag = 'scratch operand']
  %s0 = inlined_call_operand.hbm [shape: f32[2,16,16,128], index: 0, kind: input, shape index: {}]
  %s1 = inlined_call_operand.hbm [shape: bf16[128,128], index: 1, kind: input, shape index: {}]
  %s2 = inlined_call_operand.hbm [shape: f32[3,3,128], index: 2, kind: input, shape index: {}]
  %s3 = inlined_call_operand.hbm [shape: bf16[128,128], index: 3, kind: input, shape index: {}]
  %s4 = inlined_call_operand.vmem [shape: f32[3,128], index: 4, kind: input, shape index: {}]
  %s5 = inlined_call_operand.hbm [shape: f32[2,16,16,128], index: 5, kind: output, shape index: {}]
  %s6 = sld [smem:[#allocation0]]
  $region46: #{tpu_custom_call.1} parent=0
    _
  %s8 = ssub.s32 1, %s6
  %s9 = scalar_select 0, %s8, %s6
  $region1: #{tpu_custom_call.1} parent=0
    #allocation4 [shape = 'u8[262144]{0}', space=vmem, size = 0x40000, scoped, tag = 'input window, operand 0, single buffered']
    #allocation5 [shape = 's32[1]{0}', space=sflag, size = 0x4, scoped, tag = 'scoped memory for tpu_custom_call.1']
    #allocation6 [shape = 's32[1]{0}', space=sflag, size = 0x4, scoped, tag = 'scoped memory for tpu_custom_call.1']
    #allocation7 [shape = 'u8[32768]{0}', space=vmem, size = 0x8000, scoped, tag = 'input window, operand 1, single buffered']
    #allocation8 [shape = 's32[1]{0}', space=sflag, size = 0x4, scoped, tag = 'scoped memory for tpu_custom_call.1']
    #allocation9 [shape = 'u8[6144]{0}', space=vmem, size = 0x1800, scoped, tag = 'input window, operand 2, single buffered']
    #allocation10 [shape = 'u8[32768]{0}', space=vmem, size = 0x8000, scoped, tag = 'input window, operand 3, single buffered']
    #allocation11 [shape = 's32[1]{0}', space=sflag, size = 0x4, scoped, tag = 'scoped memory for tpu_custom_call.1']
    #allocation12 [shape = 'u8[262144]{0}', space=vmem, size = 0x40000, scoped, tag = 'output window, operand 0, single buffered']
    %10 = vsyncpa [#allocation5], 0
    %11 = vsyncpa [#allocation8], 0
    %12 = vsyncpa [#allocation11], 0
    %13 = vsyncpa [#allocation6], 0
    // Predicated region
    $region2: #{tpu_custom_call.1} parent=1 // pred_check
      _
    $region3: #{tpu_custom_call.1} parent=1 // pred_check_branch
      %15 = sbr.rel (0) target = $region5
    $region4: #{tpu_custom_call.1} parent=1 // pred_region
      %s17 = ssub.s32 8192, 8192
      %18 = vsyncadd [#allocation5], %s17
      %s19 = sshll.u32 [#allocation4], 4
      %s20 = int_to_ptr.vmem [resolvable:$true] %s19
      %25 = dma.hbm_to_vmem [thread:$0]  %s0, 8192, %s20, [#allocation5], 128, 128, 8
    $region5: #{tpu_custom_call.1} parent=1 // pred_fallthru
      _
    // Predicated region
    $region6: #{tpu_custom_call.1} parent=1 // pred_check
      _
    $region7: #{tpu_custom_call.1} parent=1 // pred_check_branch
      %27 = sbr.rel (0) target = $region9
    $region8: #{tpu_custom_call.1} parent=1 // pred_region
      %s29 = ssub.s32 1024, 1024
      %30 = vsyncadd [#allocation8], %s29
      %s31 = sshll.u32 [#allocation7], 4
      %s32 = int_to_ptr.vmem [resolvable:$true] %s31
      %37 = dma.hbm_to_vmem [thread:$0]  %s1, 1024, %s32, [#allocation8], 64, 64, 4
    $region9: #{tpu_custom_call.1} parent=1 // pred_fallthru
      _
    // Predicated region
    $region10: #{tpu_custom_call.1} parent=1 // pred_check
      _
    $region11: #{tpu_custom_call.1} parent=1 // pred_check_branch
      %39 = sbr.rel (0) target = $region13
    $region12: #{tpu_custom_call.1} parent=1 // pred_region
      %s41 = ssub.s32 192, 192
      %42 = vsyncadd [#allocation8], %s41
      %s43 = sshll.u32 [#allocation9], 4
      %s44 = int_to_ptr.vmem [resolvable:$true] %s43
      %49 = dma.hbm_to_vmem [thread:$0]  %s2, 192, %s44, [#allocation8], 64, 64, 4
    $region13: #{tpu_custom_call.1} parent=1 // pred_fallthru
      _
    // Predicated region
    $region14: #{tpu_custom_call.1} parent=1 // pred_check
      _
    $region15: #{tpu_custom_call.1} parent=1 // pred_check_branch
      %51 = sbr.rel (0) target = $region17
    $region16: #{tpu_custom_call.1} parent=1 // pred_region
      %s53 = ssub.s32 1024, 1024
      %54 = vsyncadd [#allocation11], %s53
      %s55 = sshll.u32 [#allocation10], 4
      %s56 = int_to_ptr.vmem [resolvable:$true] %s55
      %61 = dma.hbm_to_vmem [thread:$0]  %s3, 1024, %s56, [#allocation11], 64, 64, 4
    $region17: #{tpu_custom_call.1} parent=1 // pred_fallthru
      _
    // Predicated region
    $region18: #{tpu_custom_call.1} parent=1 // pred_check
      _
    $region19: #{tpu_custom_call.1} parent=1 // pred_check_branch
      %63 = sbr.rel (0) target = $region21
    $region20: #{tpu_custom_call.1} parent=1 // pred_region
      _
    $region21: #{tpu_custom_call.1} parent=1 // pred_fallthru
      _
    // Predicated region
    $region22: #{tpu_custom_call.1} parent=1 // pred_check
      _
    $region23: #{tpu_custom_call.1} parent=1 // pred_check_branch
      %65 = sbr.rel (0) target = $region25
    $region24: #{tpu_custom_call.1} parent=1 // pred_region
      %66 = dma.done [#allocation5], 8192
    $region25: #{tpu_custom_call.1} parent=1 // pred_fallthru
      _
    // Predicated region
    $region26: #{tpu_custom_call.1} parent=1 // pred_check
      _
    $region27: #{tpu_custom_call.1} parent=1 // pred_check_branch
      %68 = sbr.rel (0) target = $region29
    $region28: #{tpu_custom_call.1} parent=1 // pred_region
      %69 = dma.done [#allocation8], 1024
    $region29: #{tpu_custom_call.1} parent=1 // pred_fallthru
      _
    // Predicated region
    $region30: #{tpu_custom_call.1} parent=1 // pred_check
      _
    $region31: #{tpu_custom_call.1} parent=1 // pred_check_branch
      %71 = sbr.rel (0) target = $region33
    $region32: #{tpu_custom_call.1} parent=1 // pred_region
      %72 = dma.done [#allocation8], 192
    $region33: #{tpu_custom_call.1} parent=1 // pred_fallthru
      _
    // Predicated region
    $region34: #{tpu_custom_call.1} parent=1 // pred_check
      _
    $region35: #{tpu_custom_call.1} parent=1 // pred_check_branch
      %74 = sbr.rel (0) target = $region37
    $region36: #{tpu_custom_call.1} parent=1 // pred_region
      %75 = dma.done [#allocation11], 1024
    $region37: #{tpu_custom_call.1} parent=1 // pred_fallthru
      _
    %v77 = vld [vmem:[%s4] sm:$0x7]
    %78 = vst [vmem:[#allocation2] sm:$0xff] 0.0
    %79 = vst [vmem:[#allocation2 + $0x8] sm:$0xff] 0.0
    %80 = vst [vmem:[#allocation2 + $0x10] sm:$0xff] 0.0
    %81 = vst [vmem:[#allocation2 + $0x18] sm:$0x1] 0.0
    %82 = vst [vmem:[#allocation2 + $0x240] sm:$0xff] 0.0
    %83 = vst [vmem:[#allocation2 + $0x248] sm:$0xff] 0.0
    %84 = vst [vmem:[#allocation2 + $0x250] sm:$0xff] 0.0
    %85 = vst [vmem:[#allocation2 + $0x258] sm:$0x1] 0.0
    %s86 = scalar_lea.vmem [#allocation2], 544
    %87 = vst [vmem:[%s86] sm:$0xff] 0.0
    %88 = vst [vmem:[%s86 + $0x8] sm:$0xff] 0.0
    %89 = vst [vmem:[%s86 + $0x10] sm:$0xff] 0.0
    %90 = vst [vmem:[%s86 + $0x18] sm:$0x1] 0.0
    %91 = vst [vmem:[%s86 + $0x240] sm:$0xff] 0.0
    %92 = vst [vmem:[%s86 + $0x248] sm:$0xff] 0.0
    %93 = vst [vmem:[%s86 + $0x250] sm:$0xff] 0.0
    %94 = vst [vmem:[%s86 + $0x258] sm:$0x1] 0.0
    %95 = vst [vmem:[#allocation2] sm:$0xff] 0.0
    %96 = vst [vmem:[#allocation2 + $0x20] sm:$0xff] 0.0
    %97 = vst [vmem:[#allocation2 + $0x40] sm:$0xff] 0.0
    %98 = vst [vmem:[#allocation2 + $0x60] sm:$0xff] 0.0
    %99 = vst [vmem:[#allocation2 + $0x80] sm:$0xff] 0.0
    %100 = vst [vmem:[#allocation2 + $0xa0] sm:$0xff] 0.0
    %101 = vst [vmem:[#allocation2 + $0xc0] sm:$0xff] 0.0
    %102 = vst [vmem:[#allocation2 + $0xe0] sm:$0xff] 0.0
    %103 = vst [vmem:[#allocation2 + $0x100] sm:$0xff] 0.0
    %104 = vst [vmem:[#allocation2 + $0x120] sm:$0xff] 0.0
    %105 = vst [vmem:[#allocation2 + $0x140] sm:$0xff] 0.0
    %106 = vst [vmem:[#allocation2 + $0x160] sm:$0xff] 0.0
    %107 = vst [vmem:[#allocation2 + $0x180] sm:$0xff] 0.0
    %108 = vst [vmem:[#allocation2 + $0x1a0] sm:$0xff] 0.0
    %109 = vst [vmem:[#allocation2 + $0x1c0] sm:$0xff] 0.0
    %110 = vst [vmem:[#allocation2 + $0x1e0] sm:$0xff] 0.0
    %111 = vst [vmem:[#allocation2 + $0x200] sm:$0xff] 0.0
    %112 = vst [vmem:[#allocation2 + $0x220] sm:$0xff] 0.0
    %113 = vst [vmem:[#allocation2 + $0x240] sm:$0xff] 0.0
    %114 = vst [vmem:[#allocation2 + $0x260] sm:$0xff] 0.0
    %115 = vst [vmem:[#allocation2 + $0x280] sm:$0xff] 0.0
    %116 = vst [vmem:[#allocation2 + $0x2a0] sm:$0xff] 0.0
    %117 = vst [vmem:[#allocation2 + $0x2c0] sm:$0xff] 0.0
    %118 = vst [vmem:[#allocation2 + $0x2e0] sm:$0xff] 0.0
    %119 = vst [vmem:[#allocation2 + $0x300] sm:$0xff] 0.0
    %120 = vst [vmem:[#allocation2 + $0x320] sm:$0xff] 0.0
    %121 = vst [vmem:[#allocation2 + $0x340] sm:$0xff] 0.0
    %122 = vst [vmem:[#allocation2 + $0x360] sm:$0xff] 0.0
    %123 = vst [vmem:[#allocation2 + $0x380] sm:$0xff] 0.0
    %124 = vst [vmem:[#allocation2 + $0x3a0] sm:$0xff] 0.0
    %125 = vst [vmem:[#allocation2 + $0x3c0] sm:$0xff] 0.0
    %126 = vst [vmem:[#allocation2 + $0x3e0] sm:$0xff] 0.0
    %127 = vst [vmem:[#allocation2 + $0x400] sm:$0xff] 0.0
    %128 = vst [vmem:[#allocation2 + $0x420] sm:$0xff] 0.0
    %129 = vst [vmem:[#allocation2 + $0x440] sm:$0xff] 0.0
    %130 = vst [vmem:[#allocation2 + $0x460] sm:$0xff] 0.0
    %131 = vst [vmem:[#allocation2 + $0x18] sm:$0x1] 0.0
    %132 = vst [vmem:[#allocation2 + $0x38] sm:$0x1] 0.0
    %133 = vst [vmem:[#allocation2 + $0x58] sm:$0x1] 0.0
    %134 = vst [vmem:[#allocation2 + $0x78] sm:$0x1] 0.0
    %135 = vst [vmem:[#allocation2 + $0x98] sm:$0x1] 0.0
    %136 = vst [vmem:[#allocation2 + $0xb8] sm:$0x1] 0.0
    %137 = vst [vmem:[#allocation2 + $0xd8] sm:$0x1] 0.0
    %138 = vst [vmem:[#allocation2 + $0xf8] sm:$0x1] 0.0
    %139 = vst [vmem:[#allocation2 + $0x118] sm:$0x1] 0.0
    %140 = vst [vmem:[#allocation2 + $0x138] sm:$0x1] 0.0
    %141 = vst [vmem:[#allocation2 + $0x158] sm:$0x1] 0.0
    %142 = vst [vmem:[#allocation2 + $0x178] sm:$0x1] 0.0
    %143 = vst [vmem:[#allocation2 + $0x198] sm:$0x1] 0.0
    %144 = vst [vmem:[#allocation2 + $0x1b8] sm:$0x1] 0.0
    %145 = vst [vmem:[#allocation2 + $0x1d8] sm:$0x1] 0.0
    %146 = vst [vmem:[#allocation2 + $0x1f8] sm:$0x1] 0.0
    %147 = vst [vmem:[#allocation2 + $0x218] sm:$0x1] 0.0
    %148 = vst [vmem:[#allocation2 + $0x238] sm:$0x1] 0.0
    %149 = vst [vmem:[#allocation2 + $0x258] sm:$0x1] 0.0
    %150 = vst [vmem:[#allocation2 + $0x278] sm:$0x1] 0.0
    %151 = vst [vmem:[#allocation2 + $0x298] sm:$0x1] 0.0
    %152 = vst [vmem:[#allocation2 + $0x2b8] sm:$0x1] 0.0
    %153 = vst [vmem:[#allocation2 + $0x2d8] sm:$0x1] 0.0
    %154 = vst [vmem:[#allocation2 + $0x2f8] sm:$0x1] 0.0
    %155 = vst [vmem:[#allocation2 + $0x318] sm:$0x1] 0.0
    %156 = vst [vmem:[#allocation2 + $0x338] sm:$0x1] 0.0
    %157 = vst [vmem:[#allocation2 + $0x358] sm:$0x1] 0.0
    %158 = vst [vmem:[#allocation2 + $0x378] sm:$0x1] 0.0
    %159 = vst [vmem:[#allocation2 + $0x398] sm:$0x1] 0.0
    %160 = vst [vmem:[#allocation2 + $0x3b8] sm:$0x1] 0.0
    %161 = vst [vmem:[#allocation2 + $0x3d8] sm:$0x1] 0.0
    %162 = vst [vmem:[#allocation2 + $0x3f8] sm:$0x1] 0.0
    %163 = vst [vmem:[#allocation2 + $0x418] sm:$0x1] 0.0
    %164 = vst [vmem:[#allocation2 + $0x438] sm:$0x1] 0.0
    %165 = vst [vmem:[#allocation2 + $0x458] sm:$0x1] 0.0
    %166 = vst [vmem:[#allocation2 + $0x478] sm:$0x1] 0.0
    %v167 = vld [vmem:[#allocation4] sm:$0xff]
    %v168 = vld [vmem:[#allocation4 + $0x8] sm:$0xff]
    %v169 = vld [vmem:[#allocation4 + $0x10] sm:$0xff]
    %v170 = vld [vmem:[#allocation4 + $0x18] sm:$0xff]
    %v171 = vld [vmem:[#allocation4 + $0x20] sm:$0xff]
    %v172 = vld [vmem:[#allocation4 + $0x28] sm:$0xff]
    %v173 = vld [vmem:[#allocation4 + $0x30] sm:$0xff]
    %v174 = vld [vmem:[#allocation4 + $0x38] sm:$0xff]
    %v175 = vld [vmem:[#allocation4 + $0x100] sm:$0xff]
    %v176 = vld [vmem:[#allocation4 + $0x108] sm:$0xff]
    %v177 = vld [vmem:[#allocation4 + $0x110] sm:$0xff]
    %v178 = vld [vmem:[#allocation4 + $0x118] sm:$0xff]
    %v179 = vld [vmem:[#allocation4 + $0x120] sm:$0xff]
    %v180 = vld [vmem:[#allocation4 + $0x128] sm:$0xff]
    %v181 = vld [vmem:[#allocation4 + $0x130] sm:$0xff]
    %v182 = vld [vmem:[#allocation4 + $0x138] sm:$0xff]
    %v183 = vpack.c.bf16 %v168, %v167
    %v184 = vpack.c.bf16 %v170, %v169
    %v185 = vpack.c.bf16 %v172, %v171
    %v186 = vpack.c.bf16 %v174, %v173
    %v187 = vpack.c.bf16 %v176, %v175
    %v188 = vpack.c.bf16 %v178, %v177
    %v189 = vpack.c.bf16 %v180, %v179
    %v190 = vpack.c.bf16 %v182, %v181
    %v191 = vld [vmem:[#allocation7] sm:$0xf]
    %v192 = vld [vmem:[#allocation7 + $0x4] sm:$0xf]
    %v193 = vld [vmem:[#allocation7 + $0x8] sm:$0xf]
    %v194 = vld [vmem:[#allocation7 + $0xc] sm:$0xf]
    %v195 = vld [vmem:[#allocation7 + $0x10] sm:$0xf]
    %v196 = vld [vmem:[#allocation7 + $0x14] sm:$0xf]
    %v197 = vld [vmem:[#allocation7 + $0x18] sm:$0xf]
    %v198 = vld [vmem:[#allocation7 + $0x1c] sm:$0xf]
    %v199 = vld [vmem:[#allocation7 + $0x20] sm:$0xf]
    %v200 = vld [vmem:[#allocation7 + $0x24] sm:$0xf]
    %v201 = vld [vmem:[#allocation7 + $0x28] sm:$0xf]
    %v202 = vld [vmem:[#allocation7 + $0x2c] sm:$0xf]
    %v203 = vld [vmem:[#allocation7 + $0x30] sm:$0xf]
    %v204 = vld [vmem:[#allocation7 + $0x34] sm:$0xf]
    %v205 = vld [vmem:[#allocation7 + $0x38] sm:$0xf]
    %v206 = vld [vmem:[#allocation7 + $0x3c] sm:$0xf]
    %v207 = vlaneseq
    %v208 = vshrl.u32 %v207, 7
    %v209 = vsub.s32 0, %v208
    %v210 = vrot.slane %v77, %v209
    %v227 = vunpack.c.l.b16 %v191
    %v228 = vunpack.c.l.b16 %v192
    %v229 = vunpack.c.l.b16 %v193
    %v230 = vunpack.c.l.b16 %v194
    %v231 = vunpack.c.l.b16 %v195
    %v232 = vunpack.c.l.b16 %v196
    %v233 = vunpack.c.l.b16 %v197
    %v234 = vunpack.c.l.b16 %v198
    %v235 = vunpack.c.l.b16 %v199
    %v236 = vunpack.c.l.b16 %v200
    %v237 = vunpack.c.l.b16 %v201
    %v238 = vunpack.c.l.b16 %v202
    %v239 = vunpack.c.l.b16 %v203
    %v240 = vunpack.c.l.b16 %v204
    %v241 = vunpack.c.l.b16 %v205
    %v242 = vunpack.c.l.b16 %v206
    %v243 = vpack.c.b16 %v228, %v227
    %v244 = vpack.c.b16 %v230, %v229
    %v245 = vpack.c.b16 %v232, %v231
    %v246 = vpack.c.b16 %v234, %v233
    %v247 = vpack.c.b16 %v236, %v235
    %v248 = vpack.c.b16 %v238, %v237
    %v249 = vpack.c.b16 %v240, %v239
    %v250 = vpack.c.b16 %v242, %v241
    %259 = vmatprep.subr.bf16.mxu0 0
    %260 = vmatpush1.bf16.msra.mxu0 %v250
    %261 = vmatprep.subr.bf16.mxu0 0
    %262 = vmatpush1.bf16.msra.mxu0 %v249
    %263 = vmatprep.subr.bf16.mxu0 0
    %264 = vmatpush1.bf16.msra.mxu0 %v248
    %265 = vmatprep.subr.bf16.mxu0 0
    %266 = vmatpush1.bf16.msra.mxu0 %v247
    %267 = vmatprep.subr.bf16.mxu0 0
    %268 = vmatpush1.bf16.msra.mxu0 %v246
    %269 = vmatprep.subr.bf16.mxu0 0
    %270 = vmatpush1.bf16.msra.mxu0 %v245
    %271 = vmatprep.subr.bf16.mxu0 0
    %272 = vmatpush1.bf16.msra.mxu0 %v244
    %273 = vmatprep.subr.bf16.mxu0 0
    %274 = vmatpush1.bf16.msra.mxu0 %v243
    %275 = vmatprep.subr.bf16.mxu0 0
    %276 = vmatpush2.bf16.msra.mxu0 0
    %277 = vmatprep.subr.bf16.mxu0 0
    %278 = vmatpush2.bf16.msra.mxu0 0
    %279 = vmatprep.subr.bf16.mxu0 0
    %280 = vmatpush2.bf16.msra.mxu0 0
    %281 = vmatprep.subr.bf16.mxu0 0
    %282 = vmatpush2.bf16.msra.mxu0 0
    %283 = vmatprep.subr.bf16.mxu0 0
    %284 = vmatpush2.bf16.msra.mxu0 0
    %285 = vmatprep.subr.bf16.mxu0 0
    %286 = vmatpush2.bf16.msra.mxu0 0
    %287 = vmatprep.subr.bf16.mxu0 0
    %288 = vmatpush2.bf16.msra.mxu0 0
    %289 = vmatprep.subr.bf16.mxu0 0
    %290 = vmatpush2.bf16.msra.mxu0 0
    %291 = vmatprep.mubr.bf16.mxu0 0
    %292 = vmatmul.mubr.bf16.gmra.mxu0 %v183
    %v293 = vpop.f32.mrf.mxu0
    %v294 = vadd.f32 %v210, %v293
    %v295 = vpop.f32.mrf.mxu0
    %v296 = vpop.f32.mrf.mxu0
    %v297 = vadd.f32 %v210, %v296
    %v298 = vpop.f32.mrf.mxu0
    %299 = vmatprep.mubr.bf16.mxu0 0
    %300 = vmatmul.mubr.bf16.gmra.mxu0 %v184
    %v301 = vpop.f32.mrf.mxu0
    %v302 = vadd.f32 %v210, %v301
    %v303 = vpop.f32.mrf.mxu0
    %v304 = vpop.f32.mrf.mxu0
    %v305 = vadd.f32 %v210, %v304
    %v306 = vpop.f32.mrf.mxu0
    %307 = vmatprep.mubr.bf16.mxu0 0
    %308 = vmatmul.mubr.bf16.gmra.mxu0 %v185
    %v309 = vpop.f32.mrf.mxu0
    %v310 = vadd.f32 %v210, %v309
    %v311 = vpop.f32.mrf.mxu0
    %v312 = vpop.f32.mrf.mxu0
    %v313 = vadd.f32 %v210, %v312
    %v314 = vpop.f32.mrf.mxu0
    %315 = vmatprep.mubr.bf16.mxu0 0
    %316 = vmatmul.mubr.bf16.gmra.mxu0 %v186
    %v317 = vpop.f32.mrf.mxu0
    %v318 = vadd.f32 %v210, %v317
    %v319 = vpop.f32.mrf.mxu0
    %v320 = vpop.f32.mrf.mxu0
    %v321 = vadd.f32 %v210, %v320
    %v322 = vpop.f32.mrf.mxu0
    %323 = vmatprep.mubr.bf16.mxu0 0
    %324 = vmatmul.mubr.bf16.gmra.mxu0 %v187
    %v325 = vpop.f32.mrf.mxu0
    %v326 = vadd.f32 %v210, %v325
    %v327 = vpop.f32.mrf.mxu0
    %v328 = vpop.f32.mrf.mxu0
    %v329 = vadd.f32 %v210, %v328
    %v330 = vpop.f32.mrf.mxu0
    %331 = vmatprep.mubr.bf16.mxu0 0
    %332 = vmatmul.mubr.bf16.gmra.mxu0 %v188
    %v333 = vpop.f32.mrf.mxu0
    %v334 = vadd.f32 %v210, %v333
    %v335 = vpop.f32.mrf.mxu0
    %v336 = vpop.f32.mrf.mxu0
    %v337 = vadd.f32 %v210, %v336
    %v338 = vpop.f32.mrf.mxu0
    %339 = vmatprep.mubr.bf16.mxu0 0
    %340 = vmatmul.mubr.bf16.gmra.mxu0 %v189
    %v341 = vpop.f32.mrf.mxu0
    %v342 = vadd.f32 %v210, %v341
    %v343 = vpop.f32.mrf.mxu0
    %v344 = vpop.f32.mrf.mxu0
    %v345 = vadd.f32 %v210, %v344
    %v346 = vpop.f32.mrf.mxu0
    %347 = vmatprep.mubr.bf16.mxu0 0
    %348 = vmatmul.mubr.bf16.gmra.mxu0 %v190
    %v349 = vpop.f32.mrf.mxu0
    %v350 = vadd.f32 %v210, %v349
    %v351 = vpop.f32.mrf.mxu0
    %v352 = vpop.f32.mrf.mxu0
    %v353 = vadd.f32 %v210, %v352
    %v354 = vpop.f32.mrf.mxu0
    %355 = vdwg.mxu0
    %v356 = vxor.u32 %v294, 2147483648
    %v357 = vxor.u32 %v297, 2147483648
    %v358 = vxor.u32 %v302, 2147483648
    %v359 = vxor.u32 %v305, 2147483648
    %v360 = vxor.u32 %v310, 2147483648
    %v361 = vxor.u32 %v313, 2147483648
    %v362 = vxor.u32 %v318, 2147483648
    %v363 = vxor.u32 %v321, 2147483648
    %v364 = vxor.u32 %v326, 2147483648
    %v365 = vxor.u32 %v329, 2147483648
    %v366 = vxor.u32 %v334, 2147483648
    %v367 = vxor.u32 %v337, 2147483648
    %v368 = vxor.u32 %v342, 2147483648
    %v369 = vxor.u32 %v345, 2147483648
    %v370 = vxor.u32 %v350, 2147483648
    %v371 = vxor.u32 %v353, 2147483648
    %v372 = vmul.f32 %v356, 1.442695
    %v373 = vpow.pop %v372
    %v374 = vmul.f32 %v357, 1.442695
    %v375 = vpow.pop %v374
    %v376 = vmul.f32 %v358, 1.442695
    %v377 = vpow.pop %v376
    %v378 = vmul.f32 %v359, 1.442695
    %v379 = vpow.pop %v378
    %v380 = vmul.f32 %v360, 1.442695
    %v381 = vpow.pop %v380
    %v382 = vmul.f32 %v361, 1.442695
    %v383 = vpow.pop %v382
    %v384 = vmul.f32 %v362, 1.442695
    %v385 = vpow.pop %v384
    %v386 = vmul.f32 %v363, 1.442695
    %v387 = vpow.pop %v386
    %v388 = vmul.f32 %v364, 1.442695
    %v389 = vpow.pop %v388
    %v390 = vmul.f32 %v365, 1.442695
    %v391 = vpow.pop %v390
    %v392 = vmul.f32 %v366, 1.442695
    %v393 = vpow.pop %v392
    %v394 = vmul.f32 %v367, 1.442695
    %v395 = vpow.pop %v394
    %v396 = vmul.f32 %v368, 1.442695
    %v397 = vpow.pop %v396
    %v398 = vmul.f32 %v369, 1.442695
    %v399 = vpow.pop %v398
    %v400 = vmul.f32 %v370, 1.442695
    %v401 = vpow.pop %v400
    %v402 = vmul.f32 %v371, 1.442695
    %v403 = vpow.pop %v402
    %v404 = vadd.f32 %v373, 1.0
    %v405 = vadd.f32 %v375, 1.0
    %v406 = vadd.f32 %v377, 1.0
    %v407 = vadd.f32 %v379, 1.0
    %v408 = vadd.f32 %v381, 1.0
    %v409 = vadd.f32 %v383, 1.0
    %v410 = vadd.f32 %v385, 1.0
    %v411 = vadd.f32 %v387, 1.0
    %v412 = vadd.f32 %v389, 1.0
    %v413 = vadd.f32 %v391, 1.0
    %v414 = vadd.f32 %v393, 1.0
    %v415 = vadd.f32 %v395, 1.0
    %v416 = vadd.f32 %v397, 1.0
    %v417 = vadd.f32 %v399, 1.0
    %v418 = vadd.f32 %v401, 1.0
    %v419 = vadd.f32 %v403, 1.0
    %v420 = vrcp.pop %v404
    %v421 = vmul.f32 1.0, %v420
    %v422 = vrcp.pop %v405
    %v423 = vmul.f32 1.0, %v422
    %v424 = vrcp.pop %v406
    %v425 = vmul.f32 1.0, %v424
    %v426 = vrcp.pop %v407
    %v427 = vmul.f32 1.0, %v426
    %v428 = vrcp.pop %v408
    %v429 = vmul.f32 1.0, %v428
    %v430 = vrcp.pop %v409
    %v431 = vmul.f32 1.0, %v430
    %v432 = vrcp.pop %v410
    %v433 = vmul.f32 1.0, %v432
    %v434 = vrcp.pop %v411
    %v435 = vmul.f32 1.0, %v434
    %v436 = vrcp.pop %v412
    %v437 = vmul.f32 1.0, %v436
    %v438 = vrcp.pop %v413
    %v439 = vmul.f32 1.0, %v438
    %v440 = vrcp.pop %v414
    %v441 = vmul.f32 1.0, %v440
    %v442 = vrcp.pop %v415
    %v443 = vmul.f32 1.0, %v442
    %v444 = vrcp.pop %v416
    %v445 = vmul.f32 1.0, %v444
    %v446 = vrcp.pop %v417
    %v447 = vmul.f32 1.0, %v446
    %v448 = vrcp.pop %v418
    %v449 = vmul.f32 1.0, %v448
    %v450 = vrcp.pop %v419
    %v451 = vmul.f32 1.0, %v450
    %v452 = vmul.f32 %v294, %v421
    %v453 = vmul.f32 %v297, %v423
    %v454 = vmul.f32 %v302, %v425
    %v455 = vmul.f32 %v305, %v427
    %v456 = vmul.f32 %v310, %v429
    %v457 = vmul.f32 %v313, %v431
    %v458 = vmul.f32 %v318, %v433
    %v459 = vmul.f32 %v321, %v435
    %v460 = vmul.f32 %v326, %v437
    %v461 = vmul.f32 %v329, %v439
    %v462 = vmul.f32 %v334, %v441
    %v463 = vmul.f32 %v337, %v443
    %v464 = vmul.f32 %v342, %v445
    %v465 = vmul.f32 %v345, %v447
    %v466 = vmul.f32 %v350, %v449
    %v467 = vmul.f32 %v353, %v451
    %s468 = scalar_lea.vmem [#allocation2], 32
    %469 = vst [vmem:[%s468 + $0x8] sm:$0xff] %v452
    %470 = vst [vmem:[%s468 + $0x10] sm:$0xff] %v453
    %471 = vst [vmem:[%s468 + $0x28] sm:$0xff] %v454
    %472 = vst [vmem:[%s468 + $0x30] sm:$0xff] %v455
    %473 = vst [vmem:[%s468 + $0x48] sm:$0xff] %v456
    %474 = vst [vmem:[%s468 + $0x50] sm:$0xff] %v457
    %475 = vst [vmem:[%s468 + $0x68] sm:$0xff] %v458
    %476 = vst [vmem:[%s468 + $0x70] sm:$0xff] %v459
    %477 = vst [vmem:[%s468 + $0x248] sm:$0xff] %v460
    %478 = vst [vmem:[%s468 + $0x250] sm:$0xff] %v461
    %479 = vst [vmem:[%s468 + $0x268] sm:$0xff] %v462
    %480 = vst [vmem:[%s468 + $0x270] sm:$0xff] %v463
    %481 = vst [vmem:[%s468 + $0x288] sm:$0xff] %v464
    %482 = vst [vmem:[%s468 + $0x290] sm:$0xff] %v465
    %483 = vst [vmem:[%s468 + $0x2a8] sm:$0xff] %v466
    %484 = vst [vmem:[%s468 + $0x2b0] sm:$0xff] %v467
    %s485 = scalar_lea.vmem [#allocation4], 64
    %v486 = vld [vmem:[%s485] sm:$0xff]
    %v487 = vld [vmem:[%s485 + $0x8] sm:$0xff]
    %v488 = vld [vmem:[%s485 + $0x10] sm:$0xff]
    %v489 = vld [vmem:[%s485 + $0x18] sm:$0xff]
    %v490 = vld [vmem:[%s485 + $0x20] sm:$0xff]
    %v491 = vld [vmem:[%s485 + $0x28] sm:$0xff]
    %v492 = vld [vmem:[%s485 + $0x30] sm:$0xff]
    %v493 = vld [vmem:[%s485 + $0x38] sm:$0xff]
    %v494 = vld [vmem:[%s485 + $0x100] sm:$0xff]
    %v495 = vld [vmem:[%s485 + $0x108] sm:$0xff]
    %v496 = vld [vmem:[%s485 + $0x110] sm:$0xff]
    %v497 = vld [vmem:[%s485 + $0x118] sm:$0xff]
    %v498 = vld [vmem:[%s485 + $0x120] sm:$0xff]
    %v499 = vld [vmem:[%s485 + $0x128] sm:$0xff]
    %v500 = vld [vmem:[%s485 + $0x130] sm:$0xff]
    %v501 = vld [vmem:[%s485 + $0x138] sm:$0xff]
    %v502 = vpack.c.bf16 %v487, %v486
    %v503 = vpack.c.bf16 %v489, %v488
    %v504 = vpack.c.bf16 %v491, %v490
    %v505 = vpack.c.bf16 %v493, %v492
    %v506 = vpack.c.bf16 %v495, %v494
    %v507 = vpack.c.bf16 %v497, %v496
    %v508 = vpack.c.bf16 %v499, %v498
    %v509 = vpack.c.bf16 %v501, %v500
    %v510 = vld [vmem:[#allocation7] sm:$0xf]
    %v511 = vld [vmem:[#allocation7 + $0x4] sm:$0xf]
    %v512 = vld [vmem:[#allocation7 + $0x8] sm:$0xf]
    %v513 = vld [vmem:[#allocation7 + $0xc] sm:$0xf]
    %v514 = vld [vmem:[#allocation7 + $0x10] sm:$0xf]
    %v515 = vld [vmem:[#allocation7 + $0x14] sm:$0xf]
    %v516 = vld [vmem:[#allocation7 + $0x18] sm:$0xf]
    %v517 = vld [vmem:[#allocation7 + $0x1c] sm:$0xf]
    %v518 = vld [vmem:[#allocation7 + $0x20] sm:$0xf]
    %v519 = vld [vmem:[#allocation7 + $0x24] sm:$0xf]
    %v520 = vld [vmem:[#allocation7 + $0x28] sm:$0xf]
    %v521 = vld [vmem:[#allocation7 + $0x2c] sm:$0xf]
    %v522 = vld [vmem:[#allocation7 + $0x30] sm:$0xf]
    %v523 = vld [vmem:[#allocation7 + $0x34] sm:$0xf]
    %v524 = vld [vmem:[#allocation7 + $0x38] sm:$0xf]
    %v525 = vld [vmem:[#allocation7 + $0x3c] sm:$0xf]
    %v542 = vunpack.c.l.b16 %v510
    %v543 = vunpack.c.l.b16 %v511
    %v544 = vunpack.c.l.b16 %v512
    %v545 = vunpack.c.l.b16 %v513
    %v546 = vunpack.c.l.b16 %v514
    %v547 = vunpack.c.l.b16 %v515
    %v548 = vunpack.c.l.b16 %v516
    %v549 = vunpack.c.l.b16 %v517
    %v550 = vunpack.c.l.b16 %v518
    %v551 = vunpack.c.l.b16 %v519
    %v552 = vunpack.c.l.b16 %v520
    %v553 = vunpack.c.l.b16 %v521
    %v554 = vunpack.c.l.b16 %v522
    %v555 = vunpack.c.l.b16 %v523
    %v556 = vunpack.c.l.b16 %v524
    %v557 = vunpack.c.l.b16 %v525
    %v558 = vpack.c.b16 %v543, %v542
    %v559 = vpack.c.b16 %v545, %v544
    %v560 = vpack.c.b16 %v547, %v546
    %v561 = vpack.c.b16 %v549, %v548
    %v562 = vpack.c.b16 %v551, %v550
    %v563 = vpack.c.b16 %v553, %v552
    %v564 = vpack.c.b16 %v555, %v554
    %v565 = vpack.c.b16 %v557, %v556
    %574 = vmatprep.subr.bf16.mxu0 0
    %575 = vmatpush1.bf16.msra.mxu0 %v565
    %576 = vmatprep.subr.bf16.mxu0 0
    %577 = vmatpush1.bf16.msra.mxu0 %v564
    %578 = vmatprep.subr.bf16.mxu0 0
    %579 = vmatpush1.bf16.msra.mxu0 %v563
    %580 = vmatprep.subr.bf16.mxu0 0
    %581 = vmatpush1.bf16.msra.mxu0 %v562
    %582 = vmatprep.subr.bf16.mxu0 0
    %583 = vmatpush1.bf16.msra.mxu0 %v561
    %584 = vmatprep.subr.bf16.mxu0 0
    %585 = vmatpush1.bf16.msra.mxu0 %v560
    %586 = vmatprep.subr.bf16.mxu0 0
    %587 = vmatpush1.bf16.msra.mxu0 %v559
    %588 = vmatprep.subr.bf16.mxu0 0
    %589 = vmatpush1.bf16.msra.mxu0 %v558
    %590 = vmatprep.subr.bf16.mxu0 0
    %591 = vmatpush2.bf16.msra.mxu0 0
    %592 = vmatprep.subr.bf16.mxu0 0
    %593 = vmatpush2.bf16.msra.mxu0 0
    %594 = vmatprep.subr.bf16.mxu0 0
    %595 = vmatpush2.bf16.msra.mxu0 0
    %596 = vmatprep.subr.bf16.mxu0 0
    %597 = vmatpush2.bf16.msra.mxu0 0
    %598 = vmatprep.subr.bf16.mxu0 0
    %599 = vmatpush2.bf16.msra.mxu0 0
    %600 = vmatprep.subr.bf16.mxu0 0
    %601 = vmatpush2.bf16.msra.mxu0 0
    %602 = vmatprep.subr.bf16.mxu0 0
    %603 = vmatpush2.bf16.msra.mxu0 0
    %604 = vmatprep.subr.bf16.mxu0 0
    %605 = vmatpush2.bf16.msra.mxu0 0
    %606 = vmatprep.mubr.bf16.mxu0 0
    %607 = vmatmul.mubr.bf16.gmra.mxu0 %v502
    %v608 = vpop.f32.mrf.mxu0
    %v609 = vadd.f32 %v210, %v608
    %v610 = vpop.f32.mrf.mxu0
    %v611 = vpop.f32.mrf.mxu0
    %v612 = vadd.f32 %v210, %v611
    %v613 = vpop.f32.mrf.mxu0
    %614 = vmatprep.mubr.bf16.mxu0 0
    %615 = vmatmul.mubr.bf16.gmra.mxu0 %v503
    %v616 = vpop.f32.mrf.mxu0
    %v617 = vadd.f32 %v210, %v616
    %v618 = vpop.f32.mrf.mxu0
    %v619 = vpop.f32.mrf.mxu0
    %v620 = vadd.f32 %v210, %v619
    %v621 = vpop.f32.mrf.mxu0
    %622 = vmatprep.mubr.bf16.mxu0 0
    %623 = vmatmul.mubr.bf16.gmra.mxu0 %v504
    %v624 = vpop.f32.mrf.mxu0
    %v625 = vadd.f32 %v210, %v624
    %v626 = vpop.f32.mrf.mxu0
    %v627 = vpop.f32.mrf.mxu0
    %v628 = vadd.f32 %v210, %v627
    %v629 = vpop.f32.mrf.mxu0
    %630 = vmatprep.mubr.bf16.mxu0 0
    %631 = vmatmul.mubr.bf16.gmra.mxu0 %v505
    %v632 = vpop.f32.mrf.mxu0
    %v633 = vadd.f32 %v210, %v632
    %v634 = vpop.f32.mrf.mxu0
    %v635 = vpop.f32.mrf.mxu0
    %v636 = vadd.f32 %v210, %v635
    %v637 = vpop.f32.mrf.mxu0
    %638 = vmatprep.mubr.bf16.mxu0 0
    %639 = vmatmul.mubr.bf16.gmra.mxu0 %v506
    %v640 = vpop.f32.mrf.mxu0
    %v641 = vadd.f32 %v210, %v640
    %v642 = vpop.f32.mrf.mxu0
    %v643 = vpop.f32.mrf.mxu0
    %v644 = vadd.f32 %v210, %v643
    %v645 = vpop.f32.mrf.mxu0
    %646 = vmatprep.mubr.bf16.mxu0 0
    %647 = vmatmul.mubr.bf16.gmra.mxu0 %v507
    %v648 = vpop.f32.mrf.mxu0
    %v649 = vadd.f32 %v210, %v648
    %v650 = vpop.f32.mrf.mxu0
    %v651 = vpop.f32.mrf.mxu0
    %v652 = vadd.f32 %v210, %v651
    %v653 = vpop.f32.mrf.mxu0
    %654 = vmatprep.mubr.bf16.mxu0 0
    %655 = vmatmul.mubr.bf16.gmra.mxu0 %v508
    %v656 = vpop.f32.mrf.mxu0
    %v657 = vadd.f32 %v210, %v656
    %v658 = vpop.f32.mrf.mxu0
    %v659 = vpop.f32.mrf.mxu0
    %v660 = vadd.f32 %v210, %v659
    %v661 = vpop.f32.mrf.mxu0
    %662 = vmatprep.mubr.bf16.mxu0 0
    %663 = vmatmul.mubr.bf16.gmra.mxu0 %v509
    %v664 = vpop.f32.mrf.mxu0
    %v665 = vadd.f32 %v210, %v664
    %v666 = vpop.f32.mrf.mxu0
    %v667 = vpop.f32.mrf.mxu0
    %v668 = vadd.f32 %v210, %v667
    %v669 = vpop.f32.mrf.mxu0
    %670 = vdwg.mxu0
    %v671 = vxor.u32 %v609, 2147483648
    %v672 = vxor.u32 %v612, 2147483648
    %v673 = vxor.u32 %v617, 2147483648
    %v674 = vxor.u32 %v620, 2147483648
    %v675 = vxor.u32 %v625, 2147483648
    %v676 = vxor.u32 %v628, 2147483648
    %v677 = vxor.u32 %v633, 2147483648
    %v678 = vxor.u32 %v636, 2147483648
    %v679 = vxor.u32 %v641, 2147483648
    %v680 = vxor.u32 %v644, 2147483648
    %v681 = vxor.u32 %v649, 2147483648
    %v682 = vxor.u32 %v652, 2147483648
    %v683 = vxor.u32 %v657, 2147483648
    %v684 = vxor.u32 %v660, 2147483648
    %v685 = vxor.u32 %v665, 2147483648
    %v686 = vxor.u32 %v668, 2147483648
    %v687 = vmul.f32 %v671, 1.442695
    %v688 = vpow.pop %v687
    %v689 = vmul.f32 %v672, 1.442695
    %v690 = vpow.pop %v689
    %v691 = vmul.f32 %v673, 1.442695
    %v692 = vpow.pop %v691
    %v693 = vmul.f32 %v674, 1.442695
    %v694 = vpow.pop %v693
    %v695 = vmul.f32 %v675, 1.442695
    %v696 = vpow.pop %v695
    %v697 = vmul.f32 %v676, 1.442695
    %v698 = vpow.pop %v697
    %v699 = vmul.f32 %v677, 1.442695
    %v700 = vpow.pop %v699
    %v701 = vmul.f32 %v678, 1.442695
    %v702 = vpow.pop %v701
    %v703 = vmul.f32 %v679, 1.442695
    %v704 = vpow.pop %v703
    %v705 = vmul.f32 %v680, 1.442695
    %v706 = vpow.pop %v705
    %v707 = vmul.f32 %v681, 1.442695
    %v708 = vpow.pop %v707
    %v709 = vmul.f32 %v682, 1.442695
    %v710 = vpow.pop %v709
    %v711 = vmul.f32 %v683, 1.442695
    %v712 = vpow.pop %v711
    %v713 = vmul.f32 %v684, 1.442695
    %v714 = vpow.pop %v713
    %v715 = vmul.f32 %v685, 1.442695
    %v716 = vpow.pop %v715
    %v717 = vmul.f32 %v686, 1.442695
    %v718 = vpow.pop %v717
    %v719 = vadd.f32 %v688, 1.0
    %v720 = vadd.f32 %v690, 1.0
    %v721 = vadd.f32 %v692, 1.0
    %v722 = vadd.f32 %v694, 1.0
    %v723 = vadd.f32 %v696, 1.0
    %v724 = vadd.f32 %v698, 1.0
    %v725 = vadd.f32 %v700, 1.0
    %v726 = vadd.f32 %v702, 1.0
    %v727 = vadd.f32 %v704, 1.0
    %v728 = vadd.f32 %v706, 1.0
    %v729 = vadd.f32 %v708, 1.0
    %v730 = vadd.f32 %v710, 1.0
    %v731 = vadd.f32 %v712, 1.0
    %v732 = vadd.f32 %v714, 1.0
    %v733 = vadd.f32 %v716, 1.0
    %v734 = vadd.f32 %v718, 1.0
    %v735 = vrcp.pop %v719
    %v736 = vmul.f32 1.0, %v735
    %v737 = vrcp.pop %v720
    %v738 = vmul.f32 1.0, %v737
    %v739 = vrcp.pop %v721
    %v740 = vmul.f32 1.0, %v739
    %v741 = vrcp.pop %v722
    %v742 = vmul.f32 1.0, %v741
    %v743 = vrcp.pop %v723
    %v744 = vmul.f32 1.0, %v743
    %v745 = vrcp.pop %v724
    %v746 = vmul.f32 1.0, %v745
    %v747 = vrcp.pop %v725
    %v748 = vmul.f32 1.0, %v747
    %v749 = vrcp.pop %v726
    %v750 = vmul.f32 1.0, %v749
    %v751 = vrcp.pop %v727
    %v752 = vmul.f32 1.0, %v751
    %v753 = vrcp.pop %v728
    %v754 = vmul.f32 1.0, %v753
    %v755 = vrcp.pop %v729
    %v756 = vmul.f32 1.0, %v755
    %v757 = vrcp.pop %v730
    %v758 = vmul.f32 1.0, %v757
    %v759 = vrcp.pop %v731
    %v760 = vmul.f32 1.0, %v759
    %v761 = vrcp.pop %v732
    %v762 = vmul.f32 1.0, %v761
    %v763 = vrcp.pop %v733
    %v764 = vmul.f32 1.0, %v763
    %v765 = vrcp.pop %v734
    %v766 = vmul.f32 1.0, %v765
    %v767 = vmul.f32 %v609, %v736
    %v768 = vmul.f32 %v612, %v738
    %v769 = vmul.f32 %v617, %v740
    %v770 = vmul.f32 %v620, %v742
    %v771 = vmul.f32 %v625, %v744
    %v772 = vmul.f32 %v628, %v746
    %v773 = vmul.f32 %v633, %v748
    %v774 = vmul.f32 %v636, %v750
    %v775 = vmul.f32 %v641, %v752
    %v776 = vmul.f32 %v644, %v754
    %v777 = vmul.f32 %v649, %v756
    %v778 = vmul.f32 %v652, %v758
    %v779 = vmul.f32 %v657, %v760
    %v780 = vmul.f32 %v660, %v762
    %v781 = vmul.f32 %v665, %v764
    %v782 = vmul.f32 %v668, %v766
    %s783 = scalar_lea.vmem [#allocation2], 160
    %784 = vst [vmem:[%s783 + $0x8] sm:$0xff] %v767
    %785 = vst [vmem:[%s783 + $0x10] sm:$0xff] %v768
    %786 = vst [vmem:[%s783 + $0x28] sm:$0xff] %v769
    %787 = vst [vmem:[%s783 + $0x30] sm:$0xff] %v770
    %788 = vst [vmem:[%s783 + $0x48] sm:$0xff] %v771
    %789 = vst [vmem:[%s783 + $0x50] sm:$0xff] %v772
    %790 = vst [vmem:[%s783 + $0x68] sm:$0xff] %v773
    %791 = vst [vmem:[%s783 + $0x70] sm:$0xff] %v774
    %792 = vst [vmem:[%s783 + $0x248] sm:$0xff] %v775
    %793 = vst [vmem:[%s783 + $0x250] sm:$0xff] %v776
    %794 = vst [vmem:[%s783 + $0x268] sm:$0xff] %v777
    %795 = vst [vmem:[%s783 + $0x270] sm:$0xff] %v778
    %796 = vst [vmem:[%s783 + $0x288] sm:$0xff] %v779
    %797 = vst [vmem:[%s783 + $0x290] sm:$0xff] %v780
    %798 = vst [vmem:[%s783 + $0x2a8] sm:$0xff] %v781
    %799 = vst [vmem:[%s783 + $0x2b0] sm:$0xff] %v782
    %s800 = scalar_lea.vmem [#allocation4], 128
    %v801 = vld [vmem:[%s800] sm:$0xff]
    %v802 = vld [vmem:[%s800 + $0x8] sm:$0xff]
    %v803 = vld [vmem:[%s800 + $0x10] sm:$0xff]
    %v804 = vld [vmem:[%s800 + $0x18] sm:$0xff]
    %v805 = vld [vmem:[%s800 + $0x20] sm:$0xff]
    %v806 = vld [vmem:[%s800 + $0x28] sm:$0xff]
    %v807 = vld [vmem:[%s800 + $0x30] sm:$0xff]
    %v808 = vld [vmem:[%s800 + $0x38] sm:$0xff]
    %v809 = vld [vmem:[%s800 + $0x100] sm:$0xff]
    %v810 = vld [vmem:[%s800 + $0x108] sm:$0xff]
    %v811 = vld [vmem:[%s800 + $0x110] sm:$0xff]
    %v812 = vld [vmem:[%s800 + $0x118] sm:$0xff]
    %v813 = vld [vmem:[%s800 + $0x120] sm:$0xff]
    %v814 = vld [vmem:[%s800 + $0x128] sm:$0xff]
    %v815 = vld [vmem:[%s800 + $0x130] sm:$0xff]
    %v816 = vld [vmem:[%s800 + $0x138] sm:$0xff]
    %v817 = vpack.c.bf16 %v802, %v801
    %v818 = vpack.c.bf16 %v804, %v803
    %v819 = vpack.c.bf16 %v806, %v805
    %v820 = vpack.c.bf16 %v808, %v807
    %v821 = vpack.c.bf16 %v810, %v809
    %v822 = vpack.c.bf16 %v812, %v811
    %v823 = vpack.c.bf16 %v814, %v813
    %v824 = vpack.c.bf16 %v816, %v815
    %v825 = vld [vmem:[#allocation7] sm:$0xf]
    %v826 = vld [vmem:[#allocation7 + $0x4] sm:$0xf]
    %v827 = vld [vmem:[#allocation7 + $0x8] sm:$0xf]
    %v828 = vld [vmem:[#allocation7 + $0xc] sm:$0xf]
    %v829 = vld [vmem:[#allocation7 + $0x10] sm:$0xf]
    %v830 = vld [vmem:[#allocation7 + $0x14] sm:$0xf]
    %v831 = vld [vmem:[#allocation7 + $0x18] sm:$0xf]
    %v832 = vld [vmem:[#allocation7 + $0x1c] sm:$0xf]
    %v833 = vld [vmem:[#allocation7 + $0x20] sm:$0xf]
    %v834 = vld [vmem:[#allocation7 + $0x24] sm:$0xf]
    %v835 = vld [vmem:[#allocation7 + $0x28] sm:$0xf]
    %v836 = vld [vmem:[#allocation7 + $0x2c] sm:$0xf]
    %v837 = vld [vmem:[#allocation7 + $0x30] sm:$0xf]
    %v838 = vld [vmem:[#allocation7 + $0x34] sm:$0xf]
    %v839 = vld [vmem:[#allocation7 + $0x38] sm:$0xf]
    %v840 = vld [vmem:[#allocation7 + $0x3c] sm:$0xf]
    %v857 = vunpack.c.l.b16 %v825
    %v858 = vunpack.c.l.b16 %v826
    %v859 = vunpack.c.l.b16 %v827
    %v860 = vunpack.c.l.b16 %v828
    %v861 = vunpack.c.l.b16 %v829
    %v862 = vunpack.c.l.b16 %v830
    %v863 = vunpack.c.l.b16 %v831
    %v864 = vunpack.c.l.b16 %v832
    %v865 = vunpack.c.l.b16 %v833
    %v866 = vunpack.c.l.b16 %v834
    %v867 = vunpack.c.l.b16 %v835
    %v868 = vunpack.c.l.b16 %v836
    %v869 = vunpack.c.l.b16 %v837
    %v870 = vunpack.c.l.b16 %v838
    %v871 = vunpack.c.l.b16 %v839
    %v872 = vunpack.c.l.b16 %v840
    %v873 = vpack.c.b16 %v858, %v857
    %v874 = vpack.c.b16 %v860, %v859
    %v875 = vpack.c.b16 %v862, %v861
    %v876 = vpack.c.b16 %v864, %v863
    %v877 = vpack.c.b16 %v866, %v865
    %v878 = vpack.c.b16 %v868, %v867
    %v879 = vpack.c.b16 %v870, %v869
    %v880 = vpack.c.b16 %v872, %v871
    %889 = vmatprep.subr.bf16.mxu0 0
    %890 = vmatpush1.bf16.msra.mxu0 %v880
    %891 = vmatprep.subr.bf16.mxu0 0
    %892 = vmatpush1.bf16.msra.mxu0 %v879
    %893 = vmatprep.subr.bf16.mxu0 0
    %894 = vmatpush1.bf16.msra.mxu0 %v878
    %895 = vmatprep.subr.bf16.mxu0 0
    %896 = vmatpush1.bf16.msra.mxu0 %v877
    %897 = vmatprep.subr.bf16.mxu0 0
    %898 = vmatpush1.bf16.msra.mxu0 %v876
    %899 = vmatprep.subr.bf16.mxu0 0
    %900 = vmatpush1.bf16.msra.mxu0 %v875
    %901 = vmatprep.subr.bf16.mxu0 0
    %902 = vmatpush1.bf16.msra.mxu0 %v874
    %903 = vmatprep.subr.bf16.mxu0 0
    %904 = vmatpush1.bf16.msra.mxu0 %v873
    %905 = vmatprep.subr.bf16.mxu0 0
    %906 = vmatpush2.bf16.msra.mxu0 0
    %907 = vmatprep.subr.bf16.mxu0 0
    %908 = vmatpush2.bf16.msra.mxu0 0
    %909 = vmatprep.subr.bf16.mxu0 0
    %910 = vmatpush2.bf16.msra.mxu0 0
    %911 = vmatprep.subr.bf16.mxu0 0
    %912 = vmatpush2.bf16.msra.mxu0 0
    %913 = vmatprep.subr.bf16.mxu0 0
    %914 = vmatpush2.bf16.msra.mxu0 0
    %915 = vmatprep.subr.bf16.mxu0 0
    %916 = vmatpush2.bf16.msra.mxu0 0
    %917 = vmatprep.subr.bf16.mxu0 0
    %918 = vmatpush2.bf16.msra.mxu0 0
    %919 = vmatprep.subr.bf16.mxu0 0
    %920 = vmatpush2.bf16.msra.mxu0 0
    %921 = vmatprep.mubr.bf16.mxu0 0
    %922 = vmatmul.mubr.bf16.gmra.mxu0 %v817
    %v923 = vpop.f32.mrf.mxu0
    %v924 = vadd.f32 %v210, %v923
    %v925 = vpop.f32.mrf.mxu0
    %v926 = vpop.f32.mrf.mxu0
    %v927 = vadd.f32 %v210, %v926
    %v928 = vpop.f32.mrf.mxu0
    %929 = vmatprep.mubr.bf16.mxu0 0
    %930 = vmatmul.mubr.bf16.gmra.mxu0 %v818
    %v931 = vpop.f32.mrf.mxu0
    %v932 = vadd.f32 %v210, %v931
    %v933 = vpop.f32.mrf.mxu0
    %v934 = vpop.f32.mrf.mxu0
    %v935 = vadd.f32 %v210, %v934
    %v936 = vpop.f32.mrf.mxu0
    %937 = vmatprep.mubr.bf16.mxu0 0
    %938 = vmatmul.mubr.bf16.gmra.mxu0 %v819
    %v939 = vpop.f32.mrf.mxu0
    %v940 = vadd.f32 %v210, %v939
    %v941 = vpop.f32.mrf.mxu0
    %v942 = vpop.f32.mrf.mxu0
    %v943 = vadd.f32 %v210, %v942
    %v944 = vpop.f32.mrf.mxu0
    %945 = vmatprep.mubr.bf16.mxu0 0
    %946 = vmatmul.mubr.bf16.gmra.mxu0 %v820
    %v947 = vpop.f32.mrf.mxu0
    %v948 = vadd.f32 %v210, %v947
    %v949 = vpop.f32.mrf.mxu0
    %v950 = vpop.f32.mrf.mxu0
    %v951 = vadd.f32 %v210, %v950
    %v952 = vpop.f32.mrf.mxu0
    %953 = vmatprep.mubr.bf16.mxu0 0
    %954 = vmatmul.mubr.bf16.gmra.mxu0 %v821
    %v955 = vpop.f32.mrf.mxu0
    %v956 = vadd.f32 %v210, %v955
    %v957 = vpop.f32.mrf.mxu0
    %v958 = vpop.f32.mrf.mxu0
    %v959 = vadd.f32 %v210, %v958
    %v960 = vpop.f32.mrf.mxu0
    %961 = vmatprep.mubr.bf16.mxu0 0
    %962 = vmatmul.mubr.bf16.gmra.mxu0 %v822
    %v963 = vpop.f32.mrf.mxu0
    %v964 = vadd.f32 %v210, %v963
    %v965 = vpop.f32.mrf.mxu0
    %v966 = vpop.f32.mrf.mxu0
    %v967 = vadd.f32 %v210, %v966
    %v968 = vpop.f32.mrf.mxu0
    %969 = vmatprep.mubr.bf16.mxu0 0
    %970 = vmatmul.mubr.bf16.gmra.mxu0 %v823
    %v971 = vpop.f32.mrf.mxu0
    %v972 = vadd.f32 %v210, %v971
    %v973 = vpop.f32.mrf.mxu0
    %v974 = vpop.f32.mrf.mxu0
    %v975 = vadd.f32 %v210, %v974
    %v976 = vpop.f32.mrf.mxu0
    %977 = vmatprep.mubr.bf16.mxu0 0
    %978 = vmatmul.mubr.bf16.gmra.mxu0 %v824
    %v979 = vpop.f32.mrf.mxu0
    %v980 = vadd.f32 %v210, %v979
    %v981 = vpop.f32.mrf.mxu0
    %v982 = vpop.f32.mrf.mxu0
    %v983 = vadd.f32 %v210, %v982
    %v984 = vpop.f32.mrf.mxu0
    %985 = vdwg.mxu0
    %v986 = vxor.u32 %v924, 2147483648
    %v987 = vxor.u32 %v927, 2147483648
    %v988 = vxor.u32 %v932, 2147483648
    %v989 = vxor.u32 %v935, 2147483648
    %v990 = vxor.u32 %v940, 2147483648
    %v991 = vxor.u32 %v943, 2147483648
    %v992 = vxor.u32 %v948, 2147483648
    %v993 = vxor.u32 %v951, 2147483648
    %v994 = vxor.u32 %v956, 2147483648
    %v995 = vxor.u32 %v959, 2147483648
    %v996 = vxor.u32 %v964, 2147483648
    %v997 = vxor.u32 %v967, 2147483648
    %v998 = vxor.u32 %v972, 2147483648
    %v999 = vxor.u32 %v975, 2147483648
    %v1000 = vxor.u32 %v980, 2147483648
    %v1001 = vxor.u32 %v983, 2147483648
    %v1002 = vmul.f32 %v986, 1.442695
    %v1003 = vpow.pop %v1002
    %v1004 = vmul.f32 %v987, 1.442695
    %v1005 = vpow.pop %v1004
    %v1006 = vmul.f32 %v988, 1.442695
    %v1007 = vpow.pop %v1006
    %v1008 = vmul.f32 %v989, 1.442695
    %v1009 = vpow.pop %v1008
    %v1010 = vmul.f32 %v990, 1.442695
    %v1011 = vpow.pop %v1010
    %v1012 = vmul.f32 %v991, 1.442695
    %v1013 = vpow.pop %v1012
    %v1014 = vmul.f32 %v992, 1.442695
    %v1015 = vpow.pop %v1014
    %v1016 = vmul.f32 %v993, 1.442695
    %v1017 = vpow.pop %v1016
    %v1018 = vmul.f32 %v994, 1.442695
    %v1019 = vpow.pop %v1018
    %v1020 = vmul.f32 %v995, 1.442695
    %v1021 = vpow.pop %v1020
    %v1022 = vmul.f32 %v996, 1.442695
    %v1023 = vpow.pop %v1022
    %v1024 = vmul.f32 %v997, 1.442695
    %v1025 = vpow.pop %v1024
    %v1026 = vmul.f32 %v998, 1.442695
    %v1027 = vpow.pop %v1026
    %v1028 = vmul.f32 %v999, 1.442695
    %v1029 = vpow.pop %v1028
    %v1030 = vmul.f32 %v1000, 1.442695
    %v1031 = vpow.pop %v1030
    %v1032 = vmul.f32 %v1001, 1.442695
    %v1033 = vpow.pop %v1032
    %v1034 = vadd.f32 %v1003, 1.0
    %v1035 = vadd.f32 %v1005, 1.0
    %v1036 = vadd.f32 %v1007, 1.0
    %v1037 = vadd.f32 %v1009, 1.0
    %v1038 = vadd.f32 %v1011, 1.0
    %v1039 = vadd.f32 %v1013, 1.0
    %v1040 = vadd.f32 %v1015, 1.0
    %v1041 = vadd.f32 %v1017, 1.0
    %v1042 = vadd.f32 %v1019, 1.0
    %v1043 = vadd.f32 %v1021, 1.0
    %v1044 = vadd.f32 %v1023, 1.0
    %v1045 = vadd.f32 %v1025, 1.0
    %v1046 = vadd.f32 %v1027, 1.0
    %v1047 = vadd.f32 %v1029, 1.0
    %v1048 = vadd.f32 %v1031, 1.0
    %v1049 = vadd.f32 %v1033, 1.0
    %v1050 = vrcp.pop %v1034
    %v1051 = vmul.f32 1.0, %v1050
    %v1052 = vrcp.pop %v1035
    %v1053 = vmul.f32 1.0, %v1052
    %v1054 = vrcp.pop %v1036
    %v1055 = vmul.f32 1.0, %v1054
    %v1056 = vrcp.pop %v1037
    %v1057 = vmul.f32 1.0, %v1056
    %v1058 = vrcp.pop %v1038
    %v1059 = vmul.f32 1.0, %v1058
    %v1060 = vrcp.pop %v1039
    %v1061 = vmul.f32 1.0, %v1060
    %v1062 = vrcp.pop %v1040
    %v1063 = vmul.f32 1.0, %v1062
    %v1064 = vrcp.pop %v1041
    %v1065 = vmul.f32 1.0, %v1064
    %v1066 = vrcp.pop %v1042
    %v1067 = vmul.f32 1.0, %v1066
    %v1068 = vrcp.pop %v1043
    %v1069 = vmul.f32 1.0, %v1068
    %v1070 = vrcp.pop %v1044
    %v1071 = vmul.f32 1.0, %v1070
    %v1072 = vrcp.pop %v1045
    %v1073 = vmul.f32 1.0, %v1072
    %v1074 = vrcp.pop %v1046
    %v1075 = vmul.f32 1.0, %v1074
    %v1076 = vrcp.pop %v1047
    %v1077 = vmul.f32 1.0, %v1076
    %v1078 = vrcp.pop %v1048
    %v1079 = vmul.f32 1.0, %v1078
    %v1080 = vrcp.pop %v1049
    %v1081 = vmul.f32 1.0, %v1080
    %v1082 = vmul.f32 %v924, %v1051
    %v1083 = vmul.f32 %v927, %v1053
    %v1084 = vmul.f32 %v932, %v1055
    %v1085 = vmul.f32 %v935, %v1057
    %v1086 = vmul.f32 %v940, %v1059
    %v1087 = vmul.f32 %v943, %v1061
    %v1088 = vmul.f32 %v948, %v1063
    %v1089 = vmul.f32 %v951, %v1065
    %v1090 = vmul.f32 %v956, %v1067
    %v1091 = vmul.f32 %v959, %v1069
    %v1092 = vmul.f32 %v964, %v1071
    %v1093 = vmul.f32 %v967, %v1073
    %v1094 = vmul.f32 %v972, %v1075
    %v1095 = vmul.f32 %v975, %v1077
    %v1096 = vmul.f32 %v980, %v1079
    %v1097 = vmul.f32 %v983, %v1081
    %s1098 = scalar_lea.vmem [#allocation2], 288
    %1099 = vst [vmem:[%s1098 + $0x8] sm:$0xff] %v1082
    %1100 = vst [vmem:[%s1098 + $0x10] sm:$0xff] %v1083
    %1101 = vst [vmem:[%s1098 + $0x28] sm:$0xff] %v1084
    %1102 = vst [vmem:[%s1098 + $0x30] sm:$0xff] %v1085
    %1103 = vst [vmem:[%s1098 + $0x48] sm:$0xff] %v1086
    %1104 = vst [vmem:[%s1098 + $0x50] sm:$0xff] %v1087
    %1105 = vst [vmem:[%s1098 + $0x68] sm:$0xff] %v1088
    %1106 = vst [vmem:[%s1098 + $0x70] sm:$0xff] %v1089
    %1107 = vst [vmem:[%s1098 + $0x248] sm:$0xff] %v1090
    %1108 = vst [vmem:[%s1098 + $0x250] sm:$0xff] %v1091
    %1109 = vst [vmem:[%s1098 + $0x268] sm:$0xff] %v1092
    %1110 = vst [vmem:[%s1098 + $0x270] sm:$0xff] %v1093
    %1111 = vst [vmem:[%s1098 + $0x288] sm:$0xff] %v1094
    %1112 = vst [vmem:[%s1098 + $0x290] sm:$0xff] %v1095
    %1113 = vst [vmem:[%s1098 + $0x2a8] sm:$0xff] %v1096
    %1114 = vst [vmem:[%s1098 + $0x2b0] sm:$0xff] %v1097
    %s1115 = scalar_lea.vmem [#allocation4], 192
    %v1116 = vld [vmem:[%s1115] sm:$0xff]
    %v1117 = vld [vmem:[%s1115 + $0x8] sm:$0xff]
    %v1118 = vld [vmem:[%s1115 + $0x10] sm:$0xff]
    %v1119 = vld [vmem:[%s1115 + $0x18] sm:$0xff]
    %v1120 = vld [vmem:[%s1115 + $0x20] sm:$0xff]
    %v1121 = vld [vmem:[%s1115 + $0x28] sm:$0xff]
    %v1122 = vld [vmem:[%s1115 + $0x30] sm:$0xff]
    %v1123 = vld [vmem:[%s1115 + $0x38] sm:$0xff]
    %v1124 = vld [vmem:[%s1115 + $0x100] sm:$0xff]
    %v1125 = vld [vmem:[%s1115 + $0x108] sm:$0xff]
    %v1126 = vld [vmem:[%s1115 + $0x110] sm:$0xff]
    %v1127 = vld [vmem:[%s1115 + $0x118] sm:$0xff]
    %v1128 = vld [vmem:[%s1115 + $0x120] sm:$0xff]
    %v1129 = vld [vmem:[%s1115 + $0x128] sm:$0xff]
    %v1130 = vld [vmem:[%s1115 + $0x130] sm:$0xff]
    %v1131 = vld [vmem:[%s1115 + $0x138] sm:$0xff]
    %v1132 = vpack.c.bf16 %v1117, %v1116
    %v1133 = vpack.c.bf16 %v1119, %v1118
    %v1134 = vpack.c.bf16 %v1121, %v1120
    %v1135 = vpack.c.bf16 %v1123, %v1122
    %v1136 = vpack.c.bf16 %v1125, %v1124
    %v1137 = vpack.c.bf16 %v1127, %v1126
    %v1138 = vpack.c.bf16 %v1129, %v1128
    %v1139 = vpack.c.bf16 %v1131, %v1130
    %v1140 = vld [vmem:[#allocation7] sm:$0xf]
    %v1141 = vld [vmem:[#allocation7 + $0x4] sm:$0xf]
    %v1142 = vld [vmem:[#allocation7 + $0x8] sm:$0xf]
    %v1143 = vld [vmem:[#allocation7 + $0xc] sm:$0xf]
    %v1144 = vld [vmem:[#allocation7 + $0x10] sm:$0xf]
    %v1145 = vld [vmem:[#allocation7 + $0x14] sm:$0xf]
    %v1146 = vld [vmem:[#allocation7 + $0x18] sm:$0xf]
    %v1147 = vld [vmem:[#allocation7 + $0x1c] sm:$0xf]
    %v1148 = vld [vmem:[#allocation7 + $0x20] sm:$0xf]
    %v1149 = vld [vmem:[#allocation7 + $0x24] sm:$0xf]
    %v1150 = vld [vmem:[#allocation7 + $0x28] sm:$0xf]
    %v1151 = vld [vmem:[#allocation7 + $0x2c] sm:$0xf]
    %v1152 = vld [vmem:[#allocation7 + $0x30] sm:$0xf]
    %v1153 = vld [vmem:[#allocation7 + $0x34] sm:$0xf]
    %v1154 = vld [vmem:[#allocation7 + $0x38] sm:$0xf]
    %v1155 = vld [vmem:[#allocation7 + $0x3c] sm:$0xf]
    %v1172 = vunpack.c.l.b16 %v1140
    %v1173 = vunpack.c.l.b16 %v1141
    %v1174 = vunpack.c.l.b16 %v1142
    %v1175 = vunpack.c.l.b16 %v1143
    %v1176 = vunpack.c.l.b16 %v1144
    %v1177 = vunpack.c.l.b16 %v1145
    %v1178 = vunpack.c.l.b16 %v1146
    %v1179 = vunpack.c.l.b16 %v1147
    %v1180 = vunpack.c.l.b16 %v1148
    %v1181 = vunpack.c.l.b16 %v1149
    %v1182 = vunpack.c.l.b16 %v1150
    %v1183 = vunpack.c.l.b16 %v1151
    %v1184 = vunpack.c.l.b16 %v1152
    %v1185 = vunpack.c.l.b16 %v1153
    %v1186 = vunpack.c.l.b16 %v1154
    %v1187 = vunpack.c.l.b16 %v1155
    %v1188 = vpack.c.b16 %v1173, %v1172
    %v1189 = vpack.c.b16 %v1175, %v1174
    %v1190 = vpack.c.b16 %v1177, %v1176
    %v1191 = vpack.c.b16 %v1179, %v1178
    %v1192 = vpack.c.b16 %v1181, %v1180
    %v1193 = vpack.c.b16 %v1183, %v1182
    %v1194 = vpack.c.b16 %v1185, %v1184
    %v1195 = vpack.c.b16 %v1187, %v1186
    %1204 = vmatprep.subr.bf16.mxu0 0
    %1205 = vmatpush1.bf16.msra.mxu0 %v1195
    %1206 = vmatprep.subr.bf16.mxu0 0
    %1207 = vmatpush1.bf16.msra.mxu0 %v1194
    %1208 = vmatprep.subr.bf16.mxu0 0
    %1209 = vmatpush1.bf16.msra.mxu0 %v1193
    %1210 = vmatprep.subr.bf16.mxu0 0
    %1211 = vmatpush1.bf16.msra.mxu0 %v1192
    %1212 = vmatprep.subr.bf16.mxu0 0
    %1213 = vmatpush1.bf16.msra.mxu0 %v1191
    %1214 = vmatprep.subr.bf16.mxu0 0
    %1215 = vmatpush1.bf16.msra.mxu0 %v1190
    %1216 = vmatprep.subr.bf16.mxu0 0
    %1217 = vmatpush1.bf16.msra.mxu0 %v1189
    %1218 = vmatprep.subr.bf16.mxu0 0
    %1219 = vmatpush1.bf16.msra.mxu0 %v1188
    %1220 = vmatprep.subr.bf16.mxu0 0
    %1221 = vmatpush2.bf16.msra.mxu0 0
    %1222 = vmatprep.subr.bf16.mxu0 0
    %1223 = vmatpush2.bf16.msra.mxu0 0
    %1224 = vmatprep.subr.bf16.mxu0 0
    %1225 = vmatpush2.bf16.msra.mxu0 0
    %1226 = vmatprep.subr.bf16.mxu0 0
    %1227 = vmatpush2.bf16.msra.mxu0 0
    %1228 = vmatprep.subr.bf16.mxu0 0
    %1229 = vmatpush2.bf16.msra.mxu0 0
    %1230 = vmatprep.subr.bf16.mxu0 0
    %1231 = vmatpush2.bf16.msra.mxu0 0
    %1232 = vmatprep.subr.bf16.mxu0 0
    %1233 = vmatpush2.bf16.msra.mxu0 0
    %1234 = vmatprep.subr.bf16.mxu0 0
    %1235 = vmatpush2.bf16.msra.mxu0 0
    %1236 = vmatprep.mubr.bf16.mxu0 0
    %1237 = vmatmul.mubr.bf16.gmra.mxu0 %v1132
    %v1238 = vpop.f32.mrf.mxu0
    %v1239 = vadd.f32 %v210, %v1238
    %v1240 = vpop.f32.mrf.mxu0
    %v1241 = vpop.f32.mrf.mxu0
    %v1242 = vadd.f32 %v210, %v1241
    %v1243 = vpop.f32.mrf.mxu0
    %1244 = vmatprep.mubr.bf16.mxu0 0
    %1245 = vmatmul.mubr.bf16.gmra.mxu0 %v1133
    %v1246 = vpop.f32.mrf.mxu0
    %v1247 = vadd.f32 %v210, %v1246
    %v1248 = vpop.f32.mrf.mxu0
    %v1249 = vpop.f32.mrf.mxu0
    %v1250 = vadd.f32 %v210, %v1249
    %v1251 = vpop.f32.mrf.mxu0
    %1252 = vmatprep.mubr.bf16.mxu0 0
    %1253 = vmatmul.mubr.bf16.gmra.mxu0 %v1134
    %v1254 = vpop.f32.mrf.mxu0
    %v1255 = vadd.f32 %v210, %v1254
    %v1256 = vpop.f32.mrf.mxu0
    %v1257 = vpop.f32.mrf.mxu0
    %v1258 = vadd.f32 %v210, %v1257
    %v1259 = vpop.f32.mrf.mxu0
    %1260 = vmatprep.mubr.bf16.mxu0 0
    %1261 = vmatmul.mubr.bf16.gmra.mxu0 %v1135
    %v1262 = vpop.f32.mrf.mxu0
    %v1263 = vadd.f32 %v210, %v1262
    %v1264 = vpop.f32.mrf.mxu0
    %v1265 = vpop.f32.mrf.mxu0
    %v1266 = vadd.f32 %v210, %v1265
    %v1267 = vpop.f32.mrf.mxu0
    %1268 = vmatprep.mubr.bf16.mxu0 0
    %1269 = vmatmul.mubr.bf16.gmra.mxu0 %v1136
    %v1270 = vpop.f32.mrf.mxu0
    %v1271 = vadd.f32 %v210, %v1270
    %v1272 = vpop.f32.mrf.mxu0
    %v1273 = vpop.f32.mrf.mxu0
    %v1274 = vadd.f32 %v210, %v1273
    %v1275 = vpop.f32.mrf.mxu0
    %1276 = vmatprep.mubr.bf16.mxu0 0
    %1277 = vmatmul.mubr.bf16.gmra.mxu0 %v1137
    %v1278 = vpop.f32.mrf.mxu0
    %v1279 = vadd.f32 %v210, %v1278
    %v1280 = vpop.f32.mrf.mxu0
    %v1281 = vpop.f32.mrf.mxu0
    %v1282 = vadd.f32 %v210, %v1281
    %v1283 = vpop.f32.mrf.mxu0
    %1284 = vmatprep.mubr.bf16.mxu0 0
    %1285 = vmatmul.mubr.bf16.gmra.mxu0 %v1138
    %v1286 = vpop.f32.mrf.mxu0
    %v1287 = vadd.f32 %v210, %v1286
    %v1288 = vpop.f32.mrf.mxu0
    %v1289 = vpop.f32.mrf.mxu0
    %v1290 = vadd.f32 %v210, %v1289
    %v1291 = vpop.f32.mrf.mxu0
    %1292 = vmatprep.mubr.bf16.mxu0 0
    %1293 = vmatmul.mubr.bf16.gmra.mxu0 %v1139
    %v1294 = vpop.f32.mrf.mxu0
    %v1295 = vadd.f32 %v210, %v1294
    %v1296 = vpop.f32.mrf.mxu0
    %v1297 = vpop.f32.mrf.mxu0
    %v1298 = vadd.f32 %v210, %v1297
    %v1299 = vpop.f32.mrf.mxu0
    %1300 = vdwg.mxu0
    %v1301 = vxor.u32 %v1239, 2147483648
    %v1302 = vxor.u32 %v1242, 2147483648
    %v1303 = vxor.u32 %v1247, 2147483648
    %v1304 = vxor.u32 %v1250, 2147483648
    %v1305 = vxor.u32 %v1255, 2147483648
    %v1306 = vxor.u32 %v1258, 2147483648
    %v1307 = vxor.u32 %v1263, 2147483648
    %v1308 = vxor.u32 %v1266, 2147483648
    %v1309 = vxor.u32 %v1271, 2147483648
    %v1310 = vxor.u32 %v1274, 2147483648
    %v1311 = vxor.u32 %v1279, 2147483648
    %v1312 = vxor.u32 %v1282, 2147483648
    %v1313 = vxor.u32 %v1287, 2147483648
    %v1314 = vxor.u32 %v1290, 2147483648
    %v1315 = vxor.u32 %v1295, 2147483648
    %v1316 = vxor.u32 %v1298, 2147483648
    %v1317 = vmul.f32 %v1301, 1.442695
    %v1318 = vpow.pop %v1317
    %v1319 = vmul.f32 %v1302, 1.442695
    %v1320 = vpow.pop %v1319
    %v1321 = vmul.f32 %v1303, 1.442695
    %v1322 = vpow.pop %v1321
    %v1323 = vmul.f32 %v1304, 1.442695
    %v1324 = vpow.pop %v1323
    %v1325 = vmul.f32 %v1305, 1.442695
    %v1326 = vpow.pop %v1325
    %v1327 = vmul.f32 %v1306, 1.442695
    %v1328 = vpow.pop %v1327
    %v1329 = vmul.f32 %v1307, 1.442695
    %v1330 = vpow.pop %v1329
    %v1331 = vmul.f32 %v1308, 1.442695
    %v1332 = vpow.pop %v1331
    %v1333 = vmul.f32 %v1309, 1.442695
    %v1334 = vpow.pop %v1333
    %v1335 = vmul.f32 %v1310, 1.442695
    %v1336 = vpow.pop %v1335
    %v1337 = vmul.f32 %v1311, 1.442695
    %v1338 = vpow.pop %v1337
    %v1339 = vmul.f32 %v1312, 1.442695
    %v1340 = vpow.pop %v1339
    %v1341 = vmul.f32 %v1313, 1.442695
    %v1342 = vpow.pop %v1341
    %v1343 = vmul.f32 %v1314, 1.442695
    %v1344 = vpow.pop %v1343
    %v1345 = vmul.f32 %v1315, 1.442695
    %v1346 = vpow.pop %v1345
    %v1347 = vmul.f32 %v1316, 1.442695
    %v1348 = vpow.pop %v1347
    %v1349 = vadd.f32 %v1318, 1.0
    %v1350 = vadd.f32 %v1320, 1.0
    %v1351 = vadd.f32 %v1322, 1.0
    %v1352 = vadd.f32 %v1324, 1.0
    %v1353 = vadd.f32 %v1326, 1.0
    %v1354 = vadd.f32 %v1328, 1.0
    %v1355 = vadd.f32 %v1330, 1.0
    %v1356 = vadd.f32 %v1332, 1.0
    %v1357 = vadd.f32 %v1334, 1.0
    %v1358 = vadd.f32 %v1336, 1.0
    %v1359 = vadd.f32 %v1338, 1.0
    %v1360 = vadd.f32 %v1340, 1.0
    %v1361 = vadd.f32 %v1342, 1.0
    %v1362 = vadd.f32 %v1344, 1.0
    %v1363 = vadd.f32 %v1346, 1.0
    %v1364 = vadd.f32 %v1348, 1.0
    %v1365 = vrcp.pop %v1349
    %v1366 = vmul.f32 1.0, %v1365
    %v1367 = vrcp.pop %v1350
    %v1368 = vmul.f32 1.0, %v1367
    %v1369 = vrcp.pop %v1351
    %v1370 = vmul.f32 1.0, %v1369
    %v1371 = vrcp.pop %v1352
    %v1372 = vmul.f32 1.0, %v1371
    %v1373 = vrcp.pop %v1353
    %v1374 = vmul.f32 1.0, %v1373
    %v1375 = vrcp.pop %v1354
    %v1376 = vmul.f32 1.0, %v1375
    %v1377 = vrcp.pop %v1355
    %v1378 = vmul.f32 1.0, %v1377
    %v1379 = vrcp.pop %v1356
    %v1380 = vmul.f32 1.0, %v1379
    %v1381 = vrcp.pop %v1357
    %v1382 = vmul.f32 1.0, %v1381
    %v1383 = vrcp.pop %v1358
    %v1384 = vmul.f32 1.0, %v1383
    %v1385 = vrcp.pop %v1359
    %v1386 = vmul.f32 1.0, %v1385
    %v1387 = vrcp.pop %v1360
    %v1388 = vmul.f32 1.0, %v1387
    %v1389 = vrcp.pop %v1361
    %v1390 = vmul.f32 1.0, %v1389
    %v1391 = vrcp.pop %v1362
    %v1392 = vmul.f32 1.0, %v1391
    %v1393 = vrcp.pop %v1363
    %v1394 = vmul.f32 1.0, %v1393
    %v1395 = vrcp.pop %v1364
    %v1396 = vmul.f32 1.0, %v1395
    %v1397 = vmul.f32 %v1239, %v1366
    %v1398 = vmul.f32 %v1242, %v1368
    %v1399 = vmul.f32 %v1247, %v1370
    %v1400 = vmul.f32 %v1250, %v1372
    %v1401 = vmul.f32 %v1255, %v1374
    %v1402 = vmul.f32 %v1258, %v1376
    %v1403 = vmul.f32 %v1263, %v1378
    %v1404 = vmul.f32 %v1266, %v1380
    %v1405 = vmul.f32 %v1271, %v1382
    %v1406 = vmul.f32 %v1274, %v1384
    %v1407 = vmul.f32 %v1279, %v1386
    %v1408 = vmul.f32 %v1282, %v1388
    %v1409 = vmul.f32 %v1287, %v1390
    %v1410 = vmul.f32 %v1290, %v1392
    %v1411 = vmul.f32 %v1295, %v1394
    %v1412 = vmul.f32 %v1298, %v1396
    %s1413 = scalar_lea.vmem [#allocation2], 416
    %1414 = vst [vmem:[%s1413 + $0x8] sm:$0xff] %v1397
    %1415 = vst [vmem:[%s1413 + $0x10] sm:$0xff] %v1398
    %1416 = vst [vmem:[%s1413 + $0x28] sm:$0xff] %v1399
    %1417 = vst [vmem:[%s1413 + $0x30] sm:$0xff] %v1400
    %1418 = vst [vmem:[%s1413 + $0x48] sm:$0xff] %v1401
    %1419 = vst [vmem:[%s1413 + $0x50] sm:$0xff] %v1402
    %1420 = vst [vmem:[%s1413 + $0x68] sm:$0xff] %v1403
    %1421 = vst [vmem:[%s1413 + $0x70] sm:$0xff] %v1404
    %1422 = vst [vmem:[%s1413 + $0x248] sm:$0xff] %v1405
    %1423 = vst [vmem:[%s1413 + $0x250] sm:$0xff] %v1406
    %1424 = vst [vmem:[%s1413 + $0x268] sm:$0xff] %v1407
    %1425 = vst [vmem:[%s1413 + $0x270] sm:$0xff] %v1408
    %1426 = vst [vmem:[%s1413 + $0x288] sm:$0xff] %v1409
    %1427 = vst [vmem:[%s1413 + $0x290] sm:$0xff] %v1410
    %1428 = vst [vmem:[%s1413 + $0x2a8] sm:$0xff] %v1411
    %1429 = vst [vmem:[%s1413 + $0x2b0] sm:$0xff] %v1412
    %v1430 = vld [vmem:[#allocation9] sm:$0x7]
    %v1431 = vld [vmem:[#allocation9 + $0x4] sm:$0x7]
    %v1432 = vld [vmem:[#allocation9 + $0x8] sm:$0x7]
    %v1433 = vld [vmem:[#allocation2 + $0x7] sm:$0xff]
    %v1434 = vld [vmem:[#allocation2 + $0xf] sm:$0xff]
    %v1435 = vld [vmem:[#allocation2 + $0x27] sm:$0xff]
    %v1436 = vld [vmem:[#allocation2 + $0x2f] sm:$0xff]
    %v1437 = vld [vmem:[#allocation2 + $0x47] sm:$0xff]
    %v1438 = vld [vmem:[#allocation2 + $0x4f] sm:$0xff]
    %v1439 = vld [vmem:[#allocation2 + $0x67] sm:$0xff]
    %v1440 = vld [vmem:[#allocation2 + $0x6f] sm:$0xff]
    %v1441 = vld [vmem:[#allocation2 + $0x247] sm:$0xff]
    %v1442 = vld [vmem:[#allocation2 + $0x24f] sm:$0xff]
    %v1443 = vld [vmem:[#allocation2 + $0x267] sm:$0xff]
    %v1444 = vld [vmem:[#allocation2 + $0x26f] sm:$0xff]
    %v1445 = vld [vmem:[#allocation2 + $0x287] sm:$0xff]
    %v1446 = vld [vmem:[#allocation2 + $0x28f] sm:$0xff]
    %v1447 = vld [vmem:[#allocation2 + $0x2a7] sm:$0xff]
    %v1448 = vld [vmem:[#allocation2 + $0x2af] sm:$0xff]
    %v1449 = vlaneseq
    %v1450 = vshrl.u32 %v1449, 7
    %v1451 = vsub.s32 0, %v1450
    %v1452 = vrot.slane %v1430, %v1451
    %v1453 = vmul.f32 %v1433, %v1452
    %v1454 = vmul.f32 %v1434, %v1452
    %v1455 = vmul.f32 %v1435, %v1452
    %v1456 = vmul.f32 %v1436, %v1452
    %v1457 = vmul.f32 %v1437, %v1452
    %v1458 = vmul.f32 %v1438, %v1452
    %v1459 = vmul.f32 %v1439, %v1452
    %v1460 = vmul.f32 %v1440, %v1452
    %v1461 = vmul.f32 %v1441, %v1452
    %v1462 = vmul.f32 %v1442, %v1452
    %v1463 = vmul.f32 %v1443, %v1452
    %v1464 = vmul.f32 %v1444, %v1452
    %v1465 = vmul.f32 %v1445, %v1452
    %v1466 = vmul.f32 %v1446, %v1452
    %v1467 = vmul.f32 %v1447, %v1452
    %v1468 = vmul.f32 %v1448, %v1452
    %v1469 = vadd.f32 %v1453, 0.0
    %v1470 = vadd.f32 %v1454, 0.0
    %v1471 = vadd.f32 %v1455, 0.0
    %v1472 = vadd.f32 %v1456, 0.0
    %v1473 = vadd.f32 %v1457, 0.0
    %v1474 = vadd.f32 %v1458, 0.0
    %v1475 = vadd.f32 %v1459, 0.0
    %v1476 = vadd.f32 %v1460, 0.0
    %v1477 = vadd.f32 %v1461, 0.0
    %v1478 = vadd.f32 %v1462, 0.0
    %v1479 = vadd.f32 %v1463, 0.0
    %v1480 = vadd.f32 %v1464, 0.0
    %v1481 = vadd.f32 %v1465, 0.0
    %v1482 = vadd.f32 %v1466, 0.0
    %v1483 = vadd.f32 %v1467, 0.0
    %v1484 = vadd.f32 %v1468, 0.0
    %v1485 = vld [vmem:[#allocation2 + $0x8] sm:$0xff]
    %v1486 = vld [vmem:[#allocation2 + $0x10] sm:$0xff]
    %v1487 = vld [vmem:[#allocation2 + $0x28] sm:$0xff]
    %v1488 = vld [vmem:[#allocation2 + $0x30] sm:$0xff]
    %v1489 = vld [vmem:[#allocation2 + $0x48] sm:$0xff]
    %v1490 = vld [vmem:[#allocation2 + $0x50] sm:$0xff]
    %v1491 = vld [vmem:[#allocation2 + $0x68] sm:$0xff]
    %v1492 = vld [vmem:[#allocation2 + $0x70] sm:$0xff]
    %v1493 = vld [vmem:[#allocation2 + $0x248] sm:$0xff]
    %v1494 = vld [vmem:[#allocation2 + $0x250] sm:$0xff]
    %v1495 = vld [vmem:[#allocation2 + $0x268] sm:$0xff]
    %v1496 = vld [vmem:[#allocation2 + $0x270] sm:$0xff]
    %v1497 = vld [vmem:[#allocation2 + $0x288] sm:$0xff]
    %v1498 = vld [vmem:[#allocation2 + $0x290] sm:$0xff]
    %v1499 = vld [vmem:[#allocation2 + $0x2a8] sm:$0xff]
    %v1500 = vld [vmem:[#allocation2 + $0x2b0] sm:$0xff]
    %v1501 = vlaneseq
    %v1502 = vshrl.u32 %v1501, 7
    %v1503 = vsub.s32 1, %v1502
    %v1504 = vrot.slane %v1430, %v1503
    %v1505 = vmul.f32 %v1485, %v1504
    %v1506 = vmul.f32 %v1486, %v1504
    %v1507 = vmul.f32 %v1487, %v1504
    %v1508 = vmul.f32 %v1488, %v1504
    %v1509 = vmul.f32 %v1489, %v1504
    %v1510 = vmul.f32 %v1490, %v1504
    %v1511 = vmul.f32 %v1491, %v1504
    %v1512 = vmul.f32 %v1492, %v1504
    %v1513 = vmul.f32 %v1493, %v1504
    %v1514 = vmul.f32 %v1494, %v1504
    %v1515 = vmul.f32 %v1495, %v1504
    %v1516 = vmul.f32 %v1496, %v1504
    %v1517 = vmul.f32 %v1497, %v1504
    %v1518 = vmul.f32 %v1498, %v1504
    %v1519 = vmul.f32 %v1499, %v1504
    %v1520 = vmul.f32 %v1500, %v1504
    %v1521 = vadd.f32 %v1469, %v1505
    %v1522 = vadd.f32 %v1470, %v1506
    %v1523 = vadd.f32 %v1471, %v1507
    %v1524 = vadd.f32 %v1472, %v1508
    %v1525 = vadd.f32 %v1473, %v1509
    %v1526 = vadd.f32 %v1474, %v1510
    %v1527 = vadd.f32 %v1475, %v1511
    %v1528 = vadd.f32 %v1476, %v1512
    %v1529 = vadd.f32 %v1477, %v1513
    %v1530 = vadd.f32 %v1478, %v1514
    %v1531 = vadd.f32 %v1479, %v1515
    %v1532 = vadd.f32 %v1480, %v1516
    %v1533 = vadd.f32 %v1481, %v1517
    %v1534 = vadd.f32 %v1482, %v1518
    %v1535 = vadd.f32 %v1483, %v1519
    %v1536 = vadd.f32 %v1484, %v1520
    %v1537 = vld [vmem:[#allocation2 + $0x9] sm:$0xff]
    %v1538 = vld [vmem:[#allocation2 + $0x11] sm:$0xff]
    %v1539 = vld [vmem:[#allocation2 + $0x29] sm:$0xff]
    %v1540 = vld [vmem:[#allocation2 + $0x31] sm:$0xff]
    %v1541 = vld [vmem:[#allocation2 + $0x49] sm:$0xff]
    %v1542 = vld [vmem:[#allocation2 + $0x51] sm:$0xff]
    %v1543 = vld [vmem:[#allocation2 + $0x69] sm:$0xff]
    %v1544 = vld [vmem:[#allocation2 + $0x71] sm:$0xff]
    %v1545 = vld [vmem:[#allocation2 + $0x249] sm:$0xff]
    %v1546 = vld [vmem:[#allocation2 + $0x251] sm:$0xff]
    %v1547 = vld [vmem:[#allocation2 + $0x269] sm:$0xff]
    %v1548 = vld [vmem:[#allocation2 + $0x271] sm:$0xff]
    %v1549 = vld [vmem:[#allocation2 + $0x289] sm:$0xff]
    %v1550 = vld [vmem:[#allocation2 + $0x291] sm:$0xff]
    %v1551 = vld [vmem:[#allocation2 + $0x2a9] sm:$0xff]
    %v1552 = vld [vmem:[#allocation2 + $0x2b1] sm:$0xff]
    %v1553 = vlaneseq
    %v1554 = vshrl.u32 %v1553, 7
    %v1555 = vsub.s32 2, %v1554
    %v1556 = vrot.slane %v1430, %v1555
    %v1557 = vmul.f32 %v1537, %v1556
    %v1558 = vmul.f32 %v1538, %v1556
    %v1559 = vmul.f32 %v1539, %v1556
    %v1560 = vmul.f32 %v1540, %v1556
    %v1561 = vmul.f32 %v1541, %v1556
    %v1562 = vmul.f32 %v1542, %v1556
    %v1563 = vmul.f32 %v1543, %v1556
    %v1564 = vmul.f32 %v1544, %v1556
    %v1565 = vmul.f32 %v1545, %v1556
    %v1566 = vmul.f32 %v1546, %v1556
    %v1567 = vmul.f32 %v1547, %v1556
    %v1568 = vmul.f32 %v1548, %v1556
    %v1569 = vmul.f32 %v1549, %v1556
    %v1570 = vmul.f32 %v1550, %v1556
    %v1571 = vmul.f32 %v1551, %v1556
    %v1572 = vmul.f32 %v1552, %v1556
    %v1573 = vadd.f32 %v1521, %v1557
    %v1574 = vadd.f32 %v1522, %v1558
    %v1575 = vadd.f32 %v1523, %v1559
    %v1576 = vadd.f32 %v1524, %v1560
    %v1577 = vadd.f32 %v1525, %v1561
    %v1578 = vadd.f32 %v1526, %v1562
    %v1579 = vadd.f32 %v1527, %v1563
    %v1580 = vadd.f32 %v1528, %v1564
    %v1581 = vadd.f32 %v1529, %v1565
    %v1582 = vadd.f32 %v1530, %v1566
    %v1583 = vadd.f32 %v1531, %v1567
    %v1584 = vadd.f32 %v1532, %v1568
    %v1585 = vadd.f32 %v1533, %v1569
    %v1586 = vadd.f32 %v1534, %v1570
    %v1587 = vadd.f32 %v1535, %v1571
    %v1588 = vadd.f32 %v1536, %v1572
    %v1589 = vld [vmem:[%s468 + $0x7] sm:$0xff]
    %v1590 = vld [vmem:[%s468 + $0xf] sm:$0xff]
    %v1591 = vld [vmem:[%s468 + $0x27] sm:$0xff]
    %v1592 = vld [vmem:[%s468 + $0x2f] sm:$0xff]
    %v1593 = vld [vmem:[%s468 + $0x47] sm:$0xff]
    %v1594 = vld [vmem:[%s468 + $0x4f] sm:$0xff]
    %v1595 = vld [vmem:[%s468 + $0x67] sm:$0xff]
    %v1596 = vld [vmem:[%s468 + $0x6f] sm:$0xff]
    %v1597 = vld [vmem:[%s468 + $0x247] sm:$0xff]
    %v1598 = vld [vmem:[%s468 + $0x24f] sm:$0xff]
    %v1599 = vld [vmem:[%s468 + $0x267] sm:$0xff]
    %v1600 = vld [vmem:[%s468 + $0x26f] sm:$0xff]
    %v1601 = vld [vmem:[%s468 + $0x287] sm:$0xff]
    %v1602 = vld [vmem:[%s468 + $0x28f] sm:$0xff]
    %v1603 = vld [vmem:[%s468 + $0x2a7] sm:$0xff]
    %v1604 = vld [vmem:[%s468 + $0x2af] sm:$0xff]
    %v1605 = vlaneseq
    %v1606 = vshrl.u32 %v1605, 7
    %v1607 = vsub.s32 0, %v1606
    %v1608 = vrot.slane %v1431, %v1607
    %v1609 = vmul.f32 %v1589, %v1608
    %v1610 = vmul.f32 %v1590, %v1608
    %v1611 = vmul.f32 %v1591, %v1608
    %v1612 = vmul.f32 %v1592, %v1608
    %v1613 = vmul.f32 %v1593, %v1608
    %v1614 = vmul.f32 %v1594, %v1608
    %v1615 = vmul.f32 %v1595, %v1608
    %v1616 = vmul.f32 %v1596, %v1608
    %v1617 = vmul.f32 %v1597, %v1608
    %v1618 = vmul.f32 %v1598, %v1608
    %v1619 = vmul.f32 %v1599, %v1608
    %v1620 = vmul.f32 %v1600, %v1608
    %v1621 = vmul.f32 %v1601, %v1608
    %v1622 = vmul.f32 %v1602, %v1608
    %v1623 = vmul.f32 %v1603, %v1608
    %v1624 = vmul.f32 %v1604, %v1608
    %v1625 = vadd.f32 %v1573, %v1609
    %v1626 = vadd.f32 %v1574, %v1610
    %v1627 = vadd.f32 %v1575, %v1611
    %v1628 = vadd.f32 %v1576, %v1612
    %v1629 = vadd.f32 %v1577, %v1613
    %v1630 = vadd.f32 %v1578, %v1614
    %v1631 = vadd.f32 %v1579, %v1615
    %v1632 = vadd.f32 %v1580, %v1616
    %v1633 = vadd.f32 %v1581, %v1617
    %v1634 = vadd.f32 %v1582, %v1618
    %v1635 = vadd.f32 %v1583, %v1619
    %v1636 = vadd.f32 %v1584, %v1620
    %v1637 = vadd.f32 %v1585, %v1621
    %v1638 = vadd.f32 %v1586, %v1622
    %v1639 = vadd.f32 %v1587, %v1623
    %v1640 = vadd.f32 %v1588, %v1624
    %v1641 = vld [vmem:[%s468 + $0x8] sm:$0xff]
    %v1642 = vld [vmem:[%s468 + $0x10] sm:$0xff]
    %v1643 = vld [vmem:[%s468 + $0x28] sm:$0xff]
    %v1644 = vld [vmem:[%s468 + $0x30] sm:$0xff]
    %v1645 = vld [vmem:[%s468 + $0x48] sm:$0xff]
    %v1646 = vld [vmem:[%s468 + $0x50] sm:$0xff]
    %v1647 = vld [vmem:[%s468 + $0x68] sm:$0xff]
    %v1648 = vld [vmem:[%s468 + $0x70] sm:$0xff]
    %v1649 = vld [vmem:[%s468 + $0x248] sm:$0xff]
    %v1650 = vld [vmem:[%s468 + $0x250] sm:$0xff]
    %v1651 = vld [vmem:[%s468 + $0x268] sm:$0xff]
    %v1652 = vld [vmem:[%s468 + $0x270] sm:$0xff]
    %v1653 = vld [vmem:[%s468 + $0x288] sm:$0xff]
    %v1654 = vld [vmem:[%s468 + $0x290] sm:$0xff]
    %v1655 = vld [vmem:[%s468 + $0x2a8] sm:$0xff]
    %v1656 = vld [vmem:[%s468 + $0x2b0] sm:$0xff]
    %v1657 = vlaneseq
    %v1658 = vshrl.u32 %v1657, 7
    %v1659 = vsub.s32 1, %v1658
    %v1660 = vrot.slane %v1431, %v1659
    %v1661 = vmul.f32 %v1641, %v1660
    %v1662 = vmul.f32 %v1642, %v1660
    %v1663 = vmul.f32 %v1643, %v1660
    %v1664 = vmul.f32 %v1644, %v1660
    %v1665 = vmul.f32 %v1645, %v1660
    %v1666 = vmul.f32 %v1646, %v1660
    %v1667 = vmul.f32 %v1647, %v1660
    %v1668 = vmul.f32 %v1648, %v1660
    %v1669 = vmul.f32 %v1649, %v1660
    %v1670 = vmul.f32 %v1650, %v1660
    %v1671 = vmul.f32 %v1651, %v1660
    %v1672 = vmul.f32 %v1652, %v1660
    %v1673 = vmul.f32 %v1653, %v1660
    %v1674 = vmul.f32 %v1654, %v1660
    %v1675 = vmul.f32 %v1655, %v1660
    %v1676 = vmul.f32 %v1656, %v1660
    %v1677 = vadd.f32 %v1625, %v1661
    %v1678 = vadd.f32 %v1626, %v1662
    %v1679 = vadd.f32 %v1627, %v1663
    %v1680 = vadd.f32 %v1628, %v1664
    %v1681 = vadd.f32 %v1629, %v1665
    %v1682 = vadd.f32 %v1630, %v1666
    %v1683 = vadd.f32 %v1631, %v1667
    %v1684 = vadd.f32 %v1632, %v1668
    %v1685 = vadd.f32 %v1633, %v1669
    %v1686 = vadd.f32 %v1634, %v1670
    %v1687 = vadd.f32 %v1635, %v1671
    %v1688 = vadd.f32 %v1636, %v1672
    %v1689 = vadd.f32 %v1637, %v1673
    %v1690 = vadd.f32 %v1638, %v1674
    %v1691 = vadd.f32 %v1639, %v1675
    %v1692 = vadd.f32 %v1640, %v1676
    %v1693 = vld [vmem:[%s468 + $0x9] sm:$0xff]
    %v1694 = vld [vmem:[%s468 + $0x11] sm:$0xff]
    %v1695 = vld [vmem:[%s468 + $0x29] sm:$0xff]
    %v1696 = vld [vmem:[%s468 + $0x31] sm:$0xff]
    %v1697 = vld [vmem:[%s468 + $0x49] sm:$0xff]
    %v1698 = vld [vmem:[%s468 + $0x51] sm:$0xff]
    %v1699 = vld [vmem:[%s468 + $0x69] sm:$0xff]
    %v1700 = vld [vmem:[%s468 + $0x71] sm:$0xff]
    %v1701 = vld [vmem:[%s468 + $0x249] sm:$0xff]
    %v1702 = vld [vmem:[%s468 + $0x251] sm:$0xff]
    %v1703 = vld [vmem:[%s468 + $0x269] sm:$0xff]
    %v1704 = vld [vmem:[%s468 + $0x271] sm:$0xff]
    %v1705 = vld [vmem:[%s468 + $0x289] sm:$0xff]
    %v1706 = vld [vmem:[%s468 + $0x291] sm:$0xff]
    %v1707 = vld [vmem:[%s468 + $0x2a9] sm:$0xff]
    %v1708 = vld [vmem:[%s468 + $0x2b1] sm:$0xff]
    %v1709 = vlaneseq
    %v1710 = vshrl.u32 %v1709, 7
    %v1711 = vsub.s32 2, %v1710
    %v1712 = vrot.slane %v1431, %v1711
    %v1713 = vmul.f32 %v1693, %v1712
    %v1714 = vmul.f32 %v1694, %v1712
    %v1715 = vmul.f32 %v1695, %v1712
    %v1716 = vmul.f32 %v1696, %v1712
    %v1717 = vmul.f32 %v1697, %v1712
    %v1718 = vmul.f32 %v1698, %v1712
    %v1719 = vmul.f32 %v1699, %v1712
    %v1720 = vmul.f32 %v1700, %v1712
    %v1721 = vmul.f32 %v1701, %v1712
    %v1722 = vmul.f32 %v1702, %v1712
    %v1723 = vmul.f32 %v1703, %v1712
    %v1724 = vmul.f32 %v1704, %v1712
    %v1725 = vmul.f32 %v1705, %v1712
    %v1726 = vmul.f32 %v1706, %v1712
    %v1727 = vmul.f32 %v1707, %v1712
    %v1728 = vmul.f32 %v1708, %v1712
    %v1729 = vadd.f32 %v1677, %v1713
    %v1730 = vadd.f32 %v1678, %v1714
    %v1731 = vadd.f32 %v1679, %v1715
    %v1732 = vadd.f32 %v1680, %v1716
    %v1733 = vadd.f32 %v1681, %v1717
    %v1734 = vadd.f32 %v1682, %v1718
    %v1735 = vadd.f32 %v1683, %v1719
    %v1736 = vadd.f32 %v1684, %v1720
    %v1737 = vadd.f32 %v1685, %v1721
    %v1738 = vadd.f32 %v1686, %v1722
    %v1739 = vadd.f32 %v1687, %v1723
    %v1740 = vadd.f32 %v1688, %v1724
    %v1741 = vadd.f32 %v1689, %v1725
    %v1742 = vadd.f32 %v1690, %v1726
    %v1743 = vadd.f32 %v1691, %v1727
    %v1744 = vadd.f32 %v1692, %v1728
    %s1745 = scalar_lea.vmem [#allocation2], 64
    %v1746 = vld [vmem:[%s1745 + $0x7] sm:$0xff]
    %v1747 = vld [vmem:[%s1745 + $0xf] sm:$0xff]
    %v1748 = vld [vmem:[%s1745 + $0x27] sm:$0xff]
    %v1749 = vld [vmem:[%s1745 + $0x2f] sm:$0xff]
    %v1750 = vld [vmem:[%s1745 + $0x47] sm:$0xff]
    %v1751 = vld [vmem:[%s1745 + $0x4f] sm:$0xff]
    %v1752 = vld [vmem:[%s1745 + $0x67] sm:$0xff]
    %v1753 = vld [vmem:[%s1745 + $0x6f] sm:$0xff]
    %v1754 = vld [vmem:[%s1745 + $0x247] sm:$0xff]
    %v1755 = vld [vmem:[%s1745 + $0x24f] sm:$0xff]
    %v1756 = vld [vmem:[%s1745 + $0x267] sm:$0xff]
    %v1757 = vld [vmem:[%s1745 + $0x26f] sm:$0xff]
    %v1758 = vld [vmem:[%s1745 + $0x287] sm:$0xff]
    %v1759 = vld [vmem:[%s1745 + $0x28f] sm:$0xff]
    %v1760 = vld [vmem:[%s1745 + $0x2a7] sm:$0xff]
    %v1761 = vld [vmem:[%s1745 + $0x2af] sm:$0xff]
    %v1762 = vlaneseq
    %v1763 = vshrl.u32 %v1762, 7
    %v1764 = vsub.s32 0, %v1763
    %v1765 = vrot.slane %v1432, %v1764
    %v1766 = vmul.f32 %v1746, %v1765
    %v1767 = vmul.f32 %v1747, %v1765
    %v1768 = vmul.f32 %v1748, %v1765
    %v1769 = vmul.f32 %v1749, %v1765
    %v1770 = vmul.f32 %v1750, %v1765
    %v1771 = vmul.f32 %v1751, %v1765
    %v1772 = vmul.f32 %v1752, %v1765
    %v1773 = vmul.f32 %v1753, %v1765
    %v1774 = vmul.f32 %v1754, %v1765
    %v1775 = vmul.f32 %v1755, %v1765
    %v1776 = vmul.f32 %v1756, %v1765
    %v1777 = vmul.f32 %v1757, %v1765
    %v1778 = vmul.f32 %v1758, %v1765
    %v1779 = vmul.f32 %v1759, %v1765
    %v1780 = vmul.f32 %v1760, %v1765
    %v1781 = vmul.f32 %v1761, %v1765
    %v1782 = vadd.f32 %v1729, %v1766
    %v1783 = vadd.f32 %v1730, %v1767
    %v1784 = vadd.f32 %v1731, %v1768
    %v1785 = vadd.f32 %v1732, %v1769
    %v1786 = vadd.f32 %v1733, %v1770
    %v1787 = vadd.f32 %v1734, %v1771
    %v1788 = vadd.f32 %v1735, %v1772
    %v1789 = vadd.f32 %v1736, %v1773
    %v1790 = vadd.f32 %v1737, %v1774
    %v1791 = vadd.f32 %v1738, %v1775
    %v1792 = vadd.f32 %v1739, %v1776
    %v1793 = vadd.f32 %v1740, %v1777
    %v1794 = vadd.f32 %v1741, %v1778
    %v1795 = vadd.f32 %v1742, %v1779
    %v1796 = vadd.f32 %v1743, %v1780
    %v1797 = vadd.f32 %v1744, %v1781
    %v1798 = vld [vmem:[%s1745 + $0x8] sm:$0xff]
    %v1799 = vld [vmem:[%s1745 + $0x10] sm:$0xff]
    %v1800 = vld [vmem:[%s1745 + $0x28] sm:$0xff]
    %v1801 = vld [vmem:[%s1745 + $0x30] sm:$0xff]
    %v1802 = vld [vmem:[%s1745 + $0x48] sm:$0xff]
    %v1803 = vld [vmem:[%s1745 + $0x50] sm:$0xff]
    %v1804 = vld [vmem:[%s1745 + $0x68] sm:$0xff]
    %v1805 = vld [vmem:[%s1745 + $0x70] sm:$0xff]
    %v1806 = vld [vmem:[%s1745 + $0x248] sm:$0xff]
    %v1807 = vld [vmem:[%s1745 + $0x250] sm:$0xff]
    %v1808 = vld [vmem:[%s1745 + $0x268] sm:$0xff]
    %v1809 = vld [vmem:[%s1745 + $0x270] sm:$0xff]
    %v1810 = vld [vmem:[%s1745 + $0x288] sm:$0xff]
    %v1811 = vld [vmem:[%s1745 + $0x290] sm:$0xff]
    %v1812 = vld [vmem:[%s1745 + $0x2a8] sm:$0xff]
    %v1813 = vld [vmem:[%s1745 + $0x2b0] sm:$0xff]
    %v1814 = vlaneseq
    %v1815 = vshrl.u32 %v1814, 7
    %v1816 = vsub.s32 1, %v1815
    %v1817 = vrot.slane %v1432, %v1816
    %v1818 = vmul.f32 %v1798, %v1817
    %v1819 = vmul.f32 %v1799, %v1817
    %v1820 = vmul.f32 %v1800, %v1817
    %v1821 = vmul.f32 %v1801, %v1817
    %v1822 = vmul.f32 %v1802, %v1817
    %v1823 = vmul.f32 %v1803, %v1817
    %v1824 = vmul.f32 %v1804, %v1817
    %v1825 = vmul.f32 %v1805, %v1817
    %v1826 = vmul.f32 %v1806, %v1817
    %v1827 = vmul.f32 %v1807, %v1817
    %v1828 = vmul.f32 %v1808, %v1817
    %v1829 = vmul.f32 %v1809, %v1817
    %v1830 = vmul.f32 %v1810, %v1817
    %v1831 = vmul.f32 %v1811, %v1817
    %v1832 = vmul.f32 %v1812, %v1817
    %v1833 = vmul.f32 %v1813, %v1817
    %v1834 = vadd.f32 %v1782, %v1818
    %v1835 = vadd.f32 %v1783, %v1819
    %v1836 = vadd.f32 %v1784, %v1820
    %v1837 = vadd.f32 %v1785, %v1821
    %v1838 = vadd.f32 %v1786, %v1822
    %v1839 = vadd.f32 %v1787, %v1823
    %v1840 = vadd.f32 %v1788, %v1824
    %v1841 = vadd.f32 %v1789, %v1825
    %v1842 = vadd.f32 %v1790, %v1826
    %v1843 = vadd.f32 %v1791, %v1827
    %v1844 = vadd.f32 %v1792, %v1828
    %v1845 = vadd.f32 %v1793, %v1829
    %v1846 = vadd.f32 %v1794, %v1830
    %v1847 = vadd.f32 %v1795, %v1831
    %v1848 = vadd.f32 %v1796, %v1832
    %v1849 = vadd.f32 %v1797, %v1833
    %v1850 = vld [vmem:[%s1745 + $0x9] sm:$0xff]
    %v1851 = vld [vmem:[%s1745 + $0x11] sm:$0xff]
    %v1852 = vld [vmem:[%s1745 + $0x29] sm:$0xff]
    %v1853 = vld [vmem:[%s1745 + $0x31] sm:$0xff]
    %v1854 = vld [vmem:[%s1745 + $0x49] sm:$0xff]
    %v1855 = vld [vmem:[%s1745 + $0x51] sm:$0xff]
    %v1856 = vld [vmem:[%s1745 + $0x69] sm:$0xff]
    %v1857 = vld [vmem:[%s1745 + $0x71] sm:$0xff]
    %v1858 = vld [vmem:[%s1745 + $0x249] sm:$0xff]
    %v1859 = vld [vmem:[%s1745 + $0x251] sm:$0xff]
    %v1860 = vld [vmem:[%s1745 + $0x269] sm:$0xff]
    %v1861 = vld [vmem:[%s1745 + $0x271] sm:$0xff]
    %v1862 = vld [vmem:[%s1745 + $0x289] sm:$0xff]
    %v1863 = vld [vmem:[%s1745 + $0x291] sm:$0xff]
    %v1864 = vld [vmem:[%s1745 + $0x2a9] sm:$0xff]
    %v1865 = vld [vmem:[%s1745 + $0x2b1] sm:$0xff]
    %v1866 = vlaneseq
    %v1867 = vshrl.u32 %v1866, 7
    %v1868 = vsub.s32 2, %v1867
    %v1869 = vrot.slane %v1432, %v1868
    %v1870 = vmul.f32 %v1850, %v1869
    %v1871 = vmul.f32 %v1851, %v1869
    %v1872 = vmul.f32 %v1852, %v1869
    %v1873 = vmul.f32 %v1853, %v1869
    %v1874 = vmul.f32 %v1854, %v1869
    %v1875 = vmul.f32 %v1855, %v1869
    %v1876 = vmul.f32 %v1856, %v1869
    %v1877 = vmul.f32 %v1857, %v1869
    %v1878 = vmul.f32 %v1858, %v1869
    %v1879 = vmul.f32 %v1859, %v1869
    %v1880 = vmul.f32 %v1860, %v1869
    %v1881 = vmul.f32 %v1861, %v1869
    %v1882 = vmul.f32 %v1862, %v1869
    %v1883 = vmul.f32 %v1863, %v1869
    %v1884 = vmul.f32 %v1864, %v1869
    %v1885 = vmul.f32 %v1865, %v1869
    %v1886 = vadd.f32 %v1834, %v1870
    %v1887 = vadd.f32 %v1835, %v1871
    %v1888 = vadd.f32 %v1836, %v1872
    %v1889 = vadd.f32 %v1837, %v1873
    %v1890 = vadd.f32 %v1838, %v1874
    %v1891 = vadd.f32 %v1839, %v1875
    %v1892 = vadd.f32 %v1840, %v1876
    %v1893 = vadd.f32 %v1841, %v1877
    %v1894 = vadd.f32 %v1842, %v1878
    %v1895 = vadd.f32 %v1843, %v1879
    %v1896 = vadd.f32 %v1844, %v1880
    %v1897 = vadd.f32 %v1845, %v1881
    %v1898 = vadd.f32 %v1846, %v1882
    %v1899 = vadd.f32 %v1847, %v1883
    %v1900 = vadd.f32 %v1848, %v1884
    %v1901 = vadd.f32 %v1849, %v1885
    %v1902 = vlaneseq
    %v1903 = vshrl.u32 %v1902, 7
    %v1904 = vsub.s32 1, %v1903
    %v1905 = vrot.slane %v77, %v1904
    %v1906 = vadd.f32 %v1886, %v1905
    %v1907 = vadd.f32 %v1887, %v1905
    %v1908 = vadd.f32 %v1888, %v1905
    %v1909 = vadd.f32 %v1889, %v1905
    %v1910 = vadd.f32 %v1890, %v1905
    %v1911 = vadd.f32 %v1891, %v1905
    %v1912 = vadd.f32 %v1892, %v1905
    %v1913 = vadd.f32 %v1893, %v1905
    %v1914 = vadd.f32 %v1894, %v1905
    %v1915 = vadd.f32 %v1895, %v1905
    %v1916 = vadd.f32 %v1896, %v1905
    %v1917 = vadd.f32 %v1897, %v1905
    %v1918 = vadd.f32 %v1898, %v1905
    %v1919 = vadd.f32 %v1899, %v1905
    %v1920 = vadd.f32 %v1900, %v1905
    %v1921 = vadd.f32 %v1901, %v1905
    %v1922 = vxor.u32 %v1906, 2147483648
    %v1923 = vxor.u32 %v1907, 2147483648
    %v1924 = vxor.u32 %v1908, 2147483648
    %v1925 = vxor.u32 %v1909, 2147483648
    %v1926 = vxor.u32 %v1910, 2147483648
    %v1927 = vxor.u32 %v1911, 2147483648
    %v1928 = vxor.u32 %v1912, 2147483648
    %v1929 = vxor.u32 %v1913, 2147483648
    %v1930 = vxor.u32 %v1914, 2147483648
    %v1931 = vxor.u32 %v1915, 2147483648
    %v1932 = vxor.u32 %v1916, 2147483648
    %v1933 = vxor.u32 %v1917, 2147483648
    %v1934 = vxor.u32 %v1918, 2147483648
    %v1935 = vxor.u32 %v1919, 2147483648
    %v1936 = vxor.u32 %v1920, 2147483648
    %v1937 = vxor.u32 %v1921, 2147483648
    %v1938 = vmul.f32 %v1922, 1.442695
    %v1939 = vpow.pop %v1938
    %v1940 = vmul.f32 %v1923, 1.442695
    %v1941 = vpow.pop %v1940
    %v1942 = vmul.f32 %v1924, 1.442695
    %v1943 = vpow.pop %v1942
    %v1944 = vmul.f32 %v1925, 1.442695
    %v1945 = vpow.pop %v1944
    %v1946 = vmul.f32 %v1926, 1.442695
    %v1947 = vpow.pop %v1946
    %v1948 = vmul.f32 %v1927, 1.442695
    %v1949 = vpow.pop %v1948
    %v1950 = vmul.f32 %v1928, 1.442695
    %v1951 = vpow.pop %v1950
    %v1952 = vmul.f32 %v1929, 1.442695
    %v1953 = vpow.pop %v1952
    %v1954 = vmul.f32 %v1930, 1.442695
    %v1955 = vpow.pop %v1954
    %v1956 = vmul.f32 %v1931, 1.442695
    %v1957 = vpow.pop %v1956
    %v1958 = vmul.f32 %v1932, 1.442695
    %v1959 = vpow.pop %v1958
    %v1960 = vmul.f32 %v1933, 1.442695
    %v1961 = vpow.pop %v1960
    %v1962 = vmul.f32 %v1934, 1.442695
    %v1963 = vpow.pop %v1962
    %v1964 = vmul.f32 %v1935, 1.442695
    %v1965 = vpow.pop %v1964
    %v1966 = vmul.f32 %v1936, 1.442695
    %v1967 = vpow.pop %v1966
    %v1968 = vmul.f32 %v1937, 1.442695
    %v1969 = vpow.pop %v1968
    %v1970 = vadd.f32 %v1939, 1.0
    %v1971 = vadd.f32 %v1941, 1.0
    %v1972 = vadd.f32 %v1943, 1.0
    %v1973 = vadd.f32 %v1945, 1.0
    %v1974 = vadd.f32 %v1947, 1.0
    %v1975 = vadd.f32 %v1949, 1.0
    %v1976 = vadd.f32 %v1951, 1.0
    %v1977 = vadd.f32 %v1953, 1.0
    %v1978 = vadd.f32 %v1955, 1.0
    %v1979 = vadd.f32 %v1957, 1.0
    %v1980 = vadd.f32 %v1959, 1.0
    %v1981 = vadd.f32 %v1961, 1.0
    %v1982 = vadd.f32 %v1963, 1.0
    %v1983 = vadd.f32 %v1965, 1.0
    %v1984 = vadd.f32 %v1967, 1.0
    %v1985 = vadd.f32 %v1969, 1.0
    %v1986 = vrcp.pop %v1970
    %v1987 = vmul.f32 1.0, %v1986
    %v1988 = vrcp.pop %v1971
    %v1989 = vmul.f32 1.0, %v1988
    %v1990 = vrcp.pop %v1972
    %v1991 = vmul.f32 1.0, %v1990
    %v1992 = vrcp.pop %v1973
    %v1993 = vmul.f32 1.0, %v1992
    %v1994 = vrcp.pop %v1974
    %v1995 = vmul.f32 1.0, %v1994
    %v1996 = vrcp.pop %v1975
    %v1997 = vmul.f32 1.0, %v1996
    %v1998 = vrcp.pop %v1976
    %v1999 = vmul.f32 1.0, %v1998
    %v2000 = vrcp.pop %v1977
    %v2001 = vmul.f32 1.0, %v2000
    %v2002 = vrcp.pop %v1978
    %v2003 = vmul.f32 1.0, %v2002
    %v2004 = vrcp.pop %v1979
    %v2005 = vmul.f32 1.0, %v2004
    %v2006 = vrcp.pop %v1980
    %v2007 = vmul.f32 1.0, %v2006
    %v2008 = vrcp.pop %v1981
    %v2009 = vmul.f32 1.0, %v2008
    %v2010 = vrcp.pop %v1982
    %v2011 = vmul.f32 1.0, %v2010
    %v2012 = vrcp.pop %v1983
    %v2013 = vmul.f32 1.0, %v2012
    %v2014 = vrcp.pop %v1984
    %v2015 = vmul.f32 1.0, %v2014
    %v2016 = vrcp.pop %v1985
    %v2017 = vmul.f32 1.0, %v2016
    %v2018 = vmul.f32 %v1906, %v1987
    %v2019 = vmul.f32 %v1907, %v1989
    %v2020 = vmul.f32 %v1908, %v1991
    %v2021 = vmul.f32 %v1909, %v1993
    %v2022 = vmul.f32 %v1910, %v1995
    %v2023 = vmul.f32 %v1911, %v1997
    %v2024 = vmul.f32 %v1912, %v1999
    %v2025 = vmul.f32 %v1913, %v2001
    %v2026 = vmul.f32 %v1914, %v2003
    %v2027 = vmul.f32 %v1915, %v2005
    %v2028 = vmul.f32 %v1916, %v2007
    %v2029 = vmul.f32 %v1917, %v2009
    %v2030 = vmul.f32 %v1918, %v2011
    %v2031 = vmul.f32 %v1919, %v2013
    %v2032 = vmul.f32 %v1920, %v2015
    %v2033 = vmul.f32 %v1921, %v2017
    %v2034 = vpack.c.bf16 %v2019, %v2018
    %v2035 = vpack.c.bf16 %v2021, %v2020
    %v2036 = vpack.c.bf16 %v2023, %v2022
    %v2037 = vpack.c.bf16 %v2025, %v2024
    %v2038 = vpack.c.bf16 %v2027, %v2026
    %v2039 = vpack.c.bf16 %v2029, %v2028
    %v2040 = vpack.c.bf16 %v2031, %v2030
    %v2041 = vpack.c.bf16 %v2033, %v2032
    %v2050 = vunpack.c.l.b16 %v2034
    %v2051 = vunpack.c.h.b16 %v2034
    %v2052 = vunpack.c.l.b16 %v2035
    %v2053 = vunpack.c.h.b16 %v2035
    %v2054 = vunpack.c.l.b16 %v2036
    %v2055 = vunpack.c.h.b16 %v2036
    %v2056 = vunpack.c.l.b16 %v2037
    %v2057 = vunpack.c.h.b16 %v2037
    %v2058 = vunpack.c.l.b16 %v2038
    %v2059 = vunpack.c.h.b16 %v2038
    %v2060 = vunpack.c.l.b16 %v2039
    %v2061 = vunpack.c.h.b16 %v2039
    %v2062 = vunpack.c.l.b16 %v2040
    %v2063 = vunpack.c.h.b16 %v2040
    %v2064 = vunpack.c.l.b16 %v2041
    %v2065 = vunpack.c.h.b16 %v2041
    %v2066 = vpack.c.b16 %v2050, %v2050
    %v2067 = vpack.c.b16 %v2051, %v2051
    %v2068 = vpack.c.b16 %v2052, %v2052
    %v2069 = vpack.c.b16 %v2053, %v2053
    %v2070 = vpack.c.b16 %v2054, %v2054
    %v2071 = vpack.c.b16 %v2055, %v2055
    %v2072 = vpack.c.b16 %v2056, %v2056
    %v2073 = vpack.c.b16 %v2057, %v2057
    %v2074 = vpack.c.b16 %v2058, %v2058
    %v2075 = vpack.c.b16 %v2059, %v2059
    %v2076 = vpack.c.b16 %v2060, %v2060
    %v2077 = vpack.c.b16 %v2061, %v2061
    %v2078 = vpack.c.b16 %v2062, %v2062
    %v2079 = vpack.c.b16 %v2063, %v2063
    %v2080 = vpack.c.b16 %v2064, %v2064
    %v2081 = vpack.c.b16 %v2065, %v2065
    %2098 = vst [vmem:[#allocation3] sm:$0xf] %v2066
    %2099 = vst [vmem:[#allocation3 + $0x4] sm:$0xf] %v2067
    %2100 = vst [vmem:[#allocation3 + $0x8] sm:$0xf] %v2068
    %2101 = vst [vmem:[#allocation3 + $0xc] sm:$0xf] %v2069
    %2102 = vst [vmem:[#allocation3 + $0x10] sm:$0xf] %v2070
    %2103 = vst [vmem:[#allocation3 + $0x14] sm:$0xf] %v2071
    %2104 = vst [vmem:[#allocation3 + $0x18] sm:$0xf] %v2072
    %2105 = vst [vmem:[#allocation3 + $0x1c] sm:$0xf] %v2073
    %2106 = vst [vmem:[#allocation3 + $0x80] sm:$0xf] %v2074
    %2107 = vst [vmem:[#allocation3 + $0x84] sm:$0xf] %v2075
    %2108 = vst [vmem:[#allocation3 + $0x88] sm:$0xf] %v2076
    %2109 = vst [vmem:[#allocation3 + $0x8c] sm:$0xf] %v2077
    %2110 = vst [vmem:[#allocation3 + $0x90] sm:$0xf] %v2078
    %2111 = vst [vmem:[#allocation3 + $0x94] sm:$0xf] %v2079
    %2112 = vst [vmem:[#allocation3 + $0x98] sm:$0xf] %v2080
    %2113 = vst [vmem:[#allocation3 + $0x9c] sm:$0xf] %v2081
    %s2114 = scalar_lea.vmem [#allocation2], 128
    %v2115 = vld [vmem:[%s2114 + $0x7] sm:$0xff]
    %v2116 = vld [vmem:[%s2114 + $0xf] sm:$0xff]
    %v2117 = vld [vmem:[%s2114 + $0x27] sm:$0xff]
    %v2118 = vld [vmem:[%s2114 + $0x2f] sm:$0xff]
    %v2119 = vld [vmem:[%s2114 + $0x47] sm:$0xff]
    %v2120 = vld [vmem:[%s2114 + $0x4f] sm:$0xff]
    %v2121 = vld [vmem:[%s2114 + $0x67] sm:$0xff]
    %v2122 = vld [vmem:[%s2114 + $0x6f] sm:$0xff]
    %v2123 = vld [vmem:[%s2114 + $0x247] sm:$0xff]
    %v2124 = vld [vmem:[%s2114 + $0x24f] sm:$0xff]
    %v2125 = vld [vmem:[%s2114 + $0x267] sm:$0xff]
    %v2126 = vld [vmem:[%s2114 + $0x26f] sm:$0xff]
    %v2127 = vld [vmem:[%s2114 + $0x287] sm:$0xff]
    %v2128 = vld [vmem:[%s2114 + $0x28f] sm:$0xff]
    %v2129 = vld [vmem:[%s2114 + $0x2a7] sm:$0xff]
    %v2130 = vld [vmem:[%s2114 + $0x2af] sm:$0xff]
    %v2131 = vmul.f32 %v2115, %v1452
    %v2132 = vmul.f32 %v2116, %v1452
    %v2133 = vmul.f32 %v2117, %v1452
    %v2134 = vmul.f32 %v2118, %v1452
    %v2135 = vmul.f32 %v2119, %v1452
    %v2136 = vmul.f32 %v2120, %v1452
    %v2137 = vmul.f32 %v2121, %v1452
    %v2138 = vmul.f32 %v2122, %v1452
    %v2139 = vmul.f32 %v2123, %v1452
    %v2140 = vmul.f32 %v2124, %v1452
    %v2141 = vmul.f32 %v2125, %v1452
    %v2142 = vmul.f32 %v2126, %v1452
    %v2143 = vmul.f32 %v2127, %v1452
    %v2144 = vmul.f32 %v2128, %v1452
    %v2145 = vmul.f32 %v2129, %v1452
    %v2146 = vmul.f32 %v2130, %v1452
    %v2147 = vadd.f32 %v2131, 0.0
    %v2148 = vadd.f32 %v2132, 0.0
    %v2149 = vadd.f32 %v2133, 0.0
    %v2150 = vadd.f32 %v2134, 0.0
    %v2151 = vadd.f32 %v2135, 0.0
    %v2152 = vadd.f32 %v2136, 0.0
    %v2153 = vadd.f32 %v2137, 0.0
    %v2154 = vadd.f32 %v2138, 0.0
    %v2155 = vadd.f32 %v2139, 0.0
    %v2156 = vadd.f32 %v2140, 0.0
    %v2157 = vadd.f32 %v2141, 0.0
    %v2158 = vadd.f32 %v2142, 0.0
    %v2159 = vadd.f32 %v2143, 0.0
    %v2160 = vadd.f32 %v2144, 0.0
    %v2161 = vadd.f32 %v2145, 0.0
    %v2162 = vadd.f32 %v2146, 0.0
    %v2163 = vld [vmem:[%s2114 + $0x8] sm:$0xff]
    %v2164 = vld [vmem:[%s2114 + $0x10] sm:$0xff]
    %v2165 = vld [vmem:[%s2114 + $0x28] sm:$0xff]
    %v2166 = vld [vmem:[%s2114 + $0x30] sm:$0xff]
    %v2167 = vld [vmem:[%s2114 + $0x48] sm:$0xff]
    %v2168 = vld [vmem:[%s2114 + $0x50] sm:$0xff]
    %v2169 = vld [vmem:[%s2114 + $0x68] sm:$0xff]
    %v2170 = vld [vmem:[%s2114 + $0x70] sm:$0xff]
    %v2171 = vld [vmem:[%s2114 + $0x248] sm:$0xff]
    %v2172 = vld [vmem:[%s2114 + $0x250] sm:$0xff]
    %v2173 = vld [vmem:[%s2114 + $0x268] sm:$0xff]
    %v2174 = vld [vmem:[%s2114 + $0x270] sm:$0xff]
    %v2175 = vld [vmem:[%s2114 + $0x288] sm:$0xff]
    %v2176 = vld [vmem:[%s2114 + $0x290] sm:$0xff]
    %v2177 = vld [vmem:[%s2114 + $0x2a8] sm:$0xff]
    %v2178 = vld [vmem:[%s2114 + $0x2b0] sm:$0xff]
    %v2179 = vmul.f32 %v2163, %v1504
    %v2180 = vmul.f32 %v2164, %v1504
    %v2181 = vmul.f32 %v2165, %v1504
    %v2182 = vmul.f32 %v2166, %v1504
    %v2183 = vmul.f32 %v2167, %v1504
    %v2184 = vmul.f32 %v2168, %v1504
    %v2185 = vmul.f32 %v2169, %v1504
    %v2186 = vmul.f32 %v2170, %v1504
    %v2187 = vmul.f32 %v2171, %v1504
    %v2188 = vmul.f32 %v2172, %v1504
    %v2189 = vmul.f32 %v2173, %v1504
    %v2190 = vmul.f32 %v2174, %v1504
    %v2191 = vmul.f32 %v2175, %v1504
    %v2192 = vmul.f32 %v2176, %v1504
    %v2193 = vmul.f32 %v2177, %v1504
    %v2194 = vmul.f32 %v2178, %v1504
    %v2195 = vadd.f32 %v2147, %v2179
    %v2196 = vadd.f32 %v2148, %v2180
    %v2197 = vadd.f32 %v2149, %v2181
    %v2198 = vadd.f32 %v2150, %v2182
    %v2199 = vadd.f32 %v2151, %v2183
    %v2200 = vadd.f32 %v2152, %v2184
    %v2201 = vadd.f32 %v2153, %v2185
    %v2202 = vadd.f32 %v2154, %v2186
    %v2203 = vadd.f32 %v2155, %v2187
    %v2204 = vadd.f32 %v2156, %v2188
    %v2205 = vadd.f32 %v2157, %v2189
    %v2206 = vadd.f32 %v2158, %v2190
    %v2207 = vadd.f32 %v2159, %v2191
    %v2208 = vadd.f32 %v2160, %v2192
    %v2209 = vadd.f32 %v2161, %v2193
    %v2210 = vadd.f32 %v2162, %v2194
    %v2211 = vld [vmem:[%s2114 + $0x9] sm:$0xff]
    %v2212 = vld [vmem:[%s2114 + $0x11] sm:$0xff]
    %v2213 = vld [vmem:[%s2114 + $0x29] sm:$0xff]
    %v2214 = vld [vmem:[%s2114 + $0x31] sm:$0xff]
    %v2215 = vld [vmem:[%s2114 + $0x49] sm:$0xff]
    %v2216 = vld [vmem:[%s2114 + $0x51] sm:$0xff]
    %v2217 = vld [vmem:[%s2114 + $0x69] sm:$0xff]
    %v2218 = vld [vmem:[%s2114 + $0x71] sm:$0xff]
    %v2219 = vld [vmem:[%s2114 + $0x249] sm:$0xff]
    %v2220 = vld [vmem:[%s2114 + $0x251] sm:$0xff]
    %v2221 = vld [vmem:[%s2114 + $0x269] sm:$0xff]
    %v2222 = vld [vmem:[%s2114 + $0x271] sm:$0xff]
    %v2223 = vld [vmem:[%s2114 + $0x289] sm:$0xff]
    %v2224 = vld [vmem:[%s2114 + $0x291] sm:$0xff]
    %v2225 = vld [vmem:[%s2114 + $0x2a9] sm:$0xff]
    %v2226 = vld [vmem:[%s2114 + $0x2b1] sm:$0xff]
    %v2227 = vmul.f32 %v2211, %v1556
    %v2228 = vmul.f32 %v2212, %v1556
    %v2229 = vmul.f32 %v2213, %v1556
    %v2230 = vmul.f32 %v2214, %v1556
    %v2231 = vmul.f32 %v2215, %v1556
    %v2232 = vmul.f32 %v2216, %v1556
    %v2233 = vmul.f32 %v2217, %v1556
    %v2234 = vmul.f32 %v2218, %v1556
    %v2235 = vmul.f32 %v2219, %v1556
    %v2236 = vmul.f32 %v2220, %v1556
    %v2237 = vmul.f32 %v2221, %v1556
    %v2238 = vmul.f32 %v2222, %v1556
    %v2239 = vmul.f32 %v2223, %v1556
    %v2240 = vmul.f32 %v2224, %v1556
    %v2241 = vmul.f32 %v2225, %v1556
    %v2242 = vmul.f32 %v2226, %v1556
    %v2243 = vadd.f32 %v2195, %v2227
    %v2244 = vadd.f32 %v2196, %v2228
    %v2245 = vadd.f32 %v2197, %v2229
    %v2246 = vadd.f32 %v2198, %v2230
    %v2247 = vadd.f32 %v2199, %v2231
    %v2248 = vadd.f32 %v2200, %v2232
    %v2249 = vadd.f32 %v2201, %v2233
    %v2250 = vadd.f32 %v2202, %v2234
    %v2251 = vadd.f32 %v2203, %v2235
    %v2252 = vadd.f32 %v2204, %v2236
    %v2253 = vadd.f32 %v2205, %v2237
    %v2254 = vadd.f32 %v2206, %v2238
    %v2255 = vadd.f32 %v2207, %v2239
    %v2256 = vadd.f32 %v2208, %v2240
    %v2257 = vadd.f32 %v2209, %v2241
    %v2258 = vadd.f32 %v2210, %v2242
    %v2259 = vld [vmem:[%s783 + $0x7] sm:$0xff]
    %v2260 = vld [vmem:[%s783 + $0xf] sm:$0xff]
    %v2261 = vld [vmem:[%s783 + $0x27] sm:$0xff]
    %v2262 = vld [vmem:[%s783 + $0x2f] sm:$0xff]
    %v2263 = vld [vmem:[%s783 + $0x47] sm:$0xff]
    %v2264 = vld [vmem:[%s783 + $0x4f] sm:$0xff]
    %v2265 = vld [vmem:[%s783 + $0x67] sm:$0xff]
    %v2266 = vld [vmem:[%s783 + $0x6f] sm:$0xff]
    %v2267 = vld [vmem:[%s783 + $0x247] sm:$0xff]
    %v2268 = vld [vmem:[%s783 + $0x24f] sm:$0xff]
    %v2269 = vld [vmem:[%s783 + $0x267] sm:$0xff]
    %v2270 = vld [vmem:[%s783 + $0x26f] sm:$0xff]
    %v2271 = vld [vmem:[%s783 + $0x287] sm:$0xff]
    %v2272 = vld [vmem:[%s783 + $0x28f] sm:$0xff]
    %v2273 = vld [vmem:[%s783 + $0x2a7] sm:$0xff]
    %v2274 = vld [vmem:[%s783 + $0x2af] sm:$0xff]
    %v2275 = vmul.f32 %v2259, %v1608
    %v2276 = vmul.f32 %v2260, %v1608
    %v2277 = vmul.f32 %v2261, %v1608
    %v2278 = vmul.f32 %v2262, %v1608
    %v2279 = vmul.f32 %v2263, %v1608
    %v2280 = vmul.f32 %v2264, %v1608
    %v2281 = vmul.f32 %v2265, %v1608
    %v2282 = vmul.f32 %v2266, %v1608
    %v2283 = vmul.f32 %v2267, %v1608
    %v2284 = vmul.f32 %v2268, %v1608
    %v2285 = vmul.f32 %v2269, %v1608
    %v2286 = vmul.f32 %v2270, %v1608
    %v2287 = vmul.f32 %v2271, %v1608
    %v2288 = vmul.f32 %v2272, %v1608
    %v2289 = vmul.f32 %v2273, %v1608
    %v2290 = vmul.f32 %v2274, %v1608
    %v2291 = vadd.f32 %v2243, %v2275
    %v2292 = vadd.f32 %v2244, %v2276
    %v2293 = vadd.f32 %v2245, %v2277
    %v2294 = vadd.f32 %v2246, %v2278
    %v2295 = vadd.f32 %v2247, %v2279
    %v2296 = vadd.f32 %v2248, %v2280
    %v2297 = vadd.f32 %v2249, %v2281
    %v2298 = vadd.f32 %v2250, %v2282
    %v2299 = vadd.f32 %v2251, %v2283
    %v2300 = vadd.f32 %v2252, %v2284
    %v2301 = vadd.f32 %v2253, %v2285
    %v2302 = vadd.f32 %v2254, %v2286
    %v2303 = vadd.f32 %v2255, %v2287
    %v2304 = vadd.f32 %v2256, %v2288
    %v2305 = vadd.f32 %v2257, %v2289
    %v2306 = vadd.f32 %v2258, %v2290
    %v2307 = vld [vmem:[%s783 + $0x8] sm:$0xff]
    %v2308 = vld [vmem:[%s783 + $0x10] sm:$0xff]
    %v2309 = vld [vmem:[%s783 + $0x28] sm:$0xff]
    %v2310 = vld [vmem:[%s783 + $0x30] sm:$0xff]
    %v2311 = vld [vmem:[%s783 + $0x48] sm:$0xff]
    %v2312 = vld [vmem:[%s783 + $0x50] sm:$0xff]
    %v2313 = vld [vmem:[%s783 + $0x68] sm:$0xff]
    %v2314 = vld [vmem:[%s783 + $0x70] sm:$0xff]
    %v2315 = vld [vmem:[%s783 + $0x248] sm:$0xff]
    %v2316 = vld [vmem:[%s783 + $0x250] sm:$0xff]
    %v2317 = vld [vmem:[%s783 + $0x268] sm:$0xff]
    %v2318 = vld [vmem:[%s783 + $0x270] sm:$0xff]
    %v2319 = vld [vmem:[%s783 + $0x288] sm:$0xff]
    %v2320 = vld [vmem:[%s783 + $0x290] sm:$0xff]
    %v2321 = vld [vmem:[%s783 + $0x2a8] sm:$0xff]
    %v2322 = vld [vmem:[%s783 + $0x2b0] sm:$0xff]
    %v2323 = vmul.f32 %v2307, %v1660
    %v2324 = vmul.f32 %v2308, %v1660
    %v2325 = vmul.f32 %v2309, %v1660
    %v2326 = vmul.f32 %v2310, %v1660
    %v2327 = vmul.f32 %v2311, %v1660
    %v2328 = vmul.f32 %v2312, %v1660
    %v2329 = vmul.f32 %v2313, %v1660
    %v2330 = vmul.f32 %v2314, %v1660
    %v2331 = vmul.f32 %v2315, %v1660
    %v2332 = vmul.f32 %v2316, %v1660
    %v2333 = vmul.f32 %v2317, %v1660
    %v2334 = vmul.f32 %v2318, %v1660
    %v2335 = vmul.f32 %v2319, %v1660
    %v2336 = vmul.f32 %v2320, %v1660
    %v2337 = vmul.f32 %v2321, %v1660
    %v2338 = vmul.f32 %v2322, %v1660
    %v2339 = vadd.f32 %v2291, %v2323
    %v2340 = vadd.f32 %v2292, %v2324
    %v2341 = vadd.f32 %v2293, %v2325
    %v2342 = vadd.f32 %v2294, %v2326
    %v2343 = vadd.f32 %v2295, %v2327
    %v2344 = vadd.f32 %v2296, %v2328
    %v2345 = vadd.f32 %v2297, %v2329
    %v2346 = vadd.f32 %v2298, %v2330
    %v2347 = vadd.f32 %v2299, %v2331
    %v2348 = vadd.f32 %v2300, %v2332
    %v2349 = vadd.f32 %v2301, %v2333
    %v2350 = vadd.f32 %v2302, %v2334
    %v2351 = vadd.f32 %v2303, %v2335
    %v2352 = vadd.f32 %v2304, %v2336
    %v2353 = vadd.f32 %v2305, %v2337
    %v2354 = vadd.f32 %v2306, %v2338
    %v2355 = vld [vmem:[%s783 + $0x9] sm:$0xff]
    %v2356 = vld [vmem:[%s783 + $0x11] sm:$0xff]
    %v2357 = vld [vmem:[%s783 + $0x29] sm:$0xff]
    %v2358 = vld [vmem:[%s783 + $0x31] sm:$0xff]
    %v2359 = vld [vmem:[%s783 + $0x49] sm:$0xff]
    %v2360 = vld [vmem:[%s783 + $0x51] sm:$0xff]
    %v2361 = vld [vmem:[%s783 + $0x69] sm:$0xff]
    %v2362 = vld [vmem:[%s783 + $0x71] sm:$0xff]
    %v2363 = vld [vmem:[%s783 + $0x249] sm:$0xff]
    %v2364 = vld [vmem:[%s783 + $0x251] sm:$0xff]
    %v2365 = vld [vmem:[%s783 + $0x269] sm:$0xff]
    %v2366 = vld [vmem:[%s783 + $0x271] sm:$0xff]
    %v2367 = vld [vmem:[%s783 + $0x289] sm:$0xff]
    %v2368 = vld [vmem:[%s783 + $0x291] sm:$0xff]
    %v2369 = vld [vmem:[%s783 + $0x2a9] sm:$0xff]
    %v2370 = vld [vmem:[%s783 + $0x2b1] sm:$0xff]
    %v2371 = vmul.f32 %v2355, %v1712
    %v2372 = vmul.f32 %v2356, %v1712
    %v2373 = vmul.f32 %v2357, %v1712
    %v2374 = vmul.f32 %v2358, %v1712
    %v2375 = vmul.f32 %v2359, %v1712
    %v2376 = vmul.f32 %v2360, %v1712
    %v2377 = vmul.f32 %v2361, %v1712
    %v2378 = vmul.f32 %v2362, %v1712
    %v2379 = vmul.f32 %v2363, %v1712
    %v2380 = vmul.f32 %v2364, %v1712
    %v2381 = vmul.f32 %v2365, %v1712
    %v2382 = vmul.f32 %v2366, %v1712
    %v2383 = vmul.f32 %v2367, %v1712
    %v2384 = vmul.f32 %v2368, %v1712
    %v2385 = vmul.f32 %v2369, %v1712
    %v2386 = vmul.f32 %v2370, %v1712
    %v2387 = vadd.f32 %v2339, %v2371
    %v2388 = vadd.f32 %v2340, %v2372
    %v2389 = vadd.f32 %v2341, %v2373
    %v2390 = vadd.f32 %v2342, %v2374
    %v2391 = vadd.f32 %v2343, %v2375
    %v2392 = vadd.f32 %v2344, %v2376
    %v2393 = vadd.f32 %v2345, %v2377
    %v2394 = vadd.f32 %v2346, %v2378
    %v2395 = vadd.f32 %v2347, %v2379
    %v2396 = vadd.f32 %v2348, %v2380
    %v2397 = vadd.f32 %v2349, %v2381
    %v2398 = vadd.f32 %v2350, %v2382
    %v2399 = vadd.f32 %v2351, %v2383
    %v2400 = vadd.f32 %v2352, %v2384
    %v2401 = vadd.f32 %v2353, %v2385
    %v2402 = vadd.f32 %v2354, %v2386
    %s2403 = scalar_lea.vmem [#allocation2], 192
    %v2404 = vld [vmem:[%s2403 + $0x7] sm:$0xff]
    %v2405 = vld [vmem:[%s2403 + $0xf] sm:$0xff]
    %v2406 = vld [vmem:[%s2403 + $0x27] sm:$0xff]
    %v2407 = vld [vmem:[%s2403 + $0x2f] sm:$0xff]
    %v2408 = vld [vmem:[%s2403 + $0x47] sm:$0xff]
    %v2409 = vld [vmem:[%s2403 + $0x4f] sm:$0xff]
    %v2410 = vld [vmem:[%s2403 + $0x67] sm:$0xff]
    %v2411 = vld [vmem:[%s2403 + $0x6f] sm:$0xff]
    %v2412 = vld [vmem:[%s2403 + $0x247] sm:$0xff]
    %v2413 = vld [vmem:[%s2403 + $0x24f] sm:$0xff]
    %v2414 = vld [vmem:[%s2403 + $0x267] sm:$0xff]
    %v2415 = vld [vmem:[%s2403 + $0x26f] sm:$0xff]
    %v2416 = vld [vmem:[%s2403 + $0x287] sm:$0xff]
    %v2417 = vld [vmem:[%s2403 + $0x28f] sm:$0xff]
    %v2418 = vld [vmem:[%s2403 + $0x2a7] sm:$0xff]
    %v2419 = vld [vmem:[%s2403 + $0x2af] sm:$0xff]
    %v2420 = vmul.f32 %v2404, %v1765
    %v2421 = vmul.f32 %v2405, %v1765
    %v2422 = vmul.f32 %v2406, %v1765
    %v2423 = vmul.f32 %v2407, %v1765
    %v2424 = vmul.f32 %v2408, %v1765
    %v2425 = vmul.f32 %v2409, %v1765
    %v2426 = vmul.f32 %v2410, %v1765
    %v2427 = vmul.f32 %v2411, %v1765
    %v2428 = vmul.f32 %v2412, %v1765
    %v2429 = vmul.f32 %v2413, %v1765
    %v2430 = vmul.f32 %v2414, %v1765
    %v2431 = vmul.f32 %v2415, %v1765
    %v2432 = vmul.f32 %v2416, %v1765
    %v2433 = vmul.f32 %v2417, %v1765
    %v2434 = vmul.f32 %v2418, %v1765
    %v2435 = vmul.f32 %v2419, %v1765
    %v2436 = vadd.f32 %v2387, %v2420
    %v2437 = vadd.f32 %v2388, %v2421
    %v2438 = vadd.f32 %v2389, %v2422
    %v2439 = vadd.f32 %v2390, %v2423
    %v2440 = vadd.f32 %v2391, %v2424
    %v2441 = vadd.f32 %v2392, %v2425
    %v2442 = vadd.f32 %v2393, %v2426
    %v2443 = vadd.f32 %v2394, %v2427
    %v2444 = vadd.f32 %v2395, %v2428
    %v2445 = vadd.f32 %v2396, %v2429
    %v2446 = vadd.f32 %v2397, %v2430
    %v2447 = vadd.f32 %v2398, %v2431
    %v2448 = vadd.f32 %v2399, %v2432
    %v2449 = vadd.f32 %v2400, %v2433
    %v2450 = vadd.f32 %v2401, %v2434
    %v2451 = vadd.f32 %v2402, %v2435
    %v2452 = vld [vmem:[%s2403 + $0x8] sm:$0xff]
    %v2453 = vld [vmem:[%s2403 + $0x10] sm:$0xff]
    %v2454 = vld [vmem:[%s2403 + $0x28] sm:$0xff]
    %v2455 = vld [vmem:[%s2403 + $0x30] sm:$0xff]
    %v2456 = vld [vmem:[%s2403 + $0x48] sm:$0xff]
    %v2457 = vld [vmem:[%s2403 + $0x50] sm:$0xff]
    %v2458 = vld [vmem:[%s2403 + $0x68] sm:$0xff]
    %v2459 = vld [vmem:[%s2403 + $0x70] sm:$0xff]
    %v2460 = vld [vmem:[%s2403 + $0x248] sm:$0xff]
    %v2461 = vld [vmem:[%s2403 + $0x250] sm:$0xff]
    %v2462 = vld [vmem:[%s2403 + $0x268] sm:$0xff]
    %v2463 = vld [vmem:[%s2403 + $0x270] sm:$0xff]
    %v2464 = vld [vmem:[%s2403 + $0x288] sm:$0xff]
    %v2465 = vld [vmem:[%s2403 + $0x290] sm:$0xff]
    %v2466 = vld [vmem:[%s2403 + $0x2a8] sm:$0xff]
    %v2467 = vld [vmem:[%s2403 + $0x2b0] sm:$0xff]
    %v2468 = vmul.f32 %v2452, %v1817
    %v2469 = vmul.f32 %v2453, %v1817
    %v2470 = vmul.f32 %v2454, %v1817
    %v2471 = vmul.f32 %v2455, %v1817
    %v2472 = vmul.f32 %v2456, %v1817
    %v2473 = vmul.f32 %v2457, %v1817
    %v2474 = vmul.f32 %v2458, %v1817
    %v2475 = vmul.f32 %v2459, %v1817
    %v2476 = vmul.f32 %v2460, %v1817
    %v2477 = vmul.f32 %v2461, %v1817
    %v2478 = vmul.f32 %v2462, %v1817
    %v2479 = vmul.f32 %v2463, %v1817
    %v2480 = vmul.f32 %v2464, %v1817
    %v2481 = vmul.f32 %v2465, %v1817
    %v2482 = vmul.f32 %v2466, %v1817
    %v2483 = vmul.f32 %v2467, %v1817
    %v2484 = vadd.f32 %v2436, %v2468
    %v2485 = vadd.f32 %v2437, %v2469
    %v2486 = vadd.f32 %v2438, %v2470
    %v2487 = vadd.f32 %v2439, %v2471
    %v2488 = vadd.f32 %v2440, %v2472
    %v2489 = vadd.f32 %v2441, %v2473
    %v2490 = vadd.f32 %v2442, %v2474
    %v2491 = vadd.f32 %v2443, %v2475
    %v2492 = vadd.f32 %v2444, %v2476
    %v2493 = vadd.f32 %v2445, %v2477
    %v2494 = vadd.f32 %v2446, %v2478
    %v2495 = vadd.f32 %v2447, %v2479
    %v2496 = vadd.f32 %v2448, %v2480
    %v2497 = vadd.f32 %v2449, %v2481
    %v2498 = vadd.f32 %v2450, %v2482
    %v2499 = vadd.f32 %v2451, %v2483
    %v2500 = vld [vmem:[%s2403 + $0x9] sm:$0xff]
    %v2501 = vld [vmem:[%s2403 + $0x11] sm:$0xff]
    %v2502 = vld [vmem:[%s2403 + $0x29] sm:$0xff]
    %v2503 = vld [vmem:[%s2403 + $0x31] sm:$0xff]
    %v2504 = vld [vmem:[%s2403 + $0x49] sm:$0xff]
    %v2505 = vld [vmem:[%s2403 + $0x51] sm:$0xff]
    %v2506 = vld [vmem:[%s2403 + $0x69] sm:$0xff]
    %v2507 = vld [vmem:[%s2403 + $0x71] sm:$0xff]
    %v2508 = vld [vmem:[%s2403 + $0x249] sm:$0xff]
    %v2509 = vld [vmem:[%s2403 + $0x251] sm:$0xff]
    %v2510 = vld [vmem:[%s2403 + $0x269] sm:$0xff]
    %v2511 = vld [vmem:[%s2403 + $0x271] sm:$0xff]
    %v2512 = vld [vmem:[%s2403 + $0x289] sm:$0xff]
    %v2513 = vld [vmem:[%s2403 + $0x291] sm:$0xff]
    %v2514 = vld [vmem:[%s2403 + $0x2a9] sm:$0xff]
    %v2515 = vld [vmem:[%s2403 + $0x2b1] sm:$0xff]
    %v2516 = vmul.f32 %v2500, %v1869
    %v2517 = vmul.f32 %v2501, %v1869
    %v2518 = vmul.f32 %v2502, %v1869
    %v2519 = vmul.f32 %v2503, %v1869
    %v2520 = vmul.f32 %v2504, %v1869
    %v2521 = vmul.f32 %v2505, %v1869
    %v2522 = vmul.f32 %v2506, %v1869
    %v2523 = vmul.f32 %v2507, %v1869
    %v2524 = vmul.f32 %v2508, %v1869
    %v2525 = vmul.f32 %v2509, %v1869
    %v2526 = vmul.f32 %v2510, %v1869
    %v2527 = vmul.f32 %v2511, %v1869
    %v2528 = vmul.f32 %v2512, %v1869
    %v2529 = vmul.f32 %v2513, %v1869
    %v2530 = vmul.f32 %v2514, %v1869
    %v2531 = vmul.f32 %v2515, %v1869
    %v2532 = vadd.f32 %v2484, %v2516
    %v2533 = vadd.f32 %v2485, %v2517
    %v2534 = vadd.f32 %v2486, %v2518
    %v2535 = vadd.f32 %v2487, %v2519
    %v2536 = vadd.f32 %v2488, %v2520
    %v2537 = vadd.f32 %v2489, %v2521
    %v2538 = vadd.f32 %v2490, %v2522
    %v2539 = vadd.f32 %v2491, %v2523
    %v2540 = vadd.f32 %v2492, %v2524
    %v2541 = vadd.f32 %v2493, %v2525
    %v2542 = vadd.f32 %v2494, %v2526
    %v2543 = vadd.f32 %v2495, %v2527
    %v2544 = vadd.f32 %v2496, %v2528
    %v2545 = vadd.f32 %v2497, %v2529
    %v2546 = vadd.f32 %v2498, %v2530
    %v2547 = vadd.f32 %v2499, %v2531
    %v2548 = vadd.f32 %v2532, %v1905
    %v2549 = vadd.f32 %v2533, %v1905
    %v2550 = vadd.f32 %v2534, %v1905
    %v2551 = vadd.f32 %v2535, %v1905
    %v2552 = vadd.f32 %v2536, %v1905
    %v2553 = vadd.f32 %v2537, %v1905
    %v2554 = vadd.f32 %v2538, %v1905
    %v2555 = vadd.f32 %v2539, %v1905
    %v2556 = vadd.f32 %v2540, %v1905
    %v2557 = vadd.f32 %v2541, %v1905
    %v2558 = vadd.f32 %v2542, %v1905
    %v2559 = vadd.f32 %v2543, %v1905
    %v2560 = vadd.f32 %v2544, %v1905
    %v2561 = vadd.f32 %v2545, %v1905
    %v2562 = vadd.f32 %v2546, %v1905
    %v2563 = vadd.f32 %v2547, %v1905
    %v2564 = vxor.u32 %v2548, 2147483648
    %v2565 = vxor.u32 %v2549, 2147483648
    %v2566 = vxor.u32 %v2550, 2147483648
    %v2567 = vxor.u32 %v2551, 2147483648
    %v2568 = vxor.u32 %v2552, 2147483648
    %v2569 = vxor.u32 %v2553, 2147483648
    %v2570 = vxor.u32 %v2554, 2147483648
    %v2571 = vxor.u32 %v2555, 2147483648
    %v2572 = vxor.u32 %v2556, 2147483648
    %v2573 = vxor.u32 %v2557, 2147483648
    %v2574 = vxor.u32 %v2558, 2147483648
    %v2575 = vxor.u32 %v2559, 2147483648
    %v2576 = vxor.u32 %v2560, 2147483648
    %v2577 = vxor.u32 %v2561, 2147483648
    %v2578 = vxor.u32 %v2562, 2147483648
    %v2579 = vxor.u32 %v2563, 2147483648
    %v2580 = vmul.f32 %v2564, 1.442695
    %v2581 = vpow.pop %v2580
    %v2582 = vmul.f32 %v2565, 1.442695
    %v2583 = vpow.pop %v2582
    %v2584 = vmul.f32 %v2566, 1.442695
    %v2585 = vpow.pop %v2584
    %v2586 = vmul.f32 %v2567, 1.442695
    %v2587 = vpow.pop %v2586
    %v2588 = vmul.f32 %v2568, 1.442695
    %v2589 = vpow.pop %v2588
    %v2590 = vmul.f32 %v2569, 1.442695
    %v2591 = vpow.pop %v2590
    %v2592 = vmul.f32 %v2570, 1.442695
    %v2593 = vpow.pop %v2592
    %v2594 = vmul.f32 %v2571, 1.442695
    %v2595 = vpow.pop %v2594
    %v2596 = vmul.f32 %v2572, 1.442695
    %v2597 = vpow.pop %v2596
    %v2598 = vmul.f32 %v2573, 1.442695
    %v2599 = vpow.pop %v2598
    %v2600 = vmul.f32 %v2574, 1.442695
    %v2601 = vpow.pop %v2600
    %v2602 = vmul.f32 %v2575, 1.442695
    %v2603 = vpow.pop %v2602
    %v2604 = vmul.f32 %v2576, 1.442695
    %v2605 = vpow.pop %v2604
    %v2606 = vmul.f32 %v2577, 1.442695
    %v2607 = vpow.pop %v2606
    %v2608 = vmul.f32 %v2578, 1.442695
    %v2609 = vpow.pop %v2608
    %v2610 = vmul.f32 %v2579, 1.442695
    %v2611 = vpow.pop %v2610
    %v2612 = vadd.f32 %v2581, 1.0
    %v2613 = vadd.f32 %v2583, 1.0
    %v2614 = vadd.f32 %v2585, 1.0
    %v2615 = vadd.f32 %v2587, 1.0
    %v2616 = vadd.f32 %v2589, 1.0
    %v2617 = vadd.f32 %v2591, 1.0
    %v2618 = vadd.f32 %v2593, 1.0
    %v2619 = vadd.f32 %v2595, 1.0
    %v2620 = vadd.f32 %v2597, 1.0
    %v2621 = vadd.f32 %v2599, 1.0
    %v2622 = vadd.f32 %v2601, 1.0
    %v2623 = vadd.f32 %v2603, 1.0
    %v2624 = vadd.f32 %v2605, 1.0
    %v2625 = vadd.f32 %v2607, 1.0
    %v2626 = vadd.f32 %v2609, 1.0
    %v2627 = vadd.f32 %v2611, 1.0
    %v2628 = vrcp.pop %v2612
    %v2629 = vmul.f32 1.0, %v2628
    %v2630 = vrcp.pop %v2613
    %v2631 = vmul.f32 1.0, %v2630
    %v2632 = vrcp.pop %v2614
    %v2633 = vmul.f32 1.0, %v2632
    %v2634 = vrcp.pop %v2615
    %v2635 = vmul.f32 1.0, %v2634
    %v2636 = vrcp.pop %v2616
    %v2637 = vmul.f32 1.0, %v2636
    %v2638 = vrcp.pop %v2617
    %v2639 = vmul.f32 1.0, %v2638
    %v2640 = vrcp.pop %v2618
    %v2641 = vmul.f32 1.0, %v2640
    %v2642 = vrcp.pop %v2619
    %v2643 = vmul.f32 1.0, %v2642
    %v2644 = vrcp.pop %v2620
    %v2645 = vmul.f32 1.0, %v2644
    %v2646 = vrcp.pop %v2621
    %v2647 = vmul.f32 1.0, %v2646
    %v2648 = vrcp.pop %v2622
    %v2649 = vmul.f32 1.0, %v2648
    %v2650 = vrcp.pop %v2623
    %v2651 = vmul.f32 1.0, %v2650
    %v2652 = vrcp.pop %v2624
    %v2653 = vmul.f32 1.0, %v2652
    %v2654 = vrcp.pop %v2625
    %v2655 = vmul.f32 1.0, %v2654
    %v2656 = vrcp.pop %v2626
    %v2657 = vmul.f32 1.0, %v2656
    %v2658 = vrcp.pop %v2627
    %v2659 = vmul.f32 1.0, %v2658
    %v2660 = vmul.f32 %v2548, %v2629
    %v2661 = vmul.f32 %v2549, %v2631
    %v2662 = vmul.f32 %v2550, %v2633
    %v2663 = vmul.f32 %v2551, %v2635
    %v2664 = vmul.f32 %v2552, %v2637
    %v2665 = vmul.f32 %v2553, %v2639
    %v2666 = vmul.f32 %v2554, %v2641
    %v2667 = vmul.f32 %v2555, %v2643
    %v2668 = vmul.f32 %v2556, %v2645
    %v2669 = vmul.f32 %v2557, %v2647
    %v2670 = vmul.f32 %v2558, %v2649
    %v2671 = vmul.f32 %v2559, %v2651
    %v2672 = vmul.f32 %v2560, %v2653
    %v2673 = vmul.f32 %v2561, %v2655
    %v2674 = vmul.f32 %v2562, %v2657
    %v2675 = vmul.f32 %v2563, %v2659
    %v2676 = vpack.c.bf16 %v2661, %v2660
    %v2677 = vpack.c.bf16 %v2663, %v2662
    %v2678 = vpack.c.bf16 %v2665, %v2664
    %v2679 = vpack.c.bf16 %v2667, %v2666
    %v2680 = vpack.c.bf16 %v2669, %v2668
    %v2681 = vpack.c.bf16 %v2671, %v2670
    %v2682 = vpack.c.bf16 %v2673, %v2672
    %v2683 = vpack.c.bf16 %v2675, %v2674
    %v2692 = vunpack.c.l.b16 %v2676
    %v2693 = vunpack.c.h.b16 %v2676
    %v2694 = vunpack.c.l.b16 %v2677
    %v2695 = vunpack.c.h.b16 %v2677
    %v2696 = vunpack.c.l.b16 %v2678
    %v2697 = vunpack.c.h.b16 %v2678
    %v2698 = vunpack.c.l.b16 %v2679
    %v2699 = vunpack.c.h.b16 %v2679
    %v2700 = vunpack.c.l.b16 %v2680
    %v2701 = vunpack.c.h.b16 %v2680
    %v2702 = vunpack.c.l.b16 %v2681
    %v2703 = vunpack.c.h.b16 %v2681
    %v2704 = vunpack.c.l.b16 %v2682
    %v2705 = vunpack.c.h.b16 %v2682
    %v2706 = vunpack.c.l.b16 %v2683
    %v2707 = vunpack.c.h.b16 %v2683
    %v2708 = vpack.c.b16 %v2692, %v2692
    %v2709 = vpack.c.b16 %v2693, %v2693
    %v2710 = vpack.c.b16 %v2694, %v2694
    %v2711 = vpack.c.b16 %v2695, %v2695
    %v2712 = vpack.c.b16 %v2696, %v2696
    %v2713 = vpack.c.b16 %v2697, %v2697
    %v2714 = vpack.c.b16 %v2698, %v2698
    %v2715 = vpack.c.b16 %v2699, %v2699
    %v2716 = vpack.c.b16 %v2700, %v2700
    %v2717 = vpack.c.b16 %v2701, %v2701
    %v2718 = vpack.c.b16 %v2702, %v2702
    %v2719 = vpack.c.b16 %v2703, %v2703
    %v2720 = vpack.c.b16 %v2704, %v2704
    %v2721 = vpack.c.b16 %v2705, %v2705
    %v2722 = vpack.c.b16 %v2706, %v2706
    %v2723 = vpack.c.b16 %v2707, %v2707
    %s2740 = scalar_lea.vmem [#allocation3], 32
    %2741 = vst [vmem:[%s2740] sm:$0xf] %v2708
    %2742 = vst [vmem:[%s2740 + $0x4] sm:$0xf] %v2709
    %2743 = vst [vmem:[%s2740 + $0x8] sm:$0xf] %v2710
    %2744 = vst [vmem:[%s2740 + $0xc] sm:$0xf] %v2711
    %2745 = vst [vmem:[%s2740 + $0x10] sm:$0xf] %v2712
    %2746 = vst [vmem:[%s2740 + $0x14] sm:$0xf] %v2713
    %2747 = vst [vmem:[%s2740 + $0x18] sm:$0xf] %v2714
    %2748 = vst [vmem:[%s2740 + $0x1c] sm:$0xf] %v2715
    %2749 = vst [vmem:[%s2740 + $0x80] sm:$0xf] %v2716
    %2750 = vst [vmem:[%s2740 + $0x84] sm:$0xf] %v2717
    %2751 = vst [vmem:[%s2740 + $0x88] sm:$0xf] %v2718
    %2752 = vst [vmem:[%s2740 + $0x8c] sm:$0xf] %v2719
    %2753 = vst [vmem:[%s2740 + $0x90] sm:$0xf] %v2720
    %2754 = vst [vmem:[%s2740 + $0x94] sm:$0xf] %v2721
    %2755 = vst [vmem:[%s2740 + $0x98] sm:$0xf] %v2722
    %2756 = vst [vmem:[%s2740 + $0x9c] sm:$0xf] %v2723
    %s2757 = scalar_lea.vmem [#allocation2], 256
    %v2758 = vld [vmem:[%s2757 + $0x7] sm:$0xff]
    %v2759 = vld [vmem:[%s2757 + $0xf] sm:$0xff]
    %v2760 = vld [vmem:[%s2757 + $0x27] sm:$0xff]
    %v2761 = vld [vmem:[%s2757 + $0x2f] sm:$0xff]
    %v2762 = vld [vmem:[%s2757 + $0x47] sm:$0xff]
    %v2763 = vld [vmem:[%s2757 + $0x4f] sm:$0xff]
    %v2764 = vld [vmem:[%s2757 + $0x67] sm:$0xff]
    %v2765 = vld [vmem:[%s2757 + $0x6f] sm:$0xff]
    %v2766 = vld [vmem:[%s2757 + $0x247] sm:$0xff]
    %v2767 = vld [vmem:[%s2757 + $0x24f] sm:$0xff]
    %v2768 = vld [vmem:[%s2757 + $0x267] sm:$0xff]
    %v2769 = vld [vmem:[%s2757 + $0x26f] sm:$0xff]
    %v2770 = vld [vmem:[%s2757 + $0x287] sm:$0xff]
    %v2771 = vld [vmem:[%s2757 + $0x28f] sm:$0xff]
    %v2772 = vld [vmem:[%s2757 + $0x2a7] sm:$0xff]
    %v2773 = vld [vmem:[%s2757 + $0x2af] sm:$0xff]
    %v2774 = vmul.f32 %v2758, %v1452
    %v2775 = vmul.f32 %v2759, %v1452
    %v2776 = vmul.f32 %v2760, %v1452
    %v2777 = vmul.f32 %v2761, %v1452
    %v2778 = vmul.f32 %v2762, %v1452
    %v2779 = vmul.f32 %v2763, %v1452
    %v2780 = vmul.f32 %v2764, %v1452
    %v2781 = vmul.f32 %v2765, %v1452
    %v2782 = vmul.f32 %v2766, %v1452
    %v2783 = vmul.f32 %v2767, %v1452
    %v2784 = vmul.f32 %v2768, %v1452
    %v2785 = vmul.f32 %v2769, %v1452
    %v2786 = vmul.f32 %v2770, %v1452
    %v2787 = vmul.f32 %v2771, %v1452
    %v2788 = vmul.f32 %v2772, %v1452
    %v2789 = vmul.f32 %v2773, %v1452
    %v2790 = vadd.f32 %v2774, 0.0
    %v2791 = vadd.f32 %v2775, 0.0
    %v2792 = vadd.f32 %v2776, 0.0
    %v2793 = vadd.f32 %v2777, 0.0
    %v2794 = vadd.f32 %v2778, 0.0
    %v2795 = vadd.f32 %v2779, 0.0
    %v2796 = vadd.f32 %v2780, 0.0
    %v2797 = vadd.f32 %v2781, 0.0
    %v2798 = vadd.f32 %v2782, 0.0
    %v2799 = vadd.f32 %v2783, 0.0
    %v2800 = vadd.f32 %v2784, 0.0
    %v2801 = vadd.f32 %v2785, 0.0
    %v2802 = vadd.f32 %v2786, 0.0
    %v2803 = vadd.f32 %v2787, 0.0
    %v2804 = vadd.f32 %v2788, 0.0
    %v2805 = vadd.f32 %v2789, 0.0
    %v2806 = vld [vmem:[%s2757 + $0x8] sm:$0xff]
    %v2807 = vld [vmem:[%s2757 + $0x10] sm:$0xff]
    %v2808 = vld [vmem:[%s2757 + $0x28] sm:$0xff]
    %v2809 = vld [vmem:[%s2757 + $0x30] sm:$0xff]
    %v2810 = vld [vmem:[%s2757 + $0x48] sm:$0xff]
    %v2811 = vld [vmem:[%s2757 + $0x50] sm:$0xff]
    %v2812 = vld [vmem:[%s2757 + $0x68] sm:$0xff]
    %v2813 = vld [vmem:[%s2757 + $0x70] sm:$0xff]
    %v2814 = vld [vmem:[%s2757 + $0x248] sm:$0xff]
    %v2815 = vld [vmem:[%s2757 + $0x250] sm:$0xff]
    %v2816 = vld [vmem:[%s2757 + $0x268] sm:$0xff]
    %v2817 = vld [vmem:[%s2757 + $0x270] sm:$0xff]
    %v2818 = vld [vmem:[%s2757 + $0x288] sm:$0xff]
    %v2819 = vld [vmem:[%s2757 + $0x290] sm:$0xff]
    %v2820 = vld [vmem:[%s2757 + $0x2a8] sm:$0xff]
    %v2821 = vld [vmem:[%s2757 + $0x2b0] sm:$0xff]
    %v2822 = vmul.f32 %v2806, %v1504
    %v2823 = vmul.f32 %v2807, %v1504
    %v2824 = vmul.f32 %v2808, %v1504
    %v2825 = vmul.f32 %v2809, %v1504
    %v2826 = vmul.f32 %v2810, %v1504
    %v2827 = vmul.f32 %v2811, %v1504
    %v2828 = vmul.f32 %v2812, %v1504
    %v2829 = vmul.f32 %v2813, %v1504
    %v2830 = vmul.f32 %v2814, %v1504
    %v2831 = vmul.f32 %v2815, %v1504
    %v2832 = vmul.f32 %v2816, %v1504
    %v2833 = vmul.f32 %v2817, %v1504
    %v2834 = vmul.f32 %v2818, %v1504
    %v2835 = vmul.f32 %v2819, %v1504
    %v2836 = vmul.f32 %v2820, %v1504
    %v2837 = vmul.f32 %v2821, %v1504
    %v2838 = vadd.f32 %v2790, %v2822
    %v2839 = vadd.f32 %v2791, %v2823
    %v2840 = vadd.f32 %v2792, %v2824
    %v2841 = vadd.f32 %v2793, %v2825
    %v2842 = vadd.f32 %v2794, %v2826
    %v2843 = vadd.f32 %v2795, %v2827
    %v2844 = vadd.f32 %v2796, %v2828
    %v2845 = vadd.f32 %v2797, %v2829
    %v2846 = vadd.f32 %v2798, %v2830
    %v2847 = vadd.f32 %v2799, %v2831
    %v2848 = vadd.f32 %v2800, %v2832
    %v2849 = vadd.f32 %v2801, %v2833
    %v2850 = vadd.f32 %v2802, %v2834
    %v2851 = vadd.f32 %v2803, %v2835
    %v2852 = vadd.f32 %v2804, %v2836
    %v2853 = vadd.f32 %v2805, %v2837
    %v2854 = vld [vmem:[%s2757 + $0x9] sm:$0xff]
    %v2855 = vld [vmem:[%s2757 + $0x11] sm:$0xff]
    %v2856 = vld [vmem:[%s2757 + $0x29] sm:$0xff]
    %v2857 = vld [vmem:[%s2757 + $0x31] sm:$0xff]
    %v2858 = vld [vmem:[%s2757 + $0x49] sm:$0xff]
    %v2859 = vld [vmem:[%s2757 + $0x51] sm:$0xff]
    %v2860 = vld [vmem:[%s2757 + $0x69] sm:$0xff]
    %v2861 = vld [vmem:[%s2757 + $0x71] sm:$0xff]
    %v2862 = vld [vmem:[%s2757 + $0x249] sm:$0xff]
    %v2863 = vld [vmem:[%s2757 + $0x251] sm:$0xff]
    %v2864 = vld [vmem:[%s2757 + $0x269] sm:$0xff]
    %v2865 = vld [vmem:[%s2757 + $0x271] sm:$0xff]
    %v2866 = vld [vmem:[%s2757 + $0x289] sm:$0xff]
    %v2867 = vld [vmem:[%s2757 + $0x291] sm:$0xff]
    %v2868 = vld [vmem:[%s2757 + $0x2a9] sm:$0xff]
    %v2869 = vld [vmem:[%s2757 + $0x2b1] sm:$0xff]
    %v2870 = vmul.f32 %v2854, %v1556
    %v2871 = vmul.f32 %v2855, %v1556
    %v2872 = vmul.f32 %v2856, %v1556
    %v2873 = vmul.f32 %v2857, %v1556
    %v2874 = vmul.f32 %v2858, %v1556
    %v2875 = vmul.f32 %v2859, %v1556
    %v2876 = vmul.f32 %v2860, %v1556
    %v2877 = vmul.f32 %v2861, %v1556
    %v2878 = vmul.f32 %v2862, %v1556
    %v2879 = vmul.f32 %v2863, %v1556
    %v2880 = vmul.f32 %v2864, %v1556
    %v2881 = vmul.f32 %v2865, %v1556
    %v2882 = vmul.f32 %v2866, %v1556
    %v2883 = vmul.f32 %v2867, %v1556
    %v2884 = vmul.f32 %v2868, %v1556
    %v2885 = vmul.f32 %v2869, %v1556
    %v2886 = vadd.f32 %v2838, %v2870
    %v2887 = vadd.f32 %v2839, %v2871
    %v2888 = vadd.f32 %v2840, %v2872
    %v2889 = vadd.f32 %v2841, %v2873
    %v2890 = vadd.f32 %v2842, %v2874
    %v2891 = vadd.f32 %v2843, %v2875
    %v2892 = vadd.f32 %v2844, %v2876
    %v2893 = vadd.f32 %v2845, %v2877
    %v2894 = vadd.f32 %v2846, %v2878
    %v2895 = vadd.f32 %v2847, %v2879
    %v2896 = vadd.f32 %v2848, %v2880
    %v2897 = vadd.f32 %v2849, %v2881
    %v2898 = vadd.f32 %v2850, %v2882
    %v2899 = vadd.f32 %v2851, %v2883
    %v2900 = vadd.f32 %v2852, %v2884
    %v2901 = vadd.f32 %v2853, %v2885
    %v2902 = vld [vmem:[%s1098 + $0x7] sm:$0xff]
    %v2903 = vld [vmem:[%s1098 + $0xf] sm:$0xff]
    %v2904 = vld [vmem:[%s1098 + $0x27] sm:$0xff]
    %v2905 = vld [vmem:[%s1098 + $0x2f] sm:$0xff]
    %v2906 = vld [vmem:[%s1098 + $0x47] sm:$0xff]
    %v2907 = vld [vmem:[%s1098 + $0x4f] sm:$0xff]
    %v2908 = vld [vmem:[%s1098 + $0x67] sm:$0xff]
    %v2909 = vld [vmem:[%s1098 + $0x6f] sm:$0xff]
    %v2910 = vld [vmem:[%s1098 + $0x247] sm:$0xff]
    %v2911 = vld [vmem:[%s1098 + $0x24f] sm:$0xff]
    %v2912 = vld [vmem:[%s1098 + $0x267] sm:$0xff]
    %v2913 = vld [vmem:[%s1098 + $0x26f] sm:$0xff]
    %v2914 = vld [vmem:[%s1098 + $0x287] sm:$0xff]
    %v2915 = vld [vmem:[%s1098 + $0x28f] sm:$0xff]
    %v2916 = vld [vmem:[%s1098 + $0x2a7] sm:$0xff]
    %v2917 = vld [vmem:[%s1098 + $0x2af] sm:$0xff]
    %v2918 = vmul.f32 %v2902, %v1608
    %v2919 = vmul.f32 %v2903, %v1608
    %v2920 = vmul.f32 %v2904, %v1608
    %v2921 = vmul.f32 %v2905, %v1608
    %v2922 = vmul.f32 %v2906, %v1608
    %v2923 = vmul.f32 %v2907, %v1608
    %v2924 = vmul.f32 %v2908, %v1608
    %v2925 = vmul.f32 %v2909, %v1608
    %v2926 = vmul.f32 %v2910, %v1608
    %v2927 = vmul.f32 %v2911, %v1608
    %v2928 = vmul.f32 %v2912, %v1608
    %v2929 = vmul.f32 %v2913, %v1608
    %v2930 = vmul.f32 %v2914, %v1608
    %v2931 = vmul.f32 %v2915, %v1608
    %v2932 = vmul.f32 %v2916, %v1608
    %v2933 = vmul.f32 %v2917, %v1608
    %v2934 = vadd.f32 %v2886, %v2918
    %v2935 = vadd.f32 %v2887, %v2919
    %v2936 = vadd.f32 %v2888, %v2920
    %v2937 = vadd.f32 %v2889, %v2921
    %v2938 = vadd.f32 %v2890, %v2922
    %v2939 = vadd.f32 %v2891, %v2923
    %v2940 = vadd.f32 %v2892, %v2924
    %v2941 = vadd.f32 %v2893, %v2925
    %v2942 = vadd.f32 %v2894, %v2926
    %v2943 = vadd.f32 %v2895, %v2927
    %v2944 = vadd.f32 %v2896, %v2928
    %v2945 = vadd.f32 %v2897, %v2929
    %v2946 = vadd.f32 %v2898, %v2930
    %v2947 = vadd.f32 %v2899, %v2931
    %v2948 = vadd.f32 %v2900, %v2932
    %v2949 = vadd.f32 %v2901, %v2933
    %v2950 = vld [vmem:[%s1098 + $0x8] sm:$0xff]
    %v2951 = vld [vmem:[%s1098 + $0x10] sm:$0xff]
    %v2952 = vld [vmem:[%s1098 + $0x28] sm:$0xff]
    %v2953 = vld [vmem:[%s1098 + $0x30] sm:$0xff]
    %v2954 = vld [vmem:[%s1098 + $0x48] sm:$0xff]
    %v2955 = vld [vmem:[%s1098 + $0x50] sm:$0xff]
    %v2956 = vld [vmem:[%s1098 + $0x68] sm:$0xff]
    %v2957 = vld [vmem:[%s1098 + $0x70] sm:$0xff]
    %v2958 = vld [vmem:[%s1098 + $0x248] sm:$0xff]
    %v2959 = vld [vmem:[%s1098 + $0x250] sm:$0xff]
    %v2960 = vld [vmem:[%s1098 + $0x268] sm:$0xff]
    %v2961 = vld [vmem:[%s1098 + $0x270] sm:$0xff]
    %v2962 = vld [vmem:[%s1098 + $0x288] sm:$0xff]
    %v2963 = vld [vmem:[%s1098 + $0x290] sm:$0xff]
    %v2964 = vld [vmem:[%s1098 + $0x2a8] sm:$0xff]
    %v2965 = vld [vmem:[%s1098 + $0x2b0] sm:$0xff]
    %v2966 = vmul.f32 %v2950, %v1660
    %v2967 = vmul.f32 %v2951, %v1660
    %v2968 = vmul.f32 %v2952, %v1660
    %v2969 = vmul.f32 %v2953, %v1660
    %v2970 = vmul.f32 %v2954, %v1660
    %v2971 = vmul.f32 %v2955, %v1660
    %v2972 = vmul.f32 %v2956, %v1660
    %v2973 = vmul.f32 %v2957, %v1660
    %v2974 = vmul.f32 %v2958, %v1660
    %v2975 = vmul.f32 %v2959, %v1660
    %v2976 = vmul.f32 %v2960, %v1660
    %v2977 = vmul.f32 %v2961, %v1660
    %v2978 = vmul.f32 %v2962, %v1660
    %v2979 = vmul.f32 %v2963, %v1660
    %v2980 = vmul.f32 %v2964, %v1660
    %v2981 = vmul.f32 %v2965, %v1660
    %v2982 = vadd.f32 %v2934, %v2966
    %v2983 = vadd.f32 %v2935, %v2967
    %v2984 = vadd.f32 %v2936, %v2968
    %v2985 = vadd.f32 %v2937, %v2969
    %v2986 = vadd.f32 %v2938, %v2970
    %v2987 = vadd.f32 %v2939, %v2971
    %v2988 = vadd.f32 %v2940, %v2972
    %v2989 = vadd.f32 %v2941, %v2973
    %v2990 = vadd.f32 %v2942, %v2974
    %v2991 = vadd.f32 %v2943, %v2975
    %v2992 = vadd.f32 %v2944, %v2976
    %v2993 = vadd.f32 %v2945, %v2977
    %v2994 = vadd.f32 %v2946, %v2978
    %v2995 = vadd.f32 %v2947, %v2979
    %v2996 = vadd.f32 %v2948, %v2980
    %v2997 = vadd.f32 %v2949, %v2981
    %v2998 = vld [vmem:[%s1098 + $0x9] sm:$0xff]
    %v2999 = vld [vmem:[%s1098 + $0x11] sm:$0xff]
    %v3000 = vld [vmem:[%s1098 + $0x29] sm:$0xff]
    %v3001 = vld [vmem:[%s1098 + $0x31] sm:$0xff]
    %v3002 = vld [vmem:[%s1098 + $0x49] sm:$0xff]
    %v3003 = vld [vmem:[%s1098 + $0x51] sm:$0xff]
    %v3004 = vld [vmem:[%s1098 + $0x69] sm:$0xff]
    %v3005 = vld [vmem:[%s1098 + $0x71] sm:$0xff]
    %v3006 = vld [vmem:[%s1098 + $0x249] sm:$0xff]
    %v3007 = vld [vmem:[%s1098 + $0x251] sm:$0xff]
    %v3008 = vld [vmem:[%s1098 + $0x269] sm:$0xff]
    %v3009 = vld [vmem:[%s1098 + $0x271] sm:$0xff]
    %v3010 = vld [vmem:[%s1098 + $0x289] sm:$0xff]
    %v3011 = vld [vmem:[%s1098 + $0x291] sm:$0xff]
    %v3012 = vld [vmem:[%s1098 + $0x2a9] sm:$0xff]
    %v3013 = vld [vmem:[%s1098 + $0x2b1] sm:$0xff]
    %v3014 = vmul.f32 %v2998, %v1712
    %v3015 = vmul.f32 %v2999, %v1712
    %v3016 = vmul.f32 %v3000, %v1712
    %v3017 = vmul.f32 %v3001, %v1712
    %v3018 = vmul.f32 %v3002, %v1712
    %v3019 = vmul.f32 %v3003, %v1712
    %v3020 = vmul.f32 %v3004, %v1712
    %v3021 = vmul.f32 %v3005, %v1712
    %v3022 = vmul.f32 %v3006, %v1712
    %v3023 = vmul.f32 %v3007, %v1712
    %v3024 = vmul.f32 %v3008, %v1712
    %v3025 = vmul.f32 %v3009, %v1712
    %v3026 = vmul.f32 %v3010, %v1712
    %v3027 = vmul.f32 %v3011, %v1712
    %v3028 = vmul.f32 %v3012, %v1712
    %v3029 = vmul.f32 %v3013, %v1712
    %v3030 = vadd.f32 %v2982, %v3014
    %v3031 = vadd.f32 %v2983, %v3015
    %v3032 = vadd.f32 %v2984, %v3016
    %v3033 = vadd.f32 %v2985, %v3017
    %v3034 = vadd.f32 %v2986, %v3018
    %v3035 = vadd.f32 %v2987, %v3019
    %v3036 = vadd.f32 %v2988, %v3020
    %v3037 = vadd.f32 %v2989, %v3021
    %v3038 = vadd.f32 %v2990, %v3022
    %v3039 = vadd.f32 %v2991, %v3023
    %v3040 = vadd.f32 %v2992, %v3024
    %v3041 = vadd.f32 %v2993, %v3025
    %v3042 = vadd.f32 %v2994, %v3026
    %v3043 = vadd.f32 %v2995, %v3027
    %v3044 = vadd.f32 %v2996, %v3028
    %v3045 = vadd.f32 %v2997, %v3029
    %s3046 = scalar_lea.vmem [#allocation2], 320
    %v3047 = vld [vmem:[%s3046 + $0x7] sm:$0xff]
    %v3048 = vld [vmem:[%s3046 + $0xf] sm:$0xff]
    %v3049 = vld [vmem:[%s3046 + $0x27] sm:$0xff]
    %v3050 = vld [vmem:[%s3046 + $0x2f] sm:$0xff]
    %v3051 = vld [vmem:[%s3046 + $0x47] sm:$0xff]
    %v3052 = vld [vmem:[%s3046 + $0x4f] sm:$0xff]
    %v3053 = vld [vmem:[%s3046 + $0x67] sm:$0xff]
    %v3054 = vld [vmem:[%s3046 + $0x6f] sm:$0xff]
    %v3055 = vld [vmem:[%s3046 + $0x247] sm:$0xff]
    %v3056 = vld [vmem:[%s3046 + $0x24f] sm:$0xff]
    %v3057 = vld [vmem:[%s3046 + $0x267] sm:$0xff]
    %v3058 = vld [vmem:[%s3046 + $0x26f] sm:$0xff]
    %v3059 = vld [vmem:[%s3046 + $0x287] sm:$0xff]
    %v3060 = vld [vmem:[%s3046 + $0x28f] sm:$0xff]
    %v3061 = vld [vmem:[%s3046 + $0x2a7] sm:$0xff]
    %v3062 = vld [vmem:[%s3046 + $0x2af] sm:$0xff]
    %v3063 = vmul.f32 %v3047, %v1765
    %v3064 = vmul.f32 %v3048, %v1765
    %v3065 = vmul.f32 %v3049, %v1765
    %v3066 = vmul.f32 %v3050, %v1765
    %v3067 = vmul.f32 %v3051, %v1765
    %v3068 = vmul.f32 %v3052, %v1765
    %v3069 = vmul.f32 %v3053, %v1765
    %v3070 = vmul.f32 %v3054, %v1765
    %v3071 = vmul.f32 %v3055, %v1765
    %v3072 = vmul.f32 %v3056, %v1765
    %v3073 = vmul.f32 %v3057, %v1765
    %v3074 = vmul.f32 %v3058, %v1765
    %v3075 = vmul.f32 %v3059, %v1765
    %v3076 = vmul.f32 %v3060, %v1765
    %v3077 = vmul.f32 %v3061, %v1765
    %v3078 = vmul.f32 %v3062, %v1765
    %v3079 = vadd.f32 %v3030, %v3063
    %v3080 = vadd.f32 %v3031, %v3064
    %v3081 = vadd.f32 %v3032, %v3065
    %v3082 = vadd.f32 %v3033, %v3066
    %v3083 = vadd.f32 %v3034, %v3067
    %v3084 = vadd.f32 %v3035, %v3068
    %v3085 = vadd.f32 %v3036, %v3069
    %v3086 = vadd.f32 %v3037, %v3070
    %v3087 = vadd.f32 %v3038, %v3071
    %v3088 = vadd.f32 %v3039, %v3072
    %v3089 = vadd.f32 %v3040, %v3073
    %v3090 = vadd.f32 %v3041, %v3074
    %v3091 = vadd.f32 %v3042, %v3075
    %v3092 = vadd.f32 %v3043, %v3076
    %v3093 = vadd.f32 %v3044, %v3077
    %v3094 = vadd.f32 %v3045, %v3078
    %v3095 = vld [vmem:[%s3046 + $0x8] sm:$0xff]
    %v3096 = vld [vmem:[%s3046 + $0x10] sm:$0xff]
    %v3097 = vld [vmem:[%s3046 + $0x28] sm:$0xff]
    %v3098 = vld [vmem:[%s3046 + $0x30] sm:$0xff]
    %v3099 = vld [vmem:[%s3046 + $0x48] sm:$0xff]
    %v3100 = vld [vmem:[%s3046 + $0x50] sm:$0xff]
    %v3101 = vld [vmem:[%s3046 + $0x68] sm:$0xff]
    %v3102 = vld [vmem:[%s3046 + $0x70] sm:$0xff]
    %v3103 = vld [vmem:[%s3046 + $0x248] sm:$0xff]
    %v3104 = vld [vmem:[%s3046 + $0x250] sm:$0xff]
    %v3105 = vld [vmem:[%s3046 + $0x268] sm:$0xff]
    %v3106 = vld [vmem:[%s3046 + $0x270] sm:$0xff]
    %v3107 = vld [vmem:[%s3046 + $0x288] sm:$0xff]
    %v3108 = vld [vmem:[%s3046 + $0x290] sm:$0xff]
    %v3109 = vld [vmem:[%s3046 + $0x2a8] sm:$0xff]
    %v3110 = vld [vmem:[%s3046 + $0x2b0] sm:$0xff]
    %v3111 = vmul.f32 %v3095, %v1817
    %v3112 = vmul.f32 %v3096, %v1817
    %v3113 = vmul.f32 %v3097, %v1817
    %v3114 = vmul.f32 %v3098, %v1817
    %v3115 = vmul.f32 %v3099, %v1817
    %v3116 = vmul.f32 %v3100, %v1817
    %v3117 = vmul.f32 %v3101, %v1817
    %v3118 = vmul.f32 %v3102, %v1817
    %v3119 = vmul.f32 %v3103, %v1817
    %v3120 = vmul.f32 %v3104, %v1817
    %v3121 = vmul.f32 %v3105, %v1817
    %v3122 = vmul.f32 %v3106, %v1817
    %v3123 = vmul.f32 %v3107, %v1817
    %v3124 = vmul.f32 %v3108, %v1817
    %v3125 = vmul.f32 %v3109, %v1817
    %v3126 = vmul.f32 %v3110, %v1817
    %v3127 = vadd.f32 %v3079, %v3111
    %v3128 = vadd.f32 %v3080, %v3112
    %v3129 = vadd.f32 %v3081, %v3113
    %v3130 = vadd.f32 %v3082, %v3114
    %v3131 = vadd.f32 %v3083, %v3115
    %v3132 = vadd.f32 %v3084, %v3116
    %v3133 = vadd.f32 %v3085, %v3117
    %v3134 = vadd.f32 %v3086, %v3118
    %v3135 = vadd.f32 %v3087, %v3119
    %v3136 = vadd.f32 %v3088, %v3120
    %v3137 = vadd.f32 %v3089, %v3121
    %v3138 = vadd.f32 %v3090, %v3122
    %v3139 = vadd.f32 %v3091, %v3123
    %v3140 = vadd.f32 %v3092, %v3124
    %v3141 = vadd.f32 %v3093, %v3125
    %v3142 = vadd.f32 %v3094, %v3126
    %v3143 = vld [vmem:[%s3046 + $0x9] sm:$0xff]
    %v3144 = vld [vmem:[%s3046 + $0x11] sm:$0xff]
    %v3145 = vld [vmem:[%s3046 + $0x29] sm:$0xff]
    %v3146 = vld [vmem:[%s3046 + $0x31] sm:$0xff]
    %v3147 = vld [vmem:[%s3046 + $0x49] sm:$0xff]
    %v3148 = vld [vmem:[%s3046 + $0x51] sm:$0xff]
    %v3149 = vld [vmem:[%s3046 + $0x69] sm:$0xff]
    %v3150 = vld [vmem:[%s3046 + $0x71] sm:$0xff]
    %v3151 = vld [vmem:[%s3046 + $0x249] sm:$0xff]
    %v3152 = vld [vmem:[%s3046 + $0x251] sm:$0xff]
    %v3153 = vld [vmem:[%s3046 + $0x269] sm:$0xff]
    %v3154 = vld [vmem:[%s3046 + $0x271] sm:$0xff]
    %v3155 = vld [vmem:[%s3046 + $0x289] sm:$0xff]
    %v3156 = vld [vmem:[%s3046 + $0x291] sm:$0xff]
    %v3157 = vld [vmem:[%s3046 + $0x2a9] sm:$0xff]
    %v3158 = vld [vmem:[%s3046 + $0x2b1] sm:$0xff]
    %v3159 = vmul.f32 %v3143, %v1869
    %v3160 = vmul.f32 %v3144, %v1869
    %v3161 = vmul.f32 %v3145, %v1869
    %v3162 = vmul.f32 %v3146, %v1869
    %v3163 = vmul.f32 %v3147, %v1869
    %v3164 = vmul.f32 %v3148, %v1869
    %v3165 = vmul.f32 %v3149, %v1869
    %v3166 = vmul.f32 %v3150, %v1869
    %v3167 = vmul.f32 %v3151, %v1869
    %v3168 = vmul.f32 %v3152, %v1869
    %v3169 = vmul.f32 %v3153, %v1869
    %v3170 = vmul.f32 %v3154, %v1869
    %v3171 = vmul.f32 %v3155, %v1869
    %v3172 = vmul.f32 %v3156, %v1869
    %v3173 = vmul.f32 %v3157, %v1869
    %v3174 = vmul.f32 %v3158, %v1869
    %v3175 = vadd.f32 %v3127, %v3159
    %v3176 = vadd.f32 %v3128, %v3160
    %v3177 = vadd.f32 %v3129, %v3161
    %v3178 = vadd.f32 %v3130, %v3162
    %v3179 = vadd.f32 %v3131, %v3163
    %v3180 = vadd.f32 %v3132, %v3164
    %v3181 = vadd.f32 %v3133, %v3165
    %v3182 = vadd.f32 %v3134, %v3166
    %v3183 = vadd.f32 %v3135, %v3167
    %v3184 = vadd.f32 %v3136, %v3168
    %v3185 = vadd.f32 %v3137, %v3169
    %v3186 = vadd.f32 %v3138, %v3170
    %v3187 = vadd.f32 %v3139, %v3171
    %v3188 = vadd.f32 %v3140, %v3172
    %v3189 = vadd.f32 %v3141, %v3173
    %v3190 = vadd.f32 %v3142, %v3174
    %v3191 = vadd.f32 %v3175, %v1905
    %v3192 = vadd.f32 %v3176, %v1905
    %v3193 = vadd.f32 %v3177, %v1905
    %v3194 = vadd.f32 %v3178, %v1905
    %v3195 = vadd.f32 %v3179, %v1905
    %v3196 = vadd.f32 %v3180, %v1905
    %v3197 = vadd.f32 %v3181, %v1905
    %v3198 = vadd.f32 %v3182, %v1905
    %v3199 = vadd.f32 %v3183, %v1905
    %v3200 = vadd.f32 %v3184, %v1905
    %v3201 = vadd.f32 %v3185, %v1905
    %v3202 = vadd.f32 %v3186, %v1905
    %v3203 = vadd.f32 %v3187, %v1905
    %v3204 = vadd.f32 %v3188, %v1905
    %v3205 = vadd.f32 %v3189, %v1905
    %v3206 = vadd.f32 %v3190, %v1905
    %v3207 = vxor.u32 %v3191, 2147483648
    %v3208 = vxor.u32 %v3192, 2147483648
    %v3209 = vxor.u32 %v3193, 2147483648
    %v3210 = vxor.u32 %v3194, 2147483648
    %v3211 = vxor.u32 %v3195, 2147483648
    %v3212 = vxor.u32 %v3196, 2147483648
    %v3213 = vxor.u32 %v3197, 2147483648
    %v3214 = vxor.u32 %v3198, 2147483648
    %v3215 = vxor.u32 %v3199, 2147483648
    %v3216 = vxor.u32 %v3200, 2147483648
    %v3217 = vxor.u32 %v3201, 2147483648
    %v3218 = vxor.u32 %v3202, 2147483648
    %v3219 = vxor.u32 %v3203, 2147483648
    %v3220 = vxor.u32 %v3204, 2147483648
    %v3221 = vxor.u32 %v3205, 2147483648
    %v3222 = vxor.u32 %v3206, 2147483648
    %v3223 = vmul.f32 %v3207, 1.442695
    %v3224 = vpow.pop %v3223
    %v3225 = vmul.f32 %v3208, 1.442695
    %v3226 = vpow.pop %v3225
    %v3227 = vmul.f32 %v3209, 1.442695
    %v3228 = vpow.pop %v3227
    %v3229 = vmul.f32 %v3210, 1.442695
    %v3230 = vpow.pop %v3229
    %v3231 = vmul.f32 %v3211, 1.442695
    %v3232 = vpow.pop %v3231
    %v3233 = vmul.f32 %v3212, 1.442695
    %v3234 = vpow.pop %v3233
    %v3235 = vmul.f32 %v3213, 1.442695
    %v3236 = vpow.pop %v3235
    %v3237 = vmul.f32 %v3214, 1.442695
    %v3238 = vpow.pop %v3237
    %v3239 = vmul.f32 %v3215, 1.442695
    %v3240 = vpow.pop %v3239
    %v3241 = vmul.f32 %v3216, 1.442695
    %v3242 = vpow.pop %v3241
    %v3243 = vmul.f32 %v3217, 1.442695
    %v3244 = vpow.pop %v3243
    %v3245 = vmul.f32 %v3218, 1.442695
    %v3246 = vpow.pop %v3245
    %v3247 = vmul.f32 %v3219, 1.442695
    %v3248 = vpow.pop %v3247
    %v3249 = vmul.f32 %v3220, 1.442695
    %v3250 = vpow.pop %v3249
    %v3251 = vmul.f32 %v3221, 1.442695
    %v3252 = vpow.pop %v3251
    %v3253 = vmul.f32 %v3222, 1.442695
    %v3254 = vpow.pop %v3253
    %v3255 = vadd.f32 %v3224, 1.0
    %v3256 = vadd.f32 %v3226, 1.0
    %v3257 = vadd.f32 %v3228, 1.0
    %v3258 = vadd.f32 %v3230, 1.0
    %v3259 = vadd.f32 %v3232, 1.0
    %v3260 = vadd.f32 %v3234, 1.0
    %v3261 = vadd.f32 %v3236, 1.0
    %v3262 = vadd.f32 %v3238, 1.0
    %v3263 = vadd.f32 %v3240, 1.0
    %v3264 = vadd.f32 %v3242, 1.0
    %v3265 = vadd.f32 %v3244, 1.0
    %v3266 = vadd.f32 %v3246, 1.0
    %v3267 = vadd.f32 %v3248, 1.0
    %v3268 = vadd.f32 %v3250, 1.0
    %v3269 = vadd.f32 %v3252, 1.0
    %v3270 = vadd.f32 %v3254, 1.0
    %v3271 = vrcp.pop %v3255
    %v3272 = vmul.f32 1.0, %v3271
    %v3273 = vrcp.pop %v3256
    %v3274 = vmul.f32 1.0, %v3273
    %v3275 = vrcp.pop %v3257
    %v3276 = vmul.f32 1.0, %v3275
    %v3277 = vrcp.pop %v3258
    %v3278 = vmul.f32 1.0, %v3277
    %v3279 = vrcp.pop %v3259
    %v3280 = vmul.f32 1.0, %v3279
    %v3281 = vrcp.pop %v3260
    %v3282 = vmul.f32 1.0, %v3281
    %v3283 = vrcp.pop %v3261
    %v3284 = vmul.f32 1.0, %v3283
    %v3285 = vrcp.pop %v3262
    %v3286 = vmul.f32 1.0, %v3285
    %v3287 = vrcp.pop %v3263
    %v3288 = vmul.f32 1.0, %v3287
    %v3289 = vrcp.pop %v3264
    %v3290 = vmul.f32 1.0, %v3289
    %v3291 = vrcp.pop %v3265
    %v3292 = vmul.f32 1.0, %v3291
    %v3293 = vrcp.pop %v3266
    %v3294 = vmul.f32 1.0, %v3293
    %v3295 = vrcp.pop %v3267
    %v3296 = vmul.f32 1.0, %v3295
    %v3297 = vrcp.pop %v3268
    %v3298 = vmul.f32 1.0, %v3297
    %v3299 = vrcp.pop %v3269
    %v3300 = vmul.f32 1.0, %v3299
    %v3301 = vrcp.pop %v3270
    %v3302 = vmul.f32 1.0, %v3301
    %v3303 = vmul.f32 %v3191, %v3272
    %v3304 = vmul.f32 %v3192, %v3274
    %v3305 = vmul.f32 %v3193, %v3276
    %v3306 = vmul.f32 %v3194, %v3278
    %v3307 = vmul.f32 %v3195, %v3280
    %v3308 = vmul.f32 %v3196, %v3282
    %v3309 = vmul.f32 %v3197, %v3284
    %v3310 = vmul.f32 %v3198, %v3286
    %v3311 = vmul.f32 %v3199, %v3288
    %v3312 = vmul.f32 %v3200, %v3290
    %v3313 = vmul.f32 %v3201, %v3292
    %v3314 = vmul.f32 %v3202, %v3294
    %v3315 = vmul.f32 %v3203, %v3296
    %v3316 = vmul.f32 %v3204, %v3298
    %v3317 = vmul.f32 %v3205, %v3300
    %v3318 = vmul.f32 %v3206, %v3302
    %v3319 = vpack.c.bf16 %v3304, %v3303
    %v3320 = vpack.c.bf16 %v3306, %v3305
    %v3321 = vpack.c.bf16 %v3308, %v3307
    %v3322 = vpack.c.bf16 %v3310, %v3309
    %v3323 = vpack.c.bf16 %v3312, %v3311
    %v3324 = vpack.c.bf16 %v3314, %v3313
    %v3325 = vpack.c.bf16 %v3316, %v3315
    %v3326 = vpack.c.bf16 %v3318, %v3317
    %v3335 = vunpack.c.l.b16 %v3319
    %v3336 = vunpack.c.h.b16 %v3319
    %v3337 = vunpack.c.l.b16 %v3320
    %v3338 = vunpack.c.h.b16 %v3320
    %v3339 = vunpack.c.l.b16 %v3321
    %v3340 = vunpack.c.h.b16 %v3321
    %v3341 = vunpack.c.l.b16 %v3322
    %v3342 = vunpack.c.h.b16 %v3322
    %v3343 = vunpack.c.l.b16 %v3323
    %v3344 = vunpack.c.h.b16 %v3323
    %v3345 = vunpack.c.l.b16 %v3324
    %v3346 = vunpack.c.h.b16 %v3324
    %v3347 = vunpack.c.l.b16 %v3325
    %v3348 = vunpack.c.h.b16 %v3325
    %v3349 = vunpack.c.l.b16 %v3326
    %v3350 = vunpack.c.h.b16 %v3326
    %v3351 = vpack.c.b16 %v3335, %v3335
    %v3352 = vpack.c.b16 %v3336, %v3336
    %v3353 = vpack.c.b16 %v3337, %v3337
    %v3354 = vpack.c.b16 %v3338, %v3338
    %v3355 = vpack.c.b16 %v3339, %v3339
    %v3356 = vpack.c.b16 %v3340, %v3340
    %v3357 = vpack.c.b16 %v3341, %v3341
    %v3358 = vpack.c.b16 %v3342, %v3342
    %v3359 = vpack.c.b16 %v3343, %v3343
    %v3360 = vpack.c.b16 %v3344, %v3344
    %v3361 = vpack.c.b16 %v3345, %v3345
    %v3362 = vpack.c.b16 %v3346, %v3346
    %v3363 = vpack.c.b16 %v3347, %v3347
    %v3364 = vpack.c.b16 %v3348, %v3348
    %v3365 = vpack.c.b16 %v3349, %v3349
    %v3366 = vpack.c.b16 %v3350, %v3350
    %s3383 = scalar_lea.vmem [#allocation3], 64
    %3384 = vst [vmem:[%s3383] sm:$0xf] %v3351
    %3385 = vst [vmem:[%s3383 + $0x4] sm:$0xf] %v3352
    %3386 = vst [vmem:[%s3383 + $0x8] sm:$0xf] %v3353
    %3387 = vst [vmem:[%s3383 + $0xc] sm:$0xf] %v3354
    %3388 = vst [vmem:[%s3383 + $0x10] sm:$0xf] %v3355
    %3389 = vst [vmem:[%s3383 + $0x14] sm:$0xf] %v3356
    %3390 = vst [vmem:[%s3383 + $0x18] sm:$0xf] %v3357
    %3391 = vst [vmem:[%s3383 + $0x1c] sm:$0xf] %v3358
    %3392 = vst [vmem:[%s3383 + $0x80] sm:$0xf] %v3359
    %3393 = vst [vmem:[%s3383 + $0x84] sm:$0xf] %v3360
    %3394 = vst [vmem:[%s3383 + $0x88] sm:$0xf] %v3361
    %3395 = vst [vmem:[%s3383 + $0x8c] sm:$0xf] %v3362
    %3396 = vst [vmem:[%s3383 + $0x90] sm:$0xf] %v3363
    %3397 = vst [vmem:[%s3383 + $0x94] sm:$0xf] %v3364
    %3398 = vst [vmem:[%s3383 + $0x98] sm:$0xf] %v3365
    %3399 = vst [vmem:[%s3383 + $0x9c] sm:$0xf] %v3366
    %s3400 = scalar_lea.vmem [#allocation2], 384
    %v3401 = vld [vmem:[%s3400 + $0x7] sm:$0xff]
    %v3402 = vld [vmem:[%s3400 + $0xf] sm:$0xff]
    %v3403 = vld [vmem:[%s3400 + $0x27] sm:$0xff]
    %v3404 = vld [vmem:[%s3400 + $0x2f] sm:$0xff]
    %v3405 = vld [vmem:[%s3400 + $0x47] sm:$0xff]
    %v3406 = vld [vmem:[%s3400 + $0x4f] sm:$0xff]
    %v3407 = vld [vmem:[%s3400 + $0x67] sm:$0xff]
    %v3408 = vld [vmem:[%s3400 + $0x6f] sm:$0xff]
    %v3409 = vld [vmem:[%s3400 + $0x247] sm:$0xff]
    %v3410 = vld [vmem:[%s3400 + $0x24f] sm:$0xff]
    %v3411 = vld [vmem:[%s3400 + $0x267] sm:$0xff]
    %v3412 = vld [vmem:[%s3400 + $0x26f] sm:$0xff]
    %v3413 = vld [vmem:[%s3400 + $0x287] sm:$0xff]
    %v3414 = vld [vmem:[%s3400 + $0x28f] sm:$0xff]
    %v3415 = vld [vmem:[%s3400 + $0x2a7] sm:$0xff]
    %v3416 = vld [vmem:[%s3400 + $0x2af] sm:$0xff]
    %v3417 = vmul.f32 %v3401, %v1452
    %v3418 = vmul.f32 %v3402, %v1452
    %v3419 = vmul.f32 %v3403, %v1452
    %v3420 = vmul.f32 %v3404, %v1452
    %v3421 = vmul.f32 %v3405, %v1452
    %v3422 = vmul.f32 %v3406, %v1452
    %v3423 = vmul.f32 %v3407, %v1452
    %v3424 = vmul.f32 %v3408, %v1452
    %v3425 = vmul.f32 %v3409, %v1452
    %v3426 = vmul.f32 %v3410, %v1452
    %v3427 = vmul.f32 %v3411, %v1452
    %v3428 = vmul.f32 %v3412, %v1452
    %v3429 = vmul.f32 %v3413, %v1452
    %v3430 = vmul.f32 %v3414, %v1452
    %v3431 = vmul.f32 %v3415, %v1452
    %v3432 = vmul.f32 %v3416, %v1452
    %v3433 = vadd.f32 %v3417, 0.0
    %v3434 = vadd.f32 %v3418, 0.0
    %v3435 = vadd.f32 %v3419, 0.0
    %v3436 = vadd.f32 %v3420, 0.0
    %v3437 = vadd.f32 %v3421, 0.0
    %v3438 = vadd.f32 %v3422, 0.0
    %v3439 = vadd.f32 %v3423, 0.0
    %v3440 = vadd.f32 %v3424, 0.0
    %v3441 = vadd.f32 %v3425, 0.0
    %v3442 = vadd.f32 %v3426, 0.0
    %v3443 = vadd.f32 %v3427, 0.0
    %v3444 = vadd.f32 %v3428, 0.0
    %v3445 = vadd.f32 %v3429, 0.0
    %v3446 = vadd.f32 %v3430, 0.0
    %v3447 = vadd.f32 %v3431, 0.0
    %v3448 = vadd.f32 %v3432, 0.0
    %v3449 = vld [vmem:[%s3400 + $0x8] sm:$0xff]
    %v3450 = vld [vmem:[%s3400 + $0x10] sm:$0xff]
    %v3451 = vld [vmem:[%s3400 + $0x28] sm:$0xff]
    %v3452 = vld [vmem:[%s3400 + $0x30] sm:$0xff]
    %v3453 = vld [vmem:[%s3400 + $0x48] sm:$0xff]
    %v3454 = vld [vmem:[%s3400 + $0x50] sm:$0xff]
    %v3455 = vld [vmem:[%s3400 + $0x68] sm:$0xff]
    %v3456 = vld [vmem:[%s3400 + $0x70] sm:$0xff]
    %v3457 = vld [vmem:[%s3400 + $0x248] sm:$0xff]
    %v3458 = vld [vmem:[%s3400 + $0x250] sm:$0xff]
    %v3459 = vld [vmem:[%s3400 + $0x268] sm:$0xff]
    %v3460 = vld [vmem:[%s3400 + $0x270] sm:$0xff]
    %v3461 = vld [vmem:[%s3400 + $0x288] sm:$0xff]
    %v3462 = vld [vmem:[%s3400 + $0x290] sm:$0xff]
    %v3463 = vld [vmem:[%s3400 + $0x2a8] sm:$0xff]
    %v3464 = vld [vmem:[%s3400 + $0x2b0] sm:$0xff]
    %v3465 = vmul.f32 %v3449, %v1504
    %v3466 = vmul.f32 %v3450, %v1504
    %v3467 = vmul.f32 %v3451, %v1504
    %v3468 = vmul.f32 %v3452, %v1504
    %v3469 = vmul.f32 %v3453, %v1504
    %v3470 = vmul.f32 %v3454, %v1504
    %v3471 = vmul.f32 %v3455, %v1504
    %v3472 = vmul.f32 %v3456, %v1504
    %v3473 = vmul.f32 %v3457, %v1504
    %v3474 = vmul.f32 %v3458, %v1504
    %v3475 = vmul.f32 %v3459, %v1504
    %v3476 = vmul.f32 %v3460, %v1504
    %v3477 = vmul.f32 %v3461, %v1504
    %v3478 = vmul.f32 %v3462, %v1504
    %v3479 = vmul.f32 %v3463, %v1504
    %v3480 = vmul.f32 %v3464, %v1504
    %v3481 = vadd.f32 %v3433, %v3465
    %v3482 = vadd.f32 %v3434, %v3466
    %v3483 = vadd.f32 %v3435, %v3467
    %v3484 = vadd.f32 %v3436, %v3468
    %v3485 = vadd.f32 %v3437, %v3469
    %v3486 = vadd.f32 %v3438, %v3470
    %v3487 = vadd.f32 %v3439, %v3471
    %v3488 = vadd.f32 %v3440, %v3472
    %v3489 = vadd.f32 %v3441, %v3473
    %v3490 = vadd.f32 %v3442, %v3474
    %v3491 = vadd.f32 %v3443, %v3475
    %v3492 = vadd.f32 %v3444, %v3476
    %v3493 = vadd.f32 %v3445, %v3477
    %v3494 = vadd.f32 %v3446, %v3478
    %v3495 = vadd.f32 %v3447, %v3479
    %v3496 = vadd.f32 %v3448, %v3480
    %v3497 = vld [vmem:[%s3400 + $0x9] sm:$0xff]
    %v3498 = vld [vmem:[%s3400 + $0x11] sm:$0xff]
    %v3499 = vld [vmem:[%s3400 + $0x29] sm:$0xff]
    %v3500 = vld [vmem:[%s3400 + $0x31] sm:$0xff]
    %v3501 = vld [vmem:[%s3400 + $0x49] sm:$0xff]
    %v3502 = vld [vmem:[%s3400 + $0x51] sm:$0xff]
    %v3503 = vld [vmem:[%s3400 + $0x69] sm:$0xff]
    %v3504 = vld [vmem:[%s3400 + $0x71] sm:$0xff]
    %v3505 = vld [vmem:[%s3400 + $0x249] sm:$0xff]
    %v3506 = vld [vmem:[%s3400 + $0x251] sm:$0xff]
    %v3507 = vld [vmem:[%s3400 + $0x269] sm:$0xff]
    %v3508 = vld [vmem:[%s3400 + $0x271] sm:$0xff]
    %v3509 = vld [vmem:[%s3400 + $0x289] sm:$0xff]
    %v3510 = vld [vmem:[%s3400 + $0x291] sm:$0xff]
    %v3511 = vld [vmem:[%s3400 + $0x2a9] sm:$0xff]
    %v3512 = vld [vmem:[%s3400 + $0x2b1] sm:$0xff]
    %v3513 = vmul.f32 %v3497, %v1556
    %v3514 = vmul.f32 %v3498, %v1556
    %v3515 = vmul.f32 %v3499, %v1556
    %v3516 = vmul.f32 %v3500, %v1556
    %v3517 = vmul.f32 %v3501, %v1556
    %v3518 = vmul.f32 %v3502, %v1556
    %v3519 = vmul.f32 %v3503, %v1556
    %v3520 = vmul.f32 %v3504, %v1556
    %v3521 = vmul.f32 %v3505, %v1556
    %v3522 = vmul.f32 %v3506, %v1556
    %v3523 = vmul.f32 %v3507, %v1556
    %v3524 = vmul.f32 %v3508, %v1556
    %v3525 = vmul.f32 %v3509, %v1556
    %v3526 = vmul.f32 %v3510, %v1556
    %v3527 = vmul.f32 %v3511, %v1556
    %v3528 = vmul.f32 %v3512, %v1556
    %v3529 = vadd.f32 %v3481, %v3513
    %v3530 = vadd.f32 %v3482, %v3514
    %v3531 = vadd.f32 %v3483, %v3515
    %v3532 = vadd.f32 %v3484, %v3516
    %v3533 = vadd.f32 %v3485, %v3517
    %v3534 = vadd.f32 %v3486, %v3518
    %v3535 = vadd.f32 %v3487, %v3519
    %v3536 = vadd.f32 %v3488, %v3520
    %v3537 = vadd.f32 %v3489, %v3521
    %v3538 = vadd.f32 %v3490, %v3522
    %v3539 = vadd.f32 %v3491, %v3523
    %v3540 = vadd.f32 %v3492, %v3524
    %v3541 = vadd.f32 %v3493, %v3525
    %v3542 = vadd.f32 %v3494, %v3526
    %v3543 = vadd.f32 %v3495, %v3527
    %v3544 = vadd.f32 %v3496, %v3528
    %v3545 = vld [vmem:[%s1413 + $0x7] sm:$0xff]
    %v3546 = vld [vmem:[%s1413 + $0xf] sm:$0xff]
    %v3547 = vld [vmem:[%s1413 + $0x27] sm:$0xff]
    %v3548 = vld [vmem:[%s1413 + $0x2f] sm:$0xff]
    %v3549 = vld [vmem:[%s1413 + $0x47] sm:$0xff]
    %v3550 = vld [vmem:[%s1413 + $0x4f] sm:$0xff]
    %v3551 = vld [vmem:[%s1413 + $0x67] sm:$0xff]
    %v3552 = vld [vmem:[%s1413 + $0x6f] sm:$0xff]
    %v3553 = vld [vmem:[%s1413 + $0x247] sm:$0xff]
    %v3554 = vld [vmem:[%s1413 + $0x24f] sm:$0xff]
    %v3555 = vld [vmem:[%s1413 + $0x267] sm:$0xff]
    %v3556 = vld [vmem:[%s1413 + $0x26f] sm:$0xff]
    %v3557 = vld [vmem:[%s1413 + $0x287] sm:$0xff]
    %v3558 = vld [vmem:[%s1413 + $0x28f] sm:$0xff]
    %v3559 = vld [vmem:[%s1413 + $0x2a7] sm:$0xff]
    %v3560 = vld [vmem:[%s1413 + $0x2af] sm:$0xff]
    %v3561 = vmul.f32 %v3545, %v1608
    %v3562 = vmul.f32 %v3546, %v1608
    %v3563 = vmul.f32 %v3547, %v1608
    %v3564 = vmul.f32 %v3548, %v1608
    %v3565 = vmul.f32 %v3549, %v1608
    %v3566 = vmul.f32 %v3550, %v1608
    %v3567 = vmul.f32 %v3551, %v1608
    %v3568 = vmul.f32 %v3552, %v1608
    %v3569 = vmul.f32 %v3553, %v1608
    %v3570 = vmul.f32 %v3554, %v1608
    %v3571 = vmul.f32 %v3555, %v1608
    %v3572 = vmul.f32 %v3556, %v1608
    %v3573 = vmul.f32 %v3557, %v1608
    %v3574 = vmul.f32 %v3558, %v1608
    %v3575 = vmul.f32 %v3559, %v1608
    %v3576 = vmul.f32 %v3560, %v1608
    %v3577 = vadd.f32 %v3529, %v3561
    %v3578 = vadd.f32 %v3530, %v3562
    %v3579 = vadd.f32 %v3531, %v3563
    %v3580 = vadd.f32 %v3532, %v3564
    %v3581 = vadd.f32 %v3533, %v3565
    %v3582 = vadd.f32 %v3534, %v3566
    %v3583 = vadd.f32 %v3535, %v3567
    %v3584 = vadd.f32 %v3536, %v3568
    %v3585 = vadd.f32 %v3537, %v3569
    %v3586 = vadd.f32 %v3538, %v3570
    %v3587 = vadd.f32 %v3539, %v3571
    %v3588 = vadd.f32 %v3540, %v3572
    %v3589 = vadd.f32 %v3541, %v3573
    %v3590 = vadd.f32 %v3542, %v3574
    %v3591 = vadd.f32 %v3543, %v3575
    %v3592 = vadd.f32 %v3544, %v3576
    %v3593 = vld [vmem:[%s1413 + $0x8] sm:$0xff]
    %v3594 = vld [vmem:[%s1413 + $0x10] sm:$0xff]
    %v3595 = vld [vmem:[%s1413 + $0x28] sm:$0xff]
    %v3596 = vld [vmem:[%s1413 + $0x30] sm:$0xff]
    %v3597 = vld [vmem:[%s1413 + $0x48] sm:$0xff]
    %v3598 = vld [vmem:[%s1413 + $0x50] sm:$0xff]
    %v3599 = vld [vmem:[%s1413 + $0x68] sm:$0xff]
    %v3600 = vld [vmem:[%s1413 + $0x70] sm:$0xff]
    %v3601 = vld [vmem:[%s1413 + $0x248] sm:$0xff]
    %v3602 = vld [vmem:[%s1413 + $0x250] sm:$0xff]
    %v3603 = vld [vmem:[%s1413 + $0x268] sm:$0xff]
    %v3604 = vld [vmem:[%s1413 + $0x270] sm:$0xff]
    %v3605 = vld [vmem:[%s1413 + $0x288] sm:$0xff]
    %v3606 = vld [vmem:[%s1413 + $0x290] sm:$0xff]
    %v3607 = vld [vmem:[%s1413 + $0x2a8] sm:$0xff]
    %v3608 = vld [vmem:[%s1413 + $0x2b0] sm:$0xff]
    %v3609 = vmul.f32 %v3593, %v1660
    %v3610 = vmul.f32 %v3594, %v1660
    %v3611 = vmul.f32 %v3595, %v1660
    %v3612 = vmul.f32 %v3596, %v1660
    %v3613 = vmul.f32 %v3597, %v1660
    %v3614 = vmul.f32 %v3598, %v1660
    %v3615 = vmul.f32 %v3599, %v1660
    %v3616 = vmul.f32 %v3600, %v1660
    %v3617 = vmul.f32 %v3601, %v1660
    %v3618 = vmul.f32 %v3602, %v1660
    %v3619 = vmul.f32 %v3603, %v1660
    %v3620 = vmul.f32 %v3604, %v1660
    %v3621 = vmul.f32 %v3605, %v1660
    %v3622 = vmul.f32 %v3606, %v1660
    %v3623 = vmul.f32 %v3607, %v1660
    %v3624 = vmul.f32 %v3608, %v1660
    %v3625 = vadd.f32 %v3577, %v3609
    %v3626 = vadd.f32 %v3578, %v3610
    %v3627 = vadd.f32 %v3579, %v3611
    %v3628 = vadd.f32 %v3580, %v3612
    %v3629 = vadd.f32 %v3581, %v3613
    %v3630 = vadd.f32 %v3582, %v3614
    %v3631 = vadd.f32 %v3583, %v3615
    %v3632 = vadd.f32 %v3584, %v3616
    %v3633 = vadd.f32 %v3585, %v3617
    %v3634 = vadd.f32 %v3586, %v3618
    %v3635 = vadd.f32 %v3587, %v3619
    %v3636 = vadd.f32 %v3588, %v3620
    %v3637 = vadd.f32 %v3589, %v3621
    %v3638 = vadd.f32 %v3590, %v3622
    %v3639 = vadd.f32 %v3591, %v3623
    %v3640 = vadd.f32 %v3592, %v3624
    %v3641 = vld [vmem:[%s1413 + $0x9] sm:$0xff]
    %v3642 = vld [vmem:[%s1413 + $0x11] sm:$0xff]
    %v3643 = vld [vmem:[%s1413 + $0x29] sm:$0xff]
    %v3644 = vld [vmem:[%s1413 + $0x31] sm:$0xff]
    %v3645 = vld [vmem:[%s1413 + $0x49] sm:$0xff]
    %v3646 = vld [vmem:[%s1413 + $0x51] sm:$0xff]
    %v3647 = vld [vmem:[%s1413 + $0x69] sm:$0xff]
    %v3648 = vld [vmem:[%s1413 + $0x71] sm:$0xff]
    %v3649 = vld [vmem:[%s1413 + $0x249] sm:$0xff]
    %v3650 = vld [vmem:[%s1413 + $0x251] sm:$0xff]
    %v3651 = vld [vmem:[%s1413 + $0x269] sm:$0xff]
    %v3652 = vld [vmem:[%s1413 + $0x271] sm:$0xff]
    %v3653 = vld [vmem:[%s1413 + $0x289] sm:$0xff]
    %v3654 = vld [vmem:[%s1413 + $0x291] sm:$0xff]
    %v3655 = vld [vmem:[%s1413 + $0x2a9] sm:$0xff]
    %v3656 = vld [vmem:[%s1413 + $0x2b1] sm:$0xff]
    %v3657 = vmul.f32 %v3641, %v1712
    %v3658 = vmul.f32 %v3642, %v1712
    %v3659 = vmul.f32 %v3643, %v1712
    %v3660 = vmul.f32 %v3644, %v1712
    %v3661 = vmul.f32 %v3645, %v1712
    %v3662 = vmul.f32 %v3646, %v1712
    %v3663 = vmul.f32 %v3647, %v1712
    %v3664 = vmul.f32 %v3648, %v1712
    %v3665 = vmul.f32 %v3649, %v1712
    %v3666 = vmul.f32 %v3650, %v1712
    %v3667 = vmul.f32 %v3651, %v1712
    %v3668 = vmul.f32 %v3652, %v1712
    %v3669 = vmul.f32 %v3653, %v1712
    %v3670 = vmul.f32 %v3654, %v1712
    %v3671 = vmul.f32 %v3655, %v1712
    %v3672 = vmul.f32 %v3656, %v1712
    %v3673 = vadd.f32 %v3625, %v3657
    %v3674 = vadd.f32 %v3626, %v3658
    %v3675 = vadd.f32 %v3627, %v3659
    %v3676 = vadd.f32 %v3628, %v3660
    %v3677 = vadd.f32 %v3629, %v3661
    %v3678 = vadd.f32 %v3630, %v3662
    %v3679 = vadd.f32 %v3631, %v3663
    %v3680 = vadd.f32 %v3632, %v3664
    %v3681 = vadd.f32 %v3633, %v3665
    %v3682 = vadd.f32 %v3634, %v3666
    %v3683 = vadd.f32 %v3635, %v3667
    %v3684 = vadd.f32 %v3636, %v3668
    %v3685 = vadd.f32 %v3637, %v3669
    %v3686 = vadd.f32 %v3638, %v3670
    %v3687 = vadd.f32 %v3639, %v3671
    %v3688 = vadd.f32 %v3640, %v3672
    %s3689 = scalar_lea.vmem [#allocation2], 448
    %v3690 = vld [vmem:[%s3689 + $0x7] sm:$0xff]
    %v3691 = vld [vmem:[%s3689 + $0xf] sm:$0xff]
    %v3692 = vld [vmem:[%s3689 + $0x27] sm:$0xff]
    %v3693 = vld [vmem:[%s3689 + $0x2f] sm:$0xff]
    %v3694 = vld [vmem:[%s3689 + $0x47] sm:$0xff]
    %v3695 = vld [vmem:[%s3689 + $0x4f] sm:$0xff]
    %v3696 = vld [vmem:[%s3689 + $0x67] sm:$0xff]
    %v3697 = vld [vmem:[%s3689 + $0x6f] sm:$0xff]
    %v3698 = vld [vmem:[%s3689 + $0x247] sm:$0xff]
    %v3699 = vld [vmem:[%s3689 + $0x24f] sm:$0xff]
    %v3700 = vld [vmem:[%s3689 + $0x267] sm:$0xff]
    %v3701 = vld [vmem:[%s3689 + $0x26f] sm:$0xff]
    %v3702 = vld [vmem:[%s3689 + $0x287] sm:$0xff]
    %v3703 = vld [vmem:[%s3689 + $0x28f] sm:$0xff]
    %v3704 = vld [vmem:[%s3689 + $0x2a7] sm:$0xff]
    %v3705 = vld [vmem:[%s3689 + $0x2af] sm:$0xff]
    %v3706 = vmul.f32 %v3690, %v1765
    %v3707 = vmul.f32 %v3691, %v1765
    %v3708 = vmul.f32 %v3692, %v1765
    %v3709 = vmul.f32 %v3693, %v1765
    %v3710 = vmul.f32 %v3694, %v1765
    %v3711 = vmul.f32 %v3695, %v1765
    %v3712 = vmul.f32 %v3696, %v1765
    %v3713 = vmul.f32 %v3697, %v1765
    %v3714 = vmul.f32 %v3698, %v1765
    %v3715 = vmul.f32 %v3699, %v1765
    %v3716 = vmul.f32 %v3700, %v1765
    %v3717 = vmul.f32 %v3701, %v1765
    %v3718 = vmul.f32 %v3702, %v1765
    %v3719 = vmul.f32 %v3703, %v1765
    %v3720 = vmul.f32 %v3704, %v1765
    %v3721 = vmul.f32 %v3705, %v1765
    %v3722 = vadd.f32 %v3673, %v3706
    %v3723 = vadd.f32 %v3674, %v3707
    %v3724 = vadd.f32 %v3675, %v3708
    %v3725 = vadd.f32 %v3676, %v3709
    %v3726 = vadd.f32 %v3677, %v3710
    %v3727 = vadd.f32 %v3678, %v3711
    %v3728 = vadd.f32 %v3679, %v3712
    %v3729 = vadd.f32 %v3680, %v3713
    %v3730 = vadd.f32 %v3681, %v3714
    %v3731 = vadd.f32 %v3682, %v3715
    %v3732 = vadd.f32 %v3683, %v3716
    %v3733 = vadd.f32 %v3684, %v3717
    %v3734 = vadd.f32 %v3685, %v3718
    %v3735 = vadd.f32 %v3686, %v3719
    %v3736 = vadd.f32 %v3687, %v3720
    %v3737 = vadd.f32 %v3688, %v3721
    %v3738 = vld [vmem:[%s3689 + $0x8] sm:$0xff]
    %v3739 = vld [vmem:[%s3689 + $0x10] sm:$0xff]
    %v3740 = vld [vmem:[%s3689 + $0x28] sm:$0xff]
    %v3741 = vld [vmem:[%s3689 + $0x30] sm:$0xff]
    %v3742 = vld [vmem:[%s3689 + $0x48] sm:$0xff]
    %v3743 = vld [vmem:[%s3689 + $0x50] sm:$0xff]
    %v3744 = vld [vmem:[%s3689 + $0x68] sm:$0xff]
    %v3745 = vld [vmem:[%s3689 + $0x70] sm:$0xff]
    %v3746 = vld [vmem:[%s3689 + $0x248] sm:$0xff]
    %v3747 = vld [vmem:[%s3689 + $0x250] sm:$0xff]
    %v3748 = vld [vmem:[%s3689 + $0x268] sm:$0xff]
    %v3749 = vld [vmem:[%s3689 + $0x270] sm:$0xff]
    %v3750 = vld [vmem:[%s3689 + $0x288] sm:$0xff]
    %v3751 = vld [vmem:[%s3689 + $0x290] sm:$0xff]
    %v3752 = vld [vmem:[%s3689 + $0x2a8] sm:$0xff]
    %v3753 = vld [vmem:[%s3689 + $0x2b0] sm:$0xff]
    %v3754 = vmul.f32 %v3738, %v1817
    %v3755 = vmul.f32 %v3739, %v1817
    %v3756 = vmul.f32 %v3740, %v1817
    %v3757 = vmul.f32 %v3741, %v1817
    %v3758 = vmul.f32 %v3742, %v1817
    %v3759 = vmul.f32 %v3743, %v1817
    %v3760 = vmul.f32 %v3744, %v1817
    %v3761 = vmul.f32 %v3745, %v1817
    %v3762 = vmul.f32 %v3746, %v1817
    %v3763 = vmul.f32 %v3747, %v1817
    %v3764 = vmul.f32 %v3748, %v1817
    %v3765 = vmul.f32 %v3749, %v1817
    %v3766 = vmul.f32 %v3750, %v1817
    %v3767 = vmul.f32 %v3751, %v1817
    %v3768 = vmul.f32 %v3752, %v1817
    %v3769 = vmul.f32 %v3753, %v1817
    %v3770 = vadd.f32 %v3722, %v3754
    %v3771 = vadd.f32 %v3723, %v3755
    %v3772 = vadd.f32 %v3724, %v3756
    %v3773 = vadd.f32 %v3725, %v3757
    %v3774 = vadd.f32 %v3726, %v3758
    %v3775 = vadd.f32 %v3727, %v3759
    %v3776 = vadd.f32 %v3728, %v3760
    %v3777 = vadd.f32 %v3729, %v3761
    %v3778 = vadd.f32 %v3730, %v3762
    %v3779 = vadd.f32 %v3731, %v3763
    %v3780 = vadd.f32 %v3732, %v3764
    %v3781 = vadd.f32 %v3733, %v3765
    %v3782 = vadd.f32 %v3734, %v3766
    %v3783 = vadd.f32 %v3735, %v3767
    %v3784 = vadd.f32 %v3736, %v3768
    %v3785 = vadd.f32 %v3737, %v3769
    %v3786 = vld [vmem:[%s3689 + $0x9] sm:$0xff]
    %v3787 = vld [vmem:[%s3689 + $0x11] sm:$0xff]
    %v3788 = vld [vmem:[%s3689 + $0x29] sm:$0xff]
    %v3789 = vld [vmem:[%s3689 + $0x31] sm:$0xff]
    %v3790 = vld [vmem:[%s3689 + $0x49] sm:$0xff]
    %v3791 = vld [vmem:[%s3689 + $0x51] sm:$0xff]
    %v3792 = vld [vmem:[%s3689 + $0x69] sm:$0xff]
    %v3793 = vld [vmem:[%s3689 + $0x71] sm:$0xff]
    %v3794 = vld [vmem:[%s3689 + $0x249] sm:$0xff]
    %v3795 = vld [vmem:[%s3689 + $0x251] sm:$0xff]
    %v3796 = vld [vmem:[%s3689 + $0x269] sm:$0xff]
    %v3797 = vld [vmem:[%s3689 + $0x271] sm:$0xff]
    %v3798 = vld [vmem:[%s3689 + $0x289] sm:$0xff]
    %v3799 = vld [vmem:[%s3689 + $0x291] sm:$0xff]
    %v3800 = vld [vmem:[%s3689 + $0x2a9] sm:$0xff]
    %v3801 = vld [vmem:[%s3689 + $0x2b1] sm:$0xff]
    %v3802 = vmul.f32 %v3786, %v1869
    %v3803 = vmul.f32 %v3787, %v1869
    %v3804 = vmul.f32 %v3788, %v1869
    %v3805 = vmul.f32 %v3789, %v1869
    %v3806 = vmul.f32 %v3790, %v1869
    %v3807 = vmul.f32 %v3791, %v1869
    %v3808 = vmul.f32 %v3792, %v1869
    %v3809 = vmul.f32 %v3793, %v1869
    %v3810 = vmul.f32 %v3794, %v1869
    %v3811 = vmul.f32 %v3795, %v1869
    %v3812 = vmul.f32 %v3796, %v1869
    %v3813 = vmul.f32 %v3797, %v1869
    %v3814 = vmul.f32 %v3798, %v1869
    %v3815 = vmul.f32 %v3799, %v1869
    %v3816 = vmul.f32 %v3800, %v1869
    %v3817 = vmul.f32 %v3801, %v1869
    %v3818 = vadd.f32 %v3770, %v3802
    %v3819 = vadd.f32 %v3771, %v3803
    %v3820 = vadd.f32 %v3772, %v3804
    %v3821 = vadd.f32 %v3773, %v3805
    %v3822 = vadd.f32 %v3774, %v3806
    %v3823 = vadd.f32 %v3775, %v3807
    %v3824 = vadd.f32 %v3776, %v3808
    %v3825 = vadd.f32 %v3777, %v3809
    %v3826 = vadd.f32 %v3778, %v3810
    %v3827 = vadd.f32 %v3779, %v3811
    %v3828 = vadd.f32 %v3780, %v3812
    %v3829 = vadd.f32 %v3781, %v3813
    %v3830 = vadd.f32 %v3782, %v3814
    %v3831 = vadd.f32 %v3783, %v3815
    %v3832 = vadd.f32 %v3784, %v3816
    %v3833 = vadd.f32 %v3785, %v3817
    %v3834 = vadd.f32 %v3818, %v1905
    %v3835 = vadd.f32 %v3819, %v1905
    %v3836 = vadd.f32 %v3820, %v1905
    %v3837 = vadd.f32 %v3821, %v1905
    %v3838 = vadd.f32 %v3822, %v1905
    %v3839 = vadd.f32 %v3823, %v1905
    %v3840 = vadd.f32 %v3824, %v1905
    %v3841 = vadd.f32 %v3825, %v1905
    %v3842 = vadd.f32 %v3826, %v1905
    %v3843 = vadd.f32 %v3827, %v1905
    %v3844 = vadd.f32 %v3828, %v1905
    %v3845 = vadd.f32 %v3829, %v1905
    %v3846 = vadd.f32 %v3830, %v1905
    %v3847 = vadd.f32 %v3831, %v1905
    %v3848 = vadd.f32 %v3832, %v1905
    %v3849 = vadd.f32 %v3833, %v1905
    %v3850 = vxor.u32 %v3834, 2147483648
    %v3851 = vxor.u32 %v3835, 2147483648
    %v3852 = vxor.u32 %v3836, 2147483648
    %v3853 = vxor.u32 %v3837, 2147483648
    %v3854 = vxor.u32 %v3838, 2147483648
    %v3855 = vxor.u32 %v3839, 2147483648
    %v3856 = vxor.u32 %v3840, 2147483648
    %v3857 = vxor.u32 %v3841, 2147483648
    %v3858 = vxor.u32 %v3842, 2147483648
    %v3859 = vxor.u32 %v3843, 2147483648
    %v3860 = vxor.u32 %v3844, 2147483648
    %v3861 = vxor.u32 %v3845, 2147483648
    %v3862 = vxor.u32 %v3846, 2147483648
    %v3863 = vxor.u32 %v3847, 2147483648
    %v3864 = vxor.u32 %v3848, 2147483648
    %v3865 = vxor.u32 %v3849, 2147483648
    %v3866 = vmul.f32 %v3850, 1.442695
    %v3867 = vpow.pop %v3866
    %v3868 = vmul.f32 %v3851, 1.442695
    %v3869 = vpow.pop %v3868
    %v3870 = vmul.f32 %v3852, 1.442695
    %v3871 = vpow.pop %v3870
    %v3872 = vmul.f32 %v3853, 1.442695
    %v3873 = vpow.pop %v3872
    %v3874 = vmul.f32 %v3854, 1.442695
    %v3875 = vpow.pop %v3874
    %v3876 = vmul.f32 %v3855, 1.442695
    %v3877 = vpow.pop %v3876
    %v3878 = vmul.f32 %v3856, 1.442695
    %v3879 = vpow.pop %v3878
    %v3880 = vmul.f32 %v3857, 1.442695
    %v3881 = vpow.pop %v3880
    %v3882 = vmul.f32 %v3858, 1.442695
    %v3883 = vpow.pop %v3882
    %v3884 = vmul.f32 %v3859, 1.442695
    %v3885 = vpow.pop %v3884
    %v3886 = vmul.f32 %v3860, 1.442695
    %v3887 = vpow.pop %v3886
    %v3888 = vmul.f32 %v3861, 1.442695
    %v3889 = vpow.pop %v3888
    %v3890 = vmul.f32 %v3862, 1.442695
    %v3891 = vpow.pop %v3890
    %v3892 = vmul.f32 %v3863, 1.442695
    %v3893 = vpow.pop %v3892
    %v3894 = vmul.f32 %v3864, 1.442695
    %v3895 = vpow.pop %v3894
    %v3896 = vmul.f32 %v3865, 1.442695
    %v3897 = vpow.pop %v3896
    %v3898 = vadd.f32 %v3867, 1.0
    %v3899 = vadd.f32 %v3869, 1.0
    %v3900 = vadd.f32 %v3871, 1.0
    %v3901 = vadd.f32 %v3873, 1.0
    %v3902 = vadd.f32 %v3875, 1.0
    %v3903 = vadd.f32 %v3877, 1.0
    %v3904 = vadd.f32 %v3879, 1.0
    %v3905 = vadd.f32 %v3881, 1.0
    %v3906 = vadd.f32 %v3883, 1.0
    %v3907 = vadd.f32 %v3885, 1.0
    %v3908 = vadd.f32 %v3887, 1.0
    %v3909 = vadd.f32 %v3889, 1.0
    %v3910 = vadd.f32 %v3891, 1.0
    %v3911 = vadd.f32 %v3893, 1.0
    %v3912 = vadd.f32 %v3895, 1.0
    %v3913 = vadd.f32 %v3897, 1.0
    %v3914 = vrcp.pop %v3898
    %v3915 = vmul.f32 1.0, %v3914
    %v3916 = vrcp.pop %v3899
    %v3917 = vmul.f32 1.0, %v3916
    %v3918 = vrcp.pop %v3900
    %v3919 = vmul.f32 1.0, %v3918
    %v3920 = vrcp.pop %v3901
    %v3921 = vmul.f32 1.0, %v3920
    %v3922 = vrcp.pop %v3902
    %v3923 = vmul.f32 1.0, %v3922
    %v3924 = vrcp.pop %v3903
    %v3925 = vmul.f32 1.0, %v3924
    %v3926 = vrcp.pop %v3904
    %v3927 = vmul.f32 1.0, %v3926
    %v3928 = vrcp.pop %v3905
    %v3929 = vmul.f32 1.0, %v3928
    %v3930 = vrcp.pop %v3906
    %v3931 = vmul.f32 1.0, %v3930
    %v3932 = vrcp.pop %v3907
    %v3933 = vmul.f32 1.0, %v3932
    %v3934 = vrcp.pop %v3908
    %v3935 = vmul.f32 1.0, %v3934
    %v3936 = vrcp.pop %v3909
    %v3937 = vmul.f32 1.0, %v3936
    %v3938 = vrcp.pop %v3910
    %v3939 = vmul.f32 1.0, %v3938
    %v3940 = vrcp.pop %v3911
    %v3941 = vmul.f32 1.0, %v3940
    %v3942 = vrcp.pop %v3912
    %v3943 = vmul.f32 1.0, %v3942
    %v3944 = vrcp.pop %v3913
    %v3945 = vmul.f32 1.0, %v3944
    %v3946 = vmul.f32 %v3834, %v3915
    %v3947 = vmul.f32 %v3835, %v3917
    %v3948 = vmul.f32 %v3836, %v3919
    %v3949 = vmul.f32 %v3837, %v3921
    %v3950 = vmul.f32 %v3838, %v3923
    %v3951 = vmul.f32 %v3839, %v3925
    %v3952 = vmul.f32 %v3840, %v3927
    %v3953 = vmul.f32 %v3841, %v3929
    %v3954 = vmul.f32 %v3842, %v3931
    %v3955 = vmul.f32 %v3843, %v3933
    %v3956 = vmul.f32 %v3844, %v3935
    %v3957 = vmul.f32 %v3845, %v3937
    %v3958 = vmul.f32 %v3846, %v3939
    %v3959 = vmul.f32 %v3847, %v3941
    %v3960 = vmul.f32 %v3848, %v3943
    %v3961 = vmul.f32 %v3849, %v3945
    %v3962 = vpack.c.bf16 %v3947, %v3946
    %v3963 = vpack.c.bf16 %v3949, %v3948
    %v3964 = vpack.c.bf16 %v3951, %v3950
    %v3965 = vpack.c.bf16 %v3953, %v3952
    %v3966 = vpack.c.bf16 %v3955, %v3954
    %v3967 = vpack.c.bf16 %v3957, %v3956
    %v3968 = vpack.c.bf16 %v3959, %v3958
    %v3969 = vpack.c.bf16 %v3961, %v3960
    %v3978 = vunpack.c.l.b16 %v3962
    %v3979 = vunpack.c.h.b16 %v3962
    %v3980 = vunpack.c.l.b16 %v3963
    %v3981 = vunpack.c.h.b16 %v3963
    %v3982 = vunpack.c.l.b16 %v3964
    %v3983 = vunpack.c.h.b16 %v3964
    %v3984 = vunpack.c.l.b16 %v3965
    %v3985 = vunpack.c.h.b16 %v3965
    %v3986 = vunpack.c.l.b16 %v3966
    %v3987 = vunpack.c.h.b16 %v3966
    %v3988 = vunpack.c.l.b16 %v3967
    %v3989 = vunpack.c.h.b16 %v3967
    %v3990 = vunpack.c.l.b16 %v3968
    %v3991 = vunpack.c.h.b16 %v3968
    %v3992 = vunpack.c.l.b16 %v3969
    %v3993 = vunpack.c.h.b16 %v3969
    %v3994 = vpack.c.b16 %v3978, %v3978
    %v3995 = vpack.c.b16 %v3979, %v3979
    %v3996 = vpack.c.b16 %v3980, %v3980
    %v3997 = vpack.c.b16 %v3981, %v3981
    %v3998 = vpack.c.b16 %v3982, %v3982
    %v3999 = vpack.c.b16 %v3983, %v3983
    %v4000 = vpack.c.b16 %v3984, %v3984
    %v4001 = vpack.c.b16 %v3985, %v3985
    %v4002 = vpack.c.b16 %v3986, %v3986
    %v4003 = vpack.c.b16 %v3987, %v3987
    %v4004 = vpack.c.b16 %v3988, %v3988
    %v4005 = vpack.c.b16 %v3989, %v3989
    %v4006 = vpack.c.b16 %v3990, %v3990
    %v4007 = vpack.c.b16 %v3991, %v3991
    %v4008 = vpack.c.b16 %v3992, %v3992
    %v4009 = vpack.c.b16 %v3993, %v3993
    %s4026 = scalar_lea.vmem [#allocation3], 96
    %4027 = vst [vmem:[%s4026] sm:$0xf] %v3994
    %4028 = vst [vmem:[%s4026 + $0x4] sm:$0xf] %v3995
    %4029 = vst [vmem:[%s4026 + $0x8] sm:$0xf] %v3996
    %4030 = vst [vmem:[%s4026 + $0xc] sm:$0xf] %v3997
    %4031 = vst [vmem:[%s4026 + $0x10] sm:$0xf] %v3998
    %4032 = vst [vmem:[%s4026 + $0x14] sm:$0xf] %v3999
    %4033 = vst [vmem:[%s4026 + $0x18] sm:$0xf] %v4000
    %4034 = vst [vmem:[%s4026 + $0x1c] sm:$0xf] %v4001
    %4035 = vst [vmem:[%s4026 + $0x80] sm:$0xf] %v4002
    %4036 = vst [vmem:[%s4026 + $0x84] sm:$0xf] %v4003
    %4037 = vst [vmem:[%s4026 + $0x88] sm:$0xf] %v4004
    %4038 = vst [vmem:[%s4026 + $0x8c] sm:$0xf] %v4005
    %4039 = vst [vmem:[%s4026 + $0x90] sm:$0xf] %v4006
    %4040 = vst [vmem:[%s4026 + $0x94] sm:$0xf] %v4007
    %4041 = vst [vmem:[%s4026 + $0x98] sm:$0xf] %v4008
    %4042 = vst [vmem:[%s4026 + $0x9c] sm:$0xf] %v4009
    %v4043 = vld [vmem:[#allocation3] sm:$0xf]
    %v4044 = vld [vmem:[#allocation3 + $0x4] sm:$0xf]
    %v4045 = vld [vmem:[#allocation3 + $0x8] sm:$0xf]
    %v4046 = vld [vmem:[#allocation3 + $0xc] sm:$0xf]
    %v4047 = vld [vmem:[#allocation3 + $0x10] sm:$0xf]
    %v4048 = vld [vmem:[#allocation3 + $0x14] sm:$0xf]
    %v4049 = vld [vmem:[#allocation3 + $0x18] sm:$0xf]
    %v4050 = vld [vmem:[#allocation3 + $0x1c] sm:$0xf]
    %v4051 = vld [vmem:[#allocation3 + $0x80] sm:$0xf]
    %v4052 = vld [vmem:[#allocation3 + $0x84] sm:$0xf]
    %v4053 = vld [vmem:[#allocation3 + $0x88] sm:$0xf]
    %v4054 = vld [vmem:[#allocation3 + $0x8c] sm:$0xf]
    %v4055 = vld [vmem:[#allocation3 + $0x90] sm:$0xf]
    %v4056 = vld [vmem:[#allocation3 + $0x94] sm:$0xf]
    %v4057 = vld [vmem:[#allocation3 + $0x98] sm:$0xf]
    %v4058 = vld [vmem:[#allocation3 + $0x9c] sm:$0xf]
    %v4059 = vld [vmem:[#allocation10] sm:$0xf]
    %v4060 = vld [vmem:[#allocation10 + $0x4] sm:$0xf]
    %v4061 = vld [vmem:[#allocation10 + $0x8] sm:$0xf]
    %v4062 = vld [vmem:[#allocation10 + $0xc] sm:$0xf]
    %v4063 = vld [vmem:[#allocation10 + $0x10] sm:$0xf]
    %v4064 = vld [vmem:[#allocation10 + $0x14] sm:$0xf]
    %v4065 = vld [vmem:[#allocation10 + $0x18] sm:$0xf]
    %v4066 = vld [vmem:[#allocation10 + $0x1c] sm:$0xf]
    %v4067 = vld [vmem:[#allocation10 + $0x20] sm:$0xf]
    %v4068 = vld [vmem:[#allocation10 + $0x24] sm:$0xf]
    %v4069 = vld [vmem:[#allocation10 + $0x28] sm:$0xf]
    %v4070 = vld [vmem:[#allocation10 + $0x2c] sm:$0xf]
    %v4071 = vld [vmem:[#allocation10 + $0x30] sm:$0xf]
    %v4072 = vld [vmem:[#allocation10 + $0x34] sm:$0xf]
    %v4073 = vld [vmem:[#allocation10 + $0x38] sm:$0xf]
    %v4074 = vld [vmem:[#allocation10 + $0x3c] sm:$0xf]
    %v4075 = vlaneseq
    %v4076 = vshrl.u32 %v4075, 7
    %v4077 = vsub.s32 2, %v4076
    %v4078 = vrot.slane %v77, %v4077
    %v4095 = vunpack.c.l.b16 %v4043
    %v4096 = vunpack.c.l.b16 %v4044
    %v4097 = vunpack.c.l.b16 %v4045
    %v4098 = vunpack.c.l.b16 %v4046
    %v4099 = vunpack.c.l.b16 %v4047
    %v4100 = vunpack.c.l.b16 %v4048
    %v4101 = vunpack.c.l.b16 %v4049
    %v4102 = vunpack.c.l.b16 %v4050
    %v4103 = vunpack.c.l.b16 %v4051
    %v4104 = vunpack.c.l.b16 %v4052
    %v4105 = vunpack.c.l.b16 %v4053
    %v4106 = vunpack.c.l.b16 %v4054
    %v4107 = vunpack.c.l.b16 %v4055
    %v4108 = vunpack.c.l.b16 %v4056
    %v4109 = vunpack.c.l.b16 %v4057
    %v4110 = vunpack.c.l.b16 %v4058
    %v4111 = vpack.c.b16 %v4096, %v4095
    %v4112 = vpack.c.b16 %v4098, %v4097
    %v4113 = vpack.c.b16 %v4100, %v4099
    %v4114 = vpack.c.b16 %v4102, %v4101
    %v4115 = vpack.c.b16 %v4104, %v4103
    %v4116 = vpack.c.b16 %v4106, %v4105
    %v4117 = vpack.c.b16 %v4108, %v4107
    %v4118 = vpack.c.b16 %v4110, %v4109
    %v4143 = vunpack.c.l.b16 %v4059
    %v4144 = vunpack.c.l.b16 %v4060
    %v4145 = vunpack.c.l.b16 %v4061
    %v4146 = vunpack.c.l.b16 %v4062
    %v4147 = vunpack.c.l.b16 %v4063
    %v4148 = vunpack.c.l.b16 %v4064
    %v4149 = vunpack.c.l.b16 %v4065
    %v4150 = vunpack.c.l.b16 %v4066
    %v4151 = vunpack.c.l.b16 %v4067
    %v4152 = vunpack.c.l.b16 %v4068
    %v4153 = vunpack.c.l.b16 %v4069
    %v4154 = vunpack.c.l.b16 %v4070
    %v4155 = vunpack.c.l.b16 %v4071
    %v4156 = vunpack.c.l.b16 %v4072
    %v4157 = vunpack.c.l.b16 %v4073
    %v4158 = vunpack.c.l.b16 %v4074
    %v4159 = vpack.c.b16 %v4144, %v4143
    %v4160 = vpack.c.b16 %v4146, %v4145
    %v4161 = vpack.c.b16 %v4148, %v4147
    %v4162 = vpack.c.b16 %v4150, %v4149
    %v4163 = vpack.c.b16 %v4152, %v4151
    %v4164 = vpack.c.b16 %v4154, %v4153
    %v4165 = vpack.c.b16 %v4156, %v4155
    %v4166 = vpack.c.b16 %v4158, %v4157
    %4175 = vmatprep.subr.bf16.mxu0 0
    %4176 = vmatpush1.bf16.msra.mxu0 %v4166
    %4177 = vmatprep.subr.bf16.mxu0 0
    %4178 = vmatpush1.bf16.msra.mxu0 %v4165
    %4179 = vmatprep.subr.bf16.mxu0 0
    %4180 = vmatpush1.bf16.msra.mxu0 %v4164
    %4181 = vmatprep.subr.bf16.mxu0 0
    %4182 = vmatpush1.bf16.msra.mxu0 %v4163
    %4183 = vmatprep.subr.bf16.mxu0 0
    %4184 = vmatpush1.bf16.msra.mxu0 %v4162
    %4185 = vmatprep.subr.bf16.mxu0 0
    %4186 = vmatpush1.bf16.msra.mxu0 %v4161
    %4187 = vmatprep.subr.bf16.mxu0 0
    %4188 = vmatpush1.bf16.msra.mxu0 %v4160
    %4189 = vmatprep.subr.bf16.mxu0 0
    %4190 = vmatpush1.bf16.msra.mxu0 %v4159
    %4191 = vmatprep.subr.bf16.mxu0 0
    %4192 = vmatpush2.bf16.msra.mxu0 0
    %4193 = vmatprep.subr.bf16.mxu0 0
    %4194 = vmatpush2.bf16.msra.mxu0 0
    %4195 = vmatprep.subr.bf16.mxu0 0
    %4196 = vmatpush2.bf16.msra.mxu0 0
    %4197 = vmatprep.subr.bf16.mxu0 0
    %4198 = vmatpush2.bf16.msra.mxu0 0
    %4199 = vmatprep.subr.bf16.mxu0 0
    %4200 = vmatpush2.bf16.msra.mxu0 0
    %4201 = vmatprep.subr.bf16.mxu0 0
    %4202 = vmatpush2.bf16.msra.mxu0 0
    %4203 = vmatprep.subr.bf16.mxu0 0
    %4204 = vmatpush2.bf16.msra.mxu0 0
    %4205 = vmatprep.subr.bf16.mxu0 0
    %4206 = vmatpush2.bf16.msra.mxu0 0
    %4207 = vmatprep.mubr.bf16.mxu0 0
    %4208 = vmatmul.mubr.bf16.gmra.mxu0 %v4111
    %v4209 = vpop.f32.mrf.mxu0
    %v4210 = vadd.f32 %v4078, %v4209
    %v4211 = vpop.f32.mrf.mxu0
    %v4212 = vpop.f32.mrf.mxu0
    %v4213 = vadd.f32 %v4078, %v4212
    %v4214 = vpop.f32.mrf.mxu0
    %4215 = vmatprep.mubr.bf16.mxu0 0
    %4216 = vmatmul.mubr.bf16.gmra.mxu0 %v4112
    %v4217 = vpop.f32.mrf.mxu0
    %v4218 = vadd.f32 %v4078, %v4217
    %v4219 = vpop.f32.mrf.mxu0
    %v4220 = vpop.f32.mrf.mxu0
    %v4221 = vadd.f32 %v4078, %v4220
    %v4222 = vpop.f32.mrf.mxu0
    %4223 = vmatprep.mubr.bf16.mxu0 0
    %4224 = vmatmul.mubr.bf16.gmra.mxu0 %v4113
    %v4225 = vpop.f32.mrf.mxu0
    %v4226 = vadd.f32 %v4078, %v4225
    %v4227 = vpop.f32.mrf.mxu0
    %v4228 = vpop.f32.mrf.mxu0
    %v4229 = vadd.f32 %v4078, %v4228
    %v4230 = vpop.f32.mrf.mxu0
    %4231 = vmatprep.mubr.bf16.mxu0 0
    %4232 = vmatmul.mubr.bf16.gmra.mxu0 %v4114
    %v4233 = vpop.f32.mrf.mxu0
    %v4234 = vadd.f32 %v4078, %v4233
    %v4235 = vpop.f32.mrf.mxu0
    %v4236 = vpop.f32.mrf.mxu0
    %v4237 = vadd.f32 %v4078, %v4236
    %v4238 = vpop.f32.mrf.mxu0
    %4239 = vmatprep.mubr.bf16.mxu0 0
    %4240 = vmatmul.mubr.bf16.gmra.mxu0 %v4115
    %v4241 = vpop.f32.mrf.mxu0
    %v4242 = vadd.f32 %v4078, %v4241
    %v4243 = vpop.f32.mrf.mxu0
    %v4244 = vpop.f32.mrf.mxu0
    %v4245 = vadd.f32 %v4078, %v4244
    %v4246 = vpop.f32.mrf.mxu0
    %4247 = vmatprep.mubr.bf16.mxu0 0
    %4248 = vmatmul.mubr.bf16.gmra.mxu0 %v4116
    %v4249 = vpop.f32.mrf.mxu0
    %v4250 = vadd.f32 %v4078, %v4249
    %v4251 = vpop.f32.mrf.mxu0
    %v4252 = vpop.f32.mrf.mxu0
    %v4253 = vadd.f32 %v4078, %v4252
    %v4254 = vpop.f32.mrf.mxu0
    %4255 = vmatprep.mubr.bf16.mxu0 0
    %4256 = vmatmul.mubr.bf16.gmra.mxu0 %v4117
    %v4257 = vpop.f32.mrf.mxu0
    %v4258 = vadd.f32 %v4078, %v4257
    %v4259 = vpop.f32.mrf.mxu0
    %v4260 = vpop.f32.mrf.mxu0
    %v4261 = vadd.f32 %v4078, %v4260
    %v4262 = vpop.f32.mrf.mxu0
    %4263 = vmatprep.mubr.bf16.mxu0 0
    %4264 = vmatmul.mubr.bf16.gmra.mxu0 %v4118
    %v4265 = vpop.f32.mrf.mxu0
    %v4266 = vadd.f32 %v4078, %v4265
    %v4267 = vpop.f32.mrf.mxu0
    %v4268 = vpop.f32.mrf.mxu0
    %v4269 = vadd.f32 %v4078, %v4268
    %v4270 = vpop.f32.mrf.mxu0
    %4271 = vdwg.mxu0
    %v4272 = vld [vmem:[#allocation4] sm:$0xff]
    %v4273 = vld [vmem:[#allocation4 + $0x8] sm:$0xff]
    %v4274 = vld [vmem:[#allocation4 + $0x10] sm:$0xff]
    %v4275 = vld [vmem:[#allocation4 + $0x18] sm:$0xff]
    %v4276 = vld [vmem:[#allocation4 + $0x20] sm:$0xff]
    %v4277 = vld [vmem:[#allocation4 + $0x28] sm:$0xff]
    %v4278 = vld [vmem:[#allocation4 + $0x30] sm:$0xff]
    %v4279 = vld [vmem:[#allocation4 + $0x38] sm:$0xff]
    %v4280 = vld [vmem:[#allocation4 + $0x100] sm:$0xff]
    %v4281 = vld [vmem:[#allocation4 + $0x108] sm:$0xff]
    %v4282 = vld [vmem:[#allocation4 + $0x110] sm:$0xff]
    %v4283 = vld [vmem:[#allocation4 + $0x118] sm:$0xff]
    %v4284 = vld [vmem:[#allocation4 + $0x120] sm:$0xff]
    %v4285 = vld [vmem:[#allocation4 + $0x128] sm:$0xff]
    %v4286 = vld [vmem:[#allocation4 + $0x130] sm:$0xff]
    %v4287 = vld [vmem:[#allocation4 + $0x138] sm:$0xff]
    %v4288 = vadd.f32 %v4210, %v4272
    %v4289 = vadd.f32 %v4213, %v4273
    %v4290 = vadd.f32 %v4218, %v4274
    %v4291 = vadd.f32 %v4221, %v4275
    %v4292 = vadd.f32 %v4226, %v4276
    %v4293 = vadd.f32 %v4229, %v4277
    %v4294 = vadd.f32 %v4234, %v4278
    %v4295 = vadd.f32 %v4237, %v4279
    %v4296 = vadd.f32 %v4242, %v4280
    %v4297 = vadd.f32 %v4245, %v4281
    %v4298 = vadd.f32 %v4250, %v4282
    %v4299 = vadd.f32 %v4253, %v4283
    %v4300 = vadd.f32 %v4258, %v4284
    %v4301 = vadd.f32 %v4261, %v4285
    %v4302 = vadd.f32 %v4266, %v4286
    %v4303 = vadd.f32 %v4269, %v4287
    %4304 = vst [vmem:[#allocation12] sm:$0xff] %v4288
    %4305 = vst [vmem:[#allocation12 + $0x8] sm:$0xff] %v4289
    %4306 = vst [vmem:[#allocation12 + $0x10] sm:$0xff] %v4290
    %4307 = vst [vmem:[#allocation12 + $0x18] sm:$0xff] %v4291
    %4308 = vst [vmem:[#allocation12 + $0x20] sm:$0xff] %v4292
    %4309 = vst [vmem:[#allocation12 + $0x28] sm:$0xff] %v4293
    %4310 = vst [vmem:[#allocation12 + $0x30] sm:$0xff] %v4294
    %4311 = vst [vmem:[#allocation12 + $0x38] sm:$0xff] %v4295
    %4312 = vst [vmem:[#allocation12 + $0x100] sm:$0xff] %v4296
    %4313 = vst [vmem:[#allocation12 + $0x108] sm:$0xff] %v4297
    %4314 = vst [vmem:[#allocation12 + $0x110] sm:$0xff] %v4298
    %4315 = vst [vmem:[#allocation12 + $0x118] sm:$0xff] %v4299
    %4316 = vst [vmem:[#allocation12 + $0x120] sm:$0xff] %v4300
    %4317 = vst [vmem:[#allocation12 + $0x128] sm:$0xff] %v4301
    %4318 = vst [vmem:[#allocation12 + $0x130] sm:$0xff] %v4302
    %4319 = vst [vmem:[#allocation12 + $0x138] sm:$0xff] %v4303
    %v4320 = vld [vmem:[%s2740] sm:$0xf]
    %v4321 = vld [vmem:[%s2740 + $0x4] sm:$0xf]
    %v4322 = vld [vmem:[%s2740 + $0x8] sm:$0xf]
    %v4323 = vld [vmem:[%s2740 + $0xc] sm:$0xf]
    %v4324 = vld [vmem:[%s2740 + $0x10] sm:$0xf]
    %v4325 = vld [vmem:[%s2740 + $0x14] sm:$0xf]
    %v4326 = vld [vmem:[%s2740 + $0x18] sm:$0xf]
    %v4327 = vld [vmem:[%s2740 + $0x1c] sm:$0xf]
    %v4328 = vld [vmem:[%s2740 + $0x80] sm:$0xf]
    %v4329 = vld [vmem:[%s2740 + $0x84] sm:$0xf]
    %v4330 = vld [vmem:[%s2740 + $0x88] sm:$0xf]
    %v4331 = vld [vmem:[%s2740 + $0x8c] sm:$0xf]
    %v4332 = vld [vmem:[%s2740 + $0x90] sm:$0xf]
    %v4333 = vld [vmem:[%s2740 + $0x94] sm:$0xf]
    %v4334 = vld [vmem:[%s2740 + $0x98] sm:$0xf]
    %v4335 = vld [vmem:[%s2740 + $0x9c] sm:$0xf]
    %v4336 = vld [vmem:[#allocation10] sm:$0xf]
    %v4337 = vld [vmem:[#allocation10 + $0x4] sm:$0xf]
    %v4338 = vld [vmem:[#allocation10 + $0x8] sm:$0xf]
    %v4339 = vld [vmem:[#allocation10 + $0xc] sm:$0xf]
    %v4340 = vld [vmem:[#allocation10 + $0x10] sm:$0xf]
    %v4341 = vld [vmem:[#allocation10 + $0x14] sm:$0xf]
    %v4342 = vld [vmem:[#allocation10 + $0x18] sm:$0xf]
    %v4343 = vld [vmem:[#allocation10 + $0x1c] sm:$0xf]
    %v4344 = vld [vmem:[#allocation10 + $0x20] sm:$0xf]
    %v4345 = vld [vmem:[#allocation10 + $0x24] sm:$0xf]
    %v4346 = vld [vmem:[#allocation10 + $0x28] sm:$0xf]
    %v4347 = vld [vmem:[#allocation10 + $0x2c] sm:$0xf]
    %v4348 = vld [vmem:[#allocation10 + $0x30] sm:$0xf]
    %v4349 = vld [vmem:[#allocation10 + $0x34] sm:$0xf]
    %v4350 = vld [vmem:[#allocation10 + $0x38] sm:$0xf]
    %v4351 = vld [vmem:[#allocation10 + $0x3c] sm:$0xf]
    %v4368 = vunpack.c.l.b16 %v4320
    %v4369 = vunpack.c.l.b16 %v4321
    %v4370 = vunpack.c.l.b16 %v4322
    %v4371 = vunpack.c.l.b16 %v4323
    %v4372 = vunpack.c.l.b16 %v4324
    %v4373 = vunpack.c.l.b16 %v4325
    %v4374 = vunpack.c.l.b16 %v4326
    %v4375 = vunpack.c.l.b16 %v4327
    %v4376 = vunpack.c.l.b16 %v4328
    %v4377 = vunpack.c.l.b16 %v4329
    %v4378 = vunpack.c.l.b16 %v4330
    %v4379 = vunpack.c.l.b16 %v4331
    %v4380 = vunpack.c.l.b16 %v4332
    %v4381 = vunpack.c.l.b16 %v4333
    %v4382 = vunpack.c.l.b16 %v4334
    %v4383 = vunpack.c.l.b16 %v4335
    %v4384 = vpack.c.b16 %v4369, %v4368
    %v4385 = vpack.c.b16 %v4371, %v4370
    %v4386 = vpack.c.b16 %v4373, %v4372
    %v4387 = vpack.c.b16 %v4375, %v4374
    %v4388 = vpack.c.b16 %v4377, %v4376
    %v4389 = vpack.c.b16 %v4379, %v4378
    %v4390 = vpack.c.b16 %v4381, %v4380
    %v4391 = vpack.c.b16 %v4383, %v4382
    %v4416 = vunpack.c.l.b16 %v4336
    %v4417 = vunpack.c.l.b16 %v4337
    %v4418 = vunpack.c.l.b16 %v4338
    %v4419 = vunpack.c.l.b16 %v4339
    %v4420 = vunpack.c.l.b16 %v4340
    %v4421 = vunpack.c.l.b16 %v4341
    %v4422 = vunpack.c.l.b16 %v4342
    %v4423 = vunpack.c.l.b16 %v4343
    %v4424 = vunpack.c.l.b16 %v4344
    %v4425 = vunpack.c.l.b16 %v4345
    %v4426 = vunpack.c.l.b16 %v4346
    %v4427 = vunpack.c.l.b16 %v4347
    %v4428 = vunpack.c.l.b16 %v4348
    %v4429 = vunpack.c.l.b16 %v4349
    %v4430 = vunpack.c.l.b16 %v4350
    %v4431 = vunpack.c.l.b16 %v4351
    %v4432 = vpack.c.b16 %v4417, %v4416
    %v4433 = vpack.c.b16 %v4419, %v4418
    %v4434 = vpack.c.b16 %v4421, %v4420
    %v4435 = vpack.c.b16 %v4423, %v4422
    %v4436 = vpack.c.b16 %v4425, %v4424
    %v4437 = vpack.c.b16 %v4427, %v4426
    %v4438 = vpack.c.b16 %v4429, %v4428
    %v4439 = vpack.c.b16 %v4431, %v4430
    %4448 = vmatprep.subr.bf16.mxu0 0
    %4449 = vmatpush1.bf16.msra.mxu0 %v4439
    %4450 = vmatprep.subr.bf16.mxu0 0
    %4451 = vmatpush1.bf16.msra.mxu0 %v4438
    %4452 = vmatprep.subr.bf16.mxu0 0
    %4453 = vmatpush1.bf16.msra.mxu0 %v4437
    %4454 = vmatprep.subr.bf16.mxu0 0
    %4455 = vmatpush1.bf16.msra.mxu0 %v4436
    %4456 = vmatprep.subr.bf16.mxu0 0
    %4457 = vmatpush1.bf16.msra.mxu0 %v4435
    %4458 = vmatprep.subr.bf16.mxu0 0
    %4459 = vmatpush1.bf16.msra.mxu0 %v4434
    %4460 = vmatprep.subr.bf16.mxu0 0
    %4461 = vmatpush1.bf16.msra.mxu0 %v4433
    %4462 = vmatprep.subr.bf16.mxu0 0
    %4463 = vmatpush1.bf16.msra.mxu0 %v4432
    %4464 = vmatprep.subr.bf16.mxu0 0
    %4465 = vmatpush2.bf16.msra.mxu0 0
    %4466 = vmatprep.subr.bf16.mxu0 0
    %4467 = vmatpush2.bf16.msra.mxu0 0
    %4468 = vmatprep.subr.bf16.mxu0 0
    %4469 = vmatpush2.bf16.msra.mxu0 0
    %4470 = vmatprep.subr.bf16.mxu0 0
    %4471 = vmatpush2.bf16.msra.mxu0 0
    %4472 = vmatprep.subr.bf16.mxu0 0
    %4473 = vmatpush2.bf16.msra.mxu0 0
    %4474 = vmatprep.subr.bf16.mxu0 0
    %4475 = vmatpush2.bf16.msra.mxu0 0
    %4476 = vmatprep.subr.bf16.mxu0 0
    %4477 = vmatpush2.bf16.msra.mxu0 0
    %4478 = vmatprep.subr.bf16.mxu0 0
    %4479 = vmatpush2.bf16.msra.mxu0 0
    %4480 = vmatprep.mubr.bf16.mxu0 0
    %4481 = vmatmul.mubr.bf16.gmra.mxu0 %v4384
    %v4482 = vpop.f32.mrf.mxu0
    %v4483 = vadd.f32 %v4078, %v4482
    %v4484 = vpop.f32.mrf.mxu0
    %v4485 = vpop.f32.mrf.mxu0
    %v4486 = vadd.f32 %v4078, %v4485
    %v4487 = vpop.f32.mrf.mxu0
    %4488 = vmatprep.mubr.bf16.mxu0 0
    %4489 = vmatmul.mubr.bf16.gmra.mxu0 %v4385
    %v4490 = vpop.f32.mrf.mxu0
    %v4491 = vadd.f32 %v4078, %v4490
    %v4492 = vpop.f32.mrf.mxu0
    %v4493 = vpop.f32.mrf.mxu0
    %v4494 = vadd.f32 %v4078, %v4493
    %v4495 = vpop.f32.mrf.mxu0
    %4496 = vmatprep.mubr.bf16.mxu0 0
    %4497 = vmatmul.mubr.bf16.gmra.mxu0 %v4386
    %v4498 = vpop.f32.mrf.mxu0
    %v4499 = vadd.f32 %v4078, %v4498
    %v4500 = vpop.f32.mrf.mxu0
    %v4501 = vpop.f32.mrf.mxu0
    %v4502 = vadd.f32 %v4078, %v4501
    %v4503 = vpop.f32.mrf.mxu0
    %4504 = vmatprep.mubr.bf16.mxu0 0
    %4505 = vmatmul.mubr.bf16.gmra.mxu0 %v4387
    %v4506 = vpop.f32.mrf.mxu0
    %v4507 = vadd.f32 %v4078, %v4506
    %v4508 = vpop.f32.mrf.mxu0
    %v4509 = vpop.f32.mrf.mxu0
    %v4510 = vadd.f32 %v4078, %v4509
    %v4511 = vpop.f32.mrf.mxu0
    %4512 = vmatprep.mubr.bf16.mxu0 0
    %4513 = vmatmul.mubr.bf16.gmra.mxu0 %v4388
    %v4514 = vpop.f32.mrf.mxu0
    %v4515 = vadd.f32 %v4078, %v4514
    %v4516 = vpop.f32.mrf.mxu0
    %v4517 = vpop.f32.mrf.mxu0
    %v4518 = vadd.f32 %v4078, %v4517
    %v4519 = vpop.f32.mrf.mxu0
    %4520 = vmatprep.mubr.bf16.mxu0 0
    %4521 = vmatmul.mubr.bf16.gmra.mxu0 %v4389
    %v4522 = vpop.f32.mrf.mxu0
    %v4523 = vadd.f32 %v4078, %v4522
    %v4524 = vpop.f32.mrf.mxu0
    %v4525 = vpop.f32.mrf.mxu0
    %v4526 = vadd.f32 %v4078, %v4525
    %v4527 = vpop.f32.mrf.mxu0
    %4528 = vmatprep.mubr.bf16.mxu0 0
    %4529 = vmatmul.mubr.bf16.gmra.mxu0 %v4390
    %v4530 = vpop.f32.mrf.mxu0
    %v4531 = vadd.f32 %v4078, %v4530
    %v4532 = vpop.f32.mrf.mxu0
    %v4533 = vpop.f32.mrf.mxu0
    %v4534 = vadd.f32 %v4078, %v4533
    %v4535 = vpop.f32.mrf.mxu0
    %4536 = vmatprep.mubr.bf16.mxu0 0
    %4537 = vmatmul.mubr.bf16.gmra.mxu0 %v4391
    %v4538 = vpop.f32.mrf.mxu0
    %v4539 = vadd.f32 %v4078, %v4538
    %v4540 = vpop.f32.mrf.mxu0
    %v4541 = vpop.f32.mrf.mxu0
    %v4542 = vadd.f32 %v4078, %v4541
    %v4543 = vpop.f32.mrf.mxu0
    %4544 = vdwg.mxu0
    %v4545 = vld [vmem:[%s485] sm:$0xff]
    %v4546 = vld [vmem:[%s485 + $0x8] sm:$0xff]
    %v4547 = vld [vmem:[%s485 + $0x10] sm:$0xff]
    %v4548 = vld [vmem:[%s485 + $0x18] sm:$0xff]
    %v4549 = vld [vmem:[%s485 + $0x20] sm:$0xff]
    %v4550 = vld [vmem:[%s485 + $0x28] sm:$0xff]
    %v4551 = vld [vmem:[%s485 + $0x30] sm:$0xff]
    %v4552 = vld [vmem:[%s485 + $0x38] sm:$0xff]
    %v4553 = vld [vmem:[%s485 + $0x100] sm:$0xff]
    %v4554 = vld [vmem:[%s485 + $0x108] sm:$0xff]
    %v4555 = vld [vmem:[%s485 + $0x110] sm:$0xff]
    %v4556 = vld [vmem:[%s485 + $0x118] sm:$0xff]
    %v4557 = vld [vmem:[%s485 + $0x120] sm:$0xff]
    %v4558 = vld [vmem:[%s485 + $0x128] sm:$0xff]
    %v4559 = vld [vmem:[%s485 + $0x130] sm:$0xff]
    %v4560 = vld [vmem:[%s485 + $0x138] sm:$0xff]
    %v4561 = vadd.f32 %v4483, %v4545
    %v4562 = vadd.f32 %v4486, %v4546
    %v4563 = vadd.f32 %v4491, %v4547
    %v4564 = vadd.f32 %v4494, %v4548
    %v4565 = vadd.f32 %v4499, %v4549
    %v4566 = vadd.f32 %v4502, %v4550
    %v4567 = vadd.f32 %v4507, %v4551
    %v4568 = vadd.f32 %v4510, %v4552
    %v4569 = vadd.f32 %v4515, %v4553
    %v4570 = vadd.f32 %v4518, %v4554
    %v4571 = vadd.f32 %v4523, %v4555
    %v4572 = vadd.f32 %v4526, %v4556
    %v4573 = vadd.f32 %v4531, %v4557
    %v4574 = vadd.f32 %v4534, %v4558
    %v4575 = vadd.f32 %v4539, %v4559
    %v4576 = vadd.f32 %v4542, %v4560
    %s4577 = scalar_lea.vmem [#allocation12], 64
    %4578 = vst [vmem:[%s4577] sm:$0xff] %v4561
    %4579 = vst [vmem:[%s4577 + $0x8] sm:$0xff] %v4562
    %4580 = vst [vmem:[%s4577 + $0x10] sm:$0xff] %v4563
    %4581 = vst [vmem:[%s4577 + $0x18] sm:$0xff] %v4564
    %4582 = vst [vmem:[%s4577 + $0x20] sm:$0xff] %v4565
    %4583 = vst [vmem:[%s4577 + $0x28] sm:$0xff] %v4566
    %4584 = vst [vmem:[%s4577 + $0x30] sm:$0xff] %v4567
    %4585 = vst [vmem:[%s4577 + $0x38] sm:$0xff] %v4568
    %4586 = vst [vmem:[%s4577 + $0x100] sm:$0xff] %v4569
    %4587 = vst [vmem:[%s4577 + $0x108] sm:$0xff] %v4570
    %4588 = vst [vmem:[%s4577 + $0x110] sm:$0xff] %v4571
    %4589 = vst [vmem:[%s4577 + $0x118] sm:$0xff] %v4572
    %4590 = vst [vmem:[%s4577 + $0x120] sm:$0xff] %v4573
    %4591 = vst [vmem:[%s4577 + $0x128] sm:$0xff] %v4574
    %4592 = vst [vmem:[%s4577 + $0x130] sm:$0xff] %v4575
    %4593 = vst [vmem:[%s4577 + $0x138] sm:$0xff] %v4576
    %v4594 = vld [vmem:[%s3383] sm:$0xf]
    %v4595 = vld [vmem:[%s3383 + $0x4] sm:$0xf]
    %v4596 = vld [vmem:[%s3383 + $0x8] sm:$0xf]
    %v4597 = vld [vmem:[%s3383 + $0xc] sm:$0xf]
    %v4598 = vld [vmem:[%s3383 + $0x10] sm:$0xf]
    %v4599 = vld [vmem:[%s3383 + $0x14] sm:$0xf]
    %v4600 = vld [vmem:[%s3383 + $0x18] sm:$0xf]
    %v4601 = vld [vmem:[%s3383 + $0x1c] sm:$0xf]
    %v4602 = vld [vmem:[%s3383 + $0x80] sm:$0xf]
    %v4603 = vld [vmem:[%s3383 + $0x84] sm:$0xf]
    %v4604 = vld [vmem:[%s3383 + $0x88] sm:$0xf]
    %v4605 = vld [vmem:[%s3383 + $0x8c] sm:$0xf]
    %v4606 = vld [vmem:[%s3383 + $0x90] sm:$0xf]
    %v4607 = vld [vmem:[%s3383 + $0x94] sm:$0xf]
    %v4608 = vld [vmem:[%s3383 + $0x98] sm:$0xf]
    %v4609 = vld [vmem:[%s3383 + $0x9c] sm:$0xf]
    %v4610 = vld [vmem:[#allocation10] sm:$0xf]
    %v4611 = vld [vmem:[#allocation10 + $0x4] sm:$0xf]
    %v4612 = vld [vmem:[#allocation10 + $0x8] sm:$0xf]
    %v4613 = vld [vmem:[#allocation10 + $0xc] sm:$0xf]
    %v4614 = vld [vmem:[#allocation10 + $0x10] sm:$0xf]
    %v4615 = vld [vmem:[#allocation10 + $0x14] sm:$0xf]
    %v4616 = vld [vmem:[#allocation10 + $0x18] sm:$0xf]
    %v4617 = vld [vmem:[#allocation10 + $0x1c] sm:$0xf]
    %v4618 = vld [vmem:[#allocation10 + $0x20] sm:$0xf]
    %v4619 = vld [vmem:[#allocation10 + $0x24] sm:$0xf]
    %v4620 = vld [vmem:[#allocation10 + $0x28] sm:$0xf]
    %v4621 = vld [vmem:[#allocation10 + $0x2c] sm:$0xf]
    %v4622 = vld [vmem:[#allocation10 + $0x30] sm:$0xf]
    %v4623 = vld [vmem:[#allocation10 + $0x34] sm:$0xf]
    %v4624 = vld [vmem:[#allocation10 + $0x38] sm:$0xf]
    %v4625 = vld [vmem:[#allocation10 + $0x3c] sm:$0xf]
    %v4642 = vunpack.c.l.b16 %v4594
    %v4643 = vunpack.c.l.b16 %v4595
    %v4644 = vunpack.c.l.b16 %v4596
    %v4645 = vunpack.c.l.b16 %v4597
    %v4646 = vunpack.c.l.b16 %v4598
    %v4647 = vunpack.c.l.b16 %v4599
    %v4648 = vunpack.c.l.b16 %v4600
    %v4649 = vunpack.c.l.b16 %v4601
    %v4650 = vunpack.c.l.b16 %v4602
    %v4651 = vunpack.c.l.b16 %v4603
    %v4652 = vunpack.c.l.b16 %v4604
    %v4653 = vunpack.c.l.b16 %v4605
    %v4654 = vunpack.c.l.b16 %v4606
    %v4655 = vunpack.c.l.b16 %v4607
    %v4656 = vunpack.c.l.b16 %v4608
    %v4657 = vunpack.c.l.b16 %v4609
    %v4658 = vpack.c.b16 %v4643, %v4642
    %v4659 = vpack.c.b16 %v4645, %v4644
    %v4660 = vpack.c.b16 %v4647, %v4646
    %v4661 = vpack.c.b16 %v4649, %v4648
    %v4662 = vpack.c.b16 %v4651, %v4650
    %v4663 = vpack.c.b16 %v4653, %v4652
    %v4664 = vpack.c.b16 %v4655, %v4654
    %v4665 = vpack.c.b16 %v4657, %v4656
    %v4690 = vunpack.c.l.b16 %v4610
    %v4691 = vunpack.c.l.b16 %v4611
    %v4692 = vunpack.c.l.b16 %v4612
    %v4693 = vunpack.c.l.b16 %v4613
    %v4694 = vunpack.c.l.b16 %v4614
    %v4695 = vunpack.c.l.b16 %v4615
    %v4696 = vunpack.c.l.b16 %v4616
    %v4697 = vunpack.c.l.b16 %v4617
    %v4698 = vunpack.c.l.b16 %v4618
    %v4699 = vunpack.c.l.b16 %v4619
    %v4700 = vunpack.c.l.b16 %v4620
    %v4701 = vunpack.c.l.b16 %v4621
    %v4702 = vunpack.c.l.b16 %v4622
    %v4703 = vunpack.c.l.b16 %v4623
    %v4704 = vunpack.c.l.b16 %v4624
    %v4705 = vunpack.c.l.b16 %v4625
    %v4706 = vpack.c.b16 %v4691, %v4690
    %v4707 = vpack.c.b16 %v4693, %v4692
    %v4708 = vpack.c.b16 %v4695, %v4694
    %v4709 = vpack.c.b16 %v4697, %v4696
    %v4710 = vpack.c.b16 %v4699, %v4698
    %v4711 = vpack.c.b16 %v4701, %v4700
    %v4712 = vpack.c.b16 %v4703, %v4702
    %v4713 = vpack.c.b16 %v4705, %v4704
    %4722 = vmatprep.subr.bf16.mxu0 0
    %4723 = vmatpush1.bf16.msra.mxu0 %v4713
    %4724 = vmatprep.subr.bf16.mxu0 0
    %4725 = vmatpush1.bf16.msra.mxu0 %v4712
    %4726 = vmatprep.subr.bf16.mxu0 0
    %4727 = vmatpush1.bf16.msra.mxu0 %v4711
    %4728 = vmatprep.subr.bf16.mxu0 0
    %4729 = vmatpush1.bf16.msra.mxu0 %v4710
    %4730 = vmatprep.subr.bf16.mxu0 0
    %4731 = vmatpush1.bf16.msra.mxu0 %v4709
    %4732 = vmatprep.subr.bf16.mxu0 0
    %4733 = vmatpush1.bf16.msra.mxu0 %v4708
    %4734 = vmatprep.subr.bf16.mxu0 0
    %4735 = vmatpush1.bf16.msra.mxu0 %v4707
    %4736 = vmatprep.subr.bf16.mxu0 0
    %4737 = vmatpush1.bf16.msra.mxu0 %v4706
    %4738 = vmatprep.subr.bf16.mxu0 0
    %4739 = vmatpush2.bf16.msra.mxu0 0
    %4740 = vmatprep.subr.bf16.mxu0 0
    %4741 = vmatpush2.bf16.msra.mxu0 0
    %4742 = vmatprep.subr.bf16.mxu0 0
    %4743 = vmatpush2.bf16.msra.mxu0 0
    %4744 = vmatprep.subr.bf16.mxu0 0
    %4745 = vmatpush2.bf16.msra.mxu0 0
    %4746 = vmatprep.subr.bf16.mxu0 0
    %4747 = vmatpush2.bf16.msra.mxu0 0
    %4748 = vmatprep.subr.bf16.mxu0 0
    %4749 = vmatpush2.bf16.msra.mxu0 0
    %4750 = vmatprep.subr.bf16.mxu0 0
    %4751 = vmatpush2.bf16.msra.mxu0 0
    %4752 = vmatprep.subr.bf16.mxu0 0
    %4753 = vmatpush2.bf16.msra.mxu0 0
    %4754 = vmatprep.mubr.bf16.mxu0 0
    %4755 = vmatmul.mubr.bf16.gmra.mxu0 %v4658
    %v4756 = vpop.f32.mrf.mxu0
    %v4757 = vadd.f32 %v4078, %v4756
    %v4758 = vpop.f32.mrf.mxu0
    %v4759 = vpop.f32.mrf.mxu0
    %v4760 = vadd.f32 %v4078, %v4759
    %v4761 = vpop.f32.mrf.mxu0
    %4762 = vmatprep.mubr.bf16.mxu0 0
    %4763 = vmatmul.mubr.bf16.gmra.mxu0 %v4659
    %v4764 = vpop.f32.mrf.mxu0
    %v4765 = vadd.f32 %v4078, %v4764
    %v4766 = vpop.f32.mrf.mxu0
    %v4767 = vpop.f32.mrf.mxu0
    %v4768 = vadd.f32 %v4078, %v4767
    %v4769 = vpop.f32.mrf.mxu0
    %4770 = vmatprep.mubr.bf16.mxu0 0
    %4771 = vmatmul.mubr.bf16.gmra.mxu0 %v4660
    %v4772 = vpop.f32.mrf.mxu0
    %v4773 = vadd.f32 %v4078, %v4772
    %v4774 = vpop.f32.mrf.mxu0
    %v4775 = vpop.f32.mrf.mxu0
    %v4776 = vadd.f32 %v4078, %v4775
    %v4777 = vpop.f32.mrf.mxu0
    %4778 = vmatprep.mubr.bf16.mxu0 0
    %4779 = vmatmul.mubr.bf16.gmra.mxu0 %v4661
    %v4780 = vpop.f32.mrf.mxu0
    %v4781 = vadd.f32 %v4078, %v4780
    %v4782 = vpop.f32.mrf.mxu0
    %v4783 = vpop.f32.mrf.mxu0
    %v4784 = vadd.f32 %v4078, %v4783
    %v4785 = vpop.f32.mrf.mxu0
    %4786 = vmatprep.mubr.bf16.mxu0 0
    %4787 = vmatmul.mubr.bf16.gmra.mxu0 %v4662
    %v4788 = vpop.f32.mrf.mxu0
    %v4789 = vadd.f32 %v4078, %v4788
    %v4790 = vpop.f32.mrf.mxu0
    %v4791 = vpop.f32.mrf.mxu0
    %v4792 = vadd.f32 %v4078, %v4791
    %v4793 = vpop.f32.mrf.mxu0
    %4794 = vmatprep.mubr.bf16.mxu0 0
    %4795 = vmatmul.mubr.bf16.gmra.mxu0 %v4663
    %v4796 = vpop.f32.mrf.mxu0
    %v4797 = vadd.f32 %v4078, %v4796
    %v4798 = vpop.f32.mrf.mxu0
    %v4799 = vpop.f32.mrf.mxu0
    %v4800 = vadd.f32 %v4078, %v4799
    %v4801 = vpop.f32.mrf.mxu0
    %4802 = vmatprep.mubr.bf16.mxu0 0
    %4803 = vmatmul.mubr.bf16.gmra.mxu0 %v4664
    %v4804 = vpop.f32.mrf.mxu0
    %v4805 = vadd.f32 %v4078, %v4804
    %v4806 = vpop.f32.mrf.mxu0
    %v4807 = vpop.f32.mrf.mxu0
    %v4808 = vadd.f32 %v4078, %v4807
    %v4809 = vpop.f32.mrf.mxu0
    %4810 = vmatprep.mubr.bf16.mxu0 0
    %4811 = vmatmul.mubr.bf16.gmra.mxu0 %v4665
    %v4812 = vpop.f32.mrf.mxu0
    %v4813 = vadd.f32 %v4078, %v4812
    %v4814 = vpop.f32.mrf.mxu0
    %v4815 = vpop.f32.mrf.mxu0
    %v4816 = vadd.f32 %v4078, %v4815
    %v4817 = vpop.f32.mrf.mxu0
    %4818 = vdwg.mxu0
    %v4819 = vld [vmem:[%s800] sm:$0xff]
    %v4820 = vld [vmem:[%s800 + $0x8] sm:$0xff]
    %v4821 = vld [vmem:[%s800 + $0x10] sm:$0xff]
    %v4822 = vld [vmem:[%s800 + $0x18] sm:$0xff]
    %v4823 = vld [vmem:[%s800 + $0x20] sm:$0xff]
    %v4824 = vld [vmem:[%s800 + $0x28] sm:$0xff]
    %v4825 = vld [vmem:[%s800 + $0x30] sm:$0xff]
    %v4826 = vld [vmem:[%s800 + $0x38] sm:$0xff]
    %v4827 = vld [vmem:[%s800 + $0x100] sm:$0xff]
    %v4828 = vld [vmem:[%s800 + $0x108] sm:$0xff]
    %v4829 = vld [vmem:[%s800 + $0x110] sm:$0xff]
    %v4830 = vld [vmem:[%s800 + $0x118] sm:$0xff]
    %v4831 = vld [vmem:[%s800 + $0x120] sm:$0xff]
    %v4832 = vld [vmem:[%s800 + $0x128] sm:$0xff]
    %v4833 = vld [vmem:[%s800 + $0x130] sm:$0xff]
    %v4834 = vld [vmem:[%s800 + $0x138] sm:$0xff]
    %v4835 = vadd.f32 %v4757, %v4819
    %v4836 = vadd.f32 %v4760, %v4820
    %v4837 = vadd.f32 %v4765, %v4821
    %v4838 = vadd.f32 %v4768, %v4822
    %v4839 = vadd.f32 %v4773, %v4823
    %v4840 = vadd.f32 %v4776, %v4824
    %v4841 = vadd.f32 %v4781, %v4825
    %v4842 = vadd.f32 %v4784, %v4826
    %v4843 = vadd.f32 %v4789, %v4827
    %v4844 = vadd.f32 %v4792, %v4828
    %v4845 = vadd.f32 %v4797, %v4829
    %v4846 = vadd.f32 %v4800, %v4830
    %v4847 = vadd.f32 %v4805, %v4831
    %v4848 = vadd.f32 %v4808, %v4832
    %v4849 = vadd.f32 %v4813, %v4833
    %v4850 = vadd.f32 %v4816, %v4834
    %s4851 = scalar_lea.vmem [#allocation12], 128
    %4852 = vst [vmem:[%s4851] sm:$0xff] %v4835
    %4853 = vst [vmem:[%s4851 + $0x8] sm:$0xff] %v4836
    %4854 = vst [vmem:[%s4851 + $0x10] sm:$0xff] %v4837
    %4855 = vst [vmem:[%s4851 + $0x18] sm:$0xff] %v4838
    %4856 = vst [vmem:[%s4851 + $0x20] sm:$0xff] %v4839
    %4857 = vst [vmem:[%s4851 + $0x28] sm:$0xff] %v4840
    %4858 = vst [vmem:[%s4851 + $0x30] sm:$0xff] %v4841
    %4859 = vst [vmem:[%s4851 + $0x38] sm:$0xff] %v4842
    %4860 = vst [vmem:[%s4851 + $0x100] sm:$0xff] %v4843
    %4861 = vst [vmem:[%s4851 + $0x108] sm:$0xff] %v4844
    %4862 = vst [vmem:[%s4851 + $0x110] sm:$0xff] %v4845
    %4863 = vst [vmem:[%s4851 + $0x118] sm:$0xff] %v4846
    %4864 = vst [vmem:[%s4851 + $0x120] sm:$0xff] %v4847
    %4865 = vst [vmem:[%s4851 + $0x128] sm:$0xff] %v4848
    %4866 = vst [vmem:[%s4851 + $0x130] sm:$0xff] %v4849
    %4867 = vst [vmem:[%s4851 + $0x138] sm:$0xff] %v4850
    %v4868 = vld [vmem:[%s4026] sm:$0xf]
    %v4869 = vld [vmem:[%s4026 + $0x4] sm:$0xf]
    %v4870 = vld [vmem:[%s4026 + $0x8] sm:$0xf]
    %v4871 = vld [vmem:[%s4026 + $0xc] sm:$0xf]
    %v4872 = vld [vmem:[%s4026 + $0x10] sm:$0xf]
    %v4873 = vld [vmem:[%s4026 + $0x14] sm:$0xf]
    %v4874 = vld [vmem:[%s4026 + $0x18] sm:$0xf]
    %v4875 = vld [vmem:[%s4026 + $0x1c] sm:$0xf]
    %v4876 = vld [vmem:[%s4026 + $0x80] sm:$0xf]
    %v4877 = vld [vmem:[%s4026 + $0x84] sm:$0xf]
    %v4878 = vld [vmem:[%s4026 + $0x88] sm:$0xf]
    %v4879 = vld [vmem:[%s4026 + $0x8c] sm:$0xf]
    %v4880 = vld [vmem:[%s4026 + $0x90] sm:$0xf]
    %v4881 = vld [vmem:[%s4026 + $0x94] sm:$0xf]
    %v4882 = vld [vmem:[%s4026 + $0x98] sm:$0xf]
    %v4883 = vld [vmem:[%s4026 + $0x9c] sm:$0xf]
    %v4884 = vld [vmem:[#allocation10] sm:$0xf]
    %v4885 = vld [vmem:[#allocation10 + $0x4] sm:$0xf]
    %v4886 = vld [vmem:[#allocation10 + $0x8] sm:$0xf]
    %v4887 = vld [vmem:[#allocation10 + $0xc] sm:$0xf]
    %v4888 = vld [vmem:[#allocation10 + $0x10] sm:$0xf]
    %v4889 = vld [vmem:[#allocation10 + $0x14] sm:$0xf]
    %v4890 = vld [vmem:[#allocation10 + $0x18] sm:$0xf]
    %v4891 = vld [vmem:[#allocation10 + $0x1c] sm:$0xf]
    %v4892 = vld [vmem:[#allocation10 + $0x20] sm:$0xf]
    %v4893 = vld [vmem:[#allocation10 + $0x24] sm:$0xf]
    %v4894 = vld [vmem:[#allocation10 + $0x28] sm:$0xf]
    %v4895 = vld [vmem:[#allocation10 + $0x2c] sm:$0xf]
    %v4896 = vld [vmem:[#allocation10 + $0x30] sm:$0xf]
    %v4897 = vld [vmem:[#allocation10 + $0x34] sm:$0xf]
    %v4898 = vld [vmem:[#allocation10 + $0x38] sm:$0xf]
    %v4899 = vld [vmem:[#allocation10 + $0x3c] sm:$0xf]
    %v4916 = vunpack.c.l.b16 %v4868
    %v4917 = vunpack.c.l.b16 %v4869
    %v4918 = vunpack.c.l.b16 %v4870
    %v4919 = vunpack.c.l.b16 %v4871
    %v4920 = vunpack.c.l.b16 %v4872
    %v4921 = vunpack.c.l.b16 %v4873
    %v4922 = vunpack.c.l.b16 %v4874
    %v4923 = vunpack.c.l.b16 %v4875
    %v4924 = vunpack.c.l.b16 %v4876
    %v4925 = vunpack.c.l.b16 %v4877
    %v4926 = vunpack.c.l.b16 %v4878
    %v4927 = vunpack.c.l.b16 %v4879
    %v4928 = vunpack.c.l.b16 %v4880
    %v4929 = vunpack.c.l.b16 %v4881
    %v4930 = vunpack.c.l.b16 %v4882
    %v4931 = vunpack.c.l.b16 %v4883
    %v4932 = vpack.c.b16 %v4917, %v4916
    %v4933 = vpack.c.b16 %v4919, %v4918
    %v4934 = vpack.c.b16 %v4921, %v4920
    %v4935 = vpack.c.b16 %v4923, %v4922
    %v4936 = vpack.c.b16 %v4925, %v4924
    %v4937 = vpack.c.b16 %v4927, %v4926
    %v4938 = vpack.c.b16 %v4929, %v4928
    %v4939 = vpack.c.b16 %v4931, %v4930
    %v4964 = vunpack.c.l.b16 %v4884
    %v4965 = vunpack.c.l.b16 %v4885
    %v4966 = vunpack.c.l.b16 %v4886
    %v4967 = vunpack.c.l.b16 %v4887
    %v4968 = vunpack.c.l.b16 %v4888
    %v4969 = vunpack.c.l.b16 %v4889
    %v4970 = vunpack.c.l.b16 %v4890
    %v4971 = vunpack.c.l.b16 %v4891
    %v4972 = vunpack.c.l.b16 %v4892
    %v4973 = vunpack.c.l.b16 %v4893
    %v4974 = vunpack.c.l.b16 %v4894
    %v4975 = vunpack.c.l.b16 %v4895
    %v4976 = vunpack.c.l.b16 %v4896
    %v4977 = vunpack.c.l.b16 %v4897
    %v4978 = vunpack.c.l.b16 %v4898
    %v4979 = vunpack.c.l.b16 %v4899
    %v4980 = vpack.c.b16 %v4965, %v4964
    %v4981 = vpack.c.b16 %v4967, %v4966
    %v4982 = vpack.c.b16 %v4969, %v4968
    %v4983 = vpack.c.b16 %v4971, %v4970
    %v4984 = vpack.c.b16 %v4973, %v4972
    %v4985 = vpack.c.b16 %v4975, %v4974
    %v4986 = vpack.c.b16 %v4977, %v4976
    %v4987 = vpack.c.b16 %v4979, %v4978
    %4996 = vmatprep.subr.bf16.mxu0 0
    %4997 = vmatpush1.bf16.msra.mxu0 %v4987
    %4998 = vmatprep.subr.bf16.mxu0 0
    %4999 = vmatpush1.bf16.msra.mxu0 %v4986
    %5000 = vmatprep.subr.bf16.mxu0 0
    %5001 = vmatpush1.bf16.msra.mxu0 %v4985
    %5002 = vmatprep.subr.bf16.mxu0 0
    %5003 = vmatpush1.bf16.msra.mxu0 %v4984
    %5004 = vmatprep.subr.bf16.mxu0 0
    %5005 = vmatpush1.bf16.msra.mxu0 %v4983
    %5006 = vmatprep.subr.bf16.mxu0 0
    %5007 = vmatpush1.bf16.msra.mxu0 %v4982
    %5008 = vmatprep.subr.bf16.mxu0 0
    %5009 = vmatpush1.bf16.msra.mxu0 %v4981
    %5010 = vmatprep.subr.bf16.mxu0 0
    %5011 = vmatpush1.bf16.msra.mxu0 %v4980
    %5012 = vmatprep.subr.bf16.mxu0 0
    %5013 = vmatpush2.bf16.msra.mxu0 0
    %5014 = vmatprep.subr.bf16.mxu0 0
    %5015 = vmatpush2.bf16.msra.mxu0 0
    %5016 = vmatprep.subr.bf16.mxu0 0
    %5017 = vmatpush2.bf16.msra.mxu0 0
    %5018 = vmatprep.subr.bf16.mxu0 0
    %5019 = vmatpush2.bf16.msra.mxu0 0
    %5020 = vmatprep.subr.bf16.mxu0 0
    %5021 = vmatpush2.bf16.msra.mxu0 0
    %5022 = vmatprep.subr.bf16.mxu0 0
    %5023 = vmatpush2.bf16.msra.mxu0 0
    %5024 = vmatprep.subr.bf16.mxu0 0
    %5025 = vmatpush2.bf16.msra.mxu0 0
    %5026 = vmatprep.subr.bf16.mxu0 0
    %5027 = vmatpush2.bf16.msra.mxu0 0
    %5028 = vmatprep.mubr.bf16.mxu0 0
    %5029 = vmatmul.mubr.bf16.gmra.mxu0 %v4932
    %v5030 = vpop.f32.mrf.mxu0
    %v5031 = vadd.f32 %v4078, %v5030
    %v5032 = vpop.f32.mrf.mxu0
    %v5033 = vpop.f32.mrf.mxu0
    %v5034 = vadd.f32 %v4078, %v5033
    %v5035 = vpop.f32.mrf.mxu0
    %5036 = vmatprep.mubr.bf16.mxu0 0
    %5037 = vmatmul.mubr.bf16.gmra.mxu0 %v4933
    %v5038 = vpop.f32.mrf.mxu0
    %v5039 = vadd.f32 %v4078, %v5038
    %v5040 = vpop.f32.mrf.mxu0
    %v5041 = vpop.f32.mrf.mxu0
    %v5042 = vadd.f32 %v4078, %v5041
    %v5043 = vpop.f32.mrf.mxu0
    %5044 = vmatprep.mubr.bf16.mxu0 0
    %5045 = vmatmul.mubr.bf16.gmra.mxu0 %v4934
    %v5046 = vpop.f32.mrf.mxu0
    %v5047 = vadd.f32 %v4078, %v5046
    %v5048 = vpop.f32.mrf.mxu0
    %v5049 = vpop.f32.mrf.mxu0
    %v5050 = vadd.f32 %v4078, %v5049
    %v5051 = vpop.f32.mrf.mxu0
    %5052 = vmatprep.mubr.bf16.mxu0 0
    %5053 = vmatmul.mubr.bf16.gmra.mxu0 %v4935
    %v5054 = vpop.f32.mrf.mxu0
    %v5055 = vadd.f32 %v4078, %v5054
    %v5056 = vpop.f32.mrf.mxu0
    %v5057 = vpop.f32.mrf.mxu0
    %v5058 = vadd.f32 %v4078, %v5057
    %v5059 = vpop.f32.mrf.mxu0
    %5060 = vmatprep.mubr.bf16.mxu0 0
    %5061 = vmatmul.mubr.bf16.gmra.mxu0 %v4936
    %v5062 = vpop.f32.mrf.mxu0
    %v5063 = vadd.f32 %v4078, %v5062
    %v5064 = vpop.f32.mrf.mxu0
    %v5065 = vpop.f32.mrf.mxu0
    %v5066 = vadd.f32 %v4078, %v5065
    %v5067 = vpop.f32.mrf.mxu0
    %5068 = vmatprep.mubr.bf16.mxu0 0
    %5069 = vmatmul.mubr.bf16.gmra.mxu0 %v4937
    %v5070 = vpop.f32.mrf.mxu0
    %v5071 = vadd.f32 %v4078, %v5070
    %v5072 = vpop.f32.mrf.mxu0
    %v5073 = vpop.f32.mrf.mxu0
    %v5074 = vadd.f32 %v4078, %v5073
    %v5075 = vpop.f32.mrf.mxu0
    %5076 = vmatprep.mubr.bf16.mxu0 0
    %5077 = vmatmul.mubr.bf16.gmra.mxu0 %v4938
    %v5078 = vpop.f32.mrf.mxu0
    %v5079 = vadd.f32 %v4078, %v5078
    %v5080 = vpop.f32.mrf.mxu0
    %v5081 = vpop.f32.mrf.mxu0
    %v5082 = vadd.f32 %v4078, %v5081
    %v5083 = vpop.f32.mrf.mxu0
    %5084 = vmatprep.mubr.bf16.mxu0 0
    %5085 = vmatmul.mubr.bf16.gmra.mxu0 %v4939
    %v5086 = vpop.f32.mrf.mxu0
    %v5087 = vadd.f32 %v4078, %v5086
    %v5088 = vpop.f32.mrf.mxu0
    %v5089 = vpop.f32.mrf.mxu0
    %v5090 = vadd.f32 %v4078, %v5089
    %v5091 = vpop.f32.mrf.mxu0
    %5092 = vdwg.mxu0
    %v5093 = vld [vmem:[%s1115] sm:$0xff]
    %v5094 = vld [vmem:[%s1115 + $0x8] sm:$0xff]
    %v5095 = vld [vmem:[%s1115 + $0x10] sm:$0xff]
    %v5096 = vld [vmem:[%s1115 + $0x18] sm:$0xff]
    %v5097 = vld [vmem:[%s1115 + $0x20] sm:$0xff]
    %v5098 = vld [vmem:[%s1115 + $0x28] sm:$0xff]
    %v5099 = vld [vmem:[%s1115 + $0x30] sm:$0xff]
    %v5100 = vld [vmem:[%s1115 + $0x38] sm:$0xff]
    %v5101 = vld [vmem:[%s1115 + $0x100] sm:$0xff]
    %v5102 = vld [vmem:[%s1115 + $0x108] sm:$0xff]
    %v5103 = vld [vmem:[%s1115 + $0x110] sm:$0xff]
    %v5104 = vld [vmem:[%s1115 + $0x118] sm:$0xff]
    %v5105 = vld [vmem:[%s1115 + $0x120] sm:$0xff]
    %v5106 = vld [vmem:[%s1115 + $0x128] sm:$0xff]
    %v5107 = vld [vmem:[%s1115 + $0x130] sm:$0xff]
    %v5108 = vld [vmem:[%s1115 + $0x138] sm:$0xff]
    %v5109 = vadd.f32 %v5031, %v5093
    %v5110 = vadd.f32 %v5034, %v5094
    %v5111 = vadd.f32 %v5039, %v5095
    %v5112 = vadd.f32 %v5042, %v5096
    %v5113 = vadd.f32 %v5047, %v5097
    %v5114 = vadd.f32 %v5050, %v5098
    %v5115 = vadd.f32 %v5055, %v5099
    %v5116 = vadd.f32 %v5058, %v5100
    %v5117 = vadd.f32 %v5063, %v5101
    %v5118 = vadd.f32 %v5066, %v5102
    %v5119 = vadd.f32 %v5071, %v5103
    %v5120 = vadd.f32 %v5074, %v5104
    %v5121 = vadd.f32 %v5079, %v5105
    %v5122 = vadd.f32 %v5082, %v5106
    %v5123 = vadd.f32 %v5087, %v5107
    %v5124 = vadd.f32 %v5090, %v5108
    %s5125 = scalar_lea.vmem [#allocation12], 192
    %5126 = vst [vmem:[%s5125] sm:$0xff] %v5109
    %5127 = vst [vmem:[%s5125 + $0x8] sm:$0xff] %v5110
    %5128 = vst [vmem:[%s5125 + $0x10] sm:$0xff] %v5111
    %5129 = vst [vmem:[%s5125 + $0x18] sm:$0xff] %v5112
    %5130 = vst [vmem:[%s5125 + $0x20] sm:$0xff] %v5113
    %5131 = vst [vmem:[%s5125 + $0x28] sm:$0xff] %v5114
    %5132 = vst [vmem:[%s5125 + $0x30] sm:$0xff] %v5115
    %5133 = vst [vmem:[%s5125 + $0x38] sm:$0xff] %v5116
    %5134 = vst [vmem:[%s5125 + $0x100] sm:$0xff] %v5117
    %5135 = vst [vmem:[%s5125 + $0x108] sm:$0xff] %v5118
    %5136 = vst [vmem:[%s5125 + $0x110] sm:$0xff] %v5119
    %5137 = vst [vmem:[%s5125 + $0x118] sm:$0xff] %v5120
    %5138 = vst [vmem:[%s5125 + $0x120] sm:$0xff] %v5121
    %5139 = vst [vmem:[%s5125 + $0x128] sm:$0xff] %v5122
    %5140 = vst [vmem:[%s5125 + $0x130] sm:$0xff] %v5123
    %5141 = vst [vmem:[%s5125 + $0x138] sm:$0xff] %v5124
    // Predicated region
    $region38: #{tpu_custom_call.1} parent=1 // pred_check
      _
    $region39: #{tpu_custom_call.1} parent=1 // pred_check_branch
      %5143 = sbr.rel (0) target = $region41
    $region40: #{tpu_custom_call.1} parent=1 // pred_region
      %s5145 = ssub.s32 8192, 8192
      %5146 = vsyncadd [#allocation6], %s5145
      %s5147 = sshll.u32 [#allocation12], 4
      %s5148 = int_to_ptr.vmem [resolvable:$true] %s5147
      %5153 = dma.vmem_to_hbm [thread:$0]  %s5148, 8192, %s5, [#allocation6], 128, 128, 8
    $region41: #{tpu_custom_call.1} parent=1 // pred_fallthru
      _
    // Predicated region
    $region42: #{tpu_custom_call.1} parent=1 // pred_check
      _
    $region43: #{tpu_custom_call.1} parent=1 // pred_check_branch
      %5155 = sbr.rel (0) target = $region45
    $region44: #{tpu_custom_call.1} parent=1 // pred_region
      %5156 = dma.done [#allocation6], 8192
    $region45: #{tpu_custom_call.1} parent=1 // pred_fallthru
      _
    %5157 = vsyncpa [#allocation5], 1
    %5158 = vsyncpa [#allocation8], 1
    %5159 = vsyncpa [#allocation11], 1
    %5160 = vsyncpa [#allocation6], 1

</llo_original>
